<compile_context>
chip_gen: v5e
topology: v5e:2x2
jax: 0.10.0
libtpu: 0.0.40
codegen_flags: <defaults>
</compile_context>

<pallas_src>
import jax
import jax.numpy as jnp
from jax.experimental import pallas as pl
from jax.experimental.pallas import tpu as pltpu

# ----------------------------------------------------------------- constants
K = 9                      # conv kernel size
PAD = 4                    # 'same' padding
POOL = 8                   # MaxPool1d kernel
COUT = 320                 # conv output channels per stream
CP = 384                   # per-stream channel block, padded to a lane multiple
KC = 4 * K + 1 * K         # fused im2col width (DNA 36 + ATAC 9 = 45)
ATT = 6                    # attention hidden dim
H = 160                    # LSTM hidden size
GP = 256                   # padded per-gate lane stride (>= H, multiple of 128)
LP = 12                    # pooled length (L // POOL); LSTM input = 2*LP = 24

# packed-constants layout (one (8, 8*GP) f32 slab, all offsets 128-aligned)
C_OFF_UT = 1024            # row 0: conv bias [0:768), u^T [1024:1030)
C_OFF_W1T = 1024           # rows 2..7: attention W1^T  [1024:1036)
C_OFF_W2 = 256             # row 2: b1 [0:160), w2 [256:416), b2 [512]
C_OFF_B2 = 512


# ------------------------------------------------------------------- kernel
def staple_fused_kernel(xcol_ref, wconv_ref, wlstm_ref, w1tf_ref, consts_ref,
                        o_ref):
    f32 = jnp.float32
    B = o_ref.shape[0]
    L = xcol_ref.shape[0] // B
    NC = wconv_ref.shape[1]                      # 2*CP = 768 lanes per batch row

    consts = consts_ref[...]                     # (8, 2048) f32
    cbias = consts[0:1, 0:NC]                    # (1, 768)   conv bias (pads = 0)
    ut = consts[0:1, C_OFF_UT:C_OFF_UT + ATT]    # (1, 6)
    w1t = consts[2:2 + ATT, C_OFF_W1T:C_OFF_W1T + LP]   # (6, 12)
    lbias = consts[1:2, :]                       # (1, 2048)  LSTM bias (pads = 0)
    b1 = consts[2:3, 0:H]                        # (1, 160)
    w2 = consts[2:3, C_OFF_W2:C_OFF_W2 + H]      # (1, 160)
    b2 = consts[2:3, C_OFF_B2:C_OFF_B2 + 1]      # (1, 1)

    # ---- Conv1d + bias + ReLU: all taps / streams / batch rows in ONE matmul
    h = jnp.dot(xcol_ref[...], wconv_ref[...], preferred_element_type=f32)
    h = jnp.maximum(h + cbias, 0.0)              # (B*L, 768); pad lanes stay 0

    # ---- MaxPool1d(8): 8 consecutive rows == one f32 sublane tile ----------
    def pool(rows):                              # (L, NC) -> (LP, NC)
        return jnp.max(rows.reshape(LP, POOL, NC), axis=1)

    # stack the 2*B (batch, stream) maps along lanes; every block 128-aligned
    xp = jnp.concatenate([pool(h[b * L:(b + 1) * L]) for b in range(B)],
                         axis=1)                 # (LP, B*NC)

    # ---- HAN attention, batched over all maps (2 MXU pushes total) ---------
    s = jnp.tanh(jnp.dot(w1t, xp, preferred_element_type=f32))   # (ATT, B*NC)
    e = jnp.dot(ut, s, preferred_element_type=f32)               # (1, B*NC)

    # identity matrix (via 2-D iota) turns a context column into a row without
    # relying on an XLU transpose of a tiny non-tile-aligned array.
    eye_lp = (jax.lax.broadcasted_iota(jnp.int32, (LP, LP), 0) ==
              jax.lax.broadcasted_iota(jnp.int32, (LP, LP), 1)).astype(f32)

    def softmax_ctx(off):
        # slice keeps only the 320 real channels -> no pad-lane mask needed
        eb = e[:, off:off + COUT]                # (1, 320)
        xb = xp[:, off:off + COUT]               # (LP, 320)
        p = jnp.exp(eb - jnp.max(eb, axis=1, keepdims=True))
        a = p * pl.reciprocal(jnp.sum(p, axis=1, keepdims=True), approx=True)
        ctx_col = jnp.sum(xb * a, axis=1, keepdims=True)          # (LP, 1)
        return jnp.sum(ctx_col * eye_lp, axis=0, keepdims=True)   # (1, LP)

    # feature = torch.cat([feature_Dnase, feature_DNA], dim=2), per batch row
    feat = jnp.concatenate(
        [jnp.concatenate([softmax_ctx(b * NC + CP),      # ATAC / Dnase block
                          softmax_ctx(b * NC)],          # DNA block
                         axis=1)
         for b in range(B)], axis=0)                      # (B, 2*LP)

    # ---- biLSTM, seq_len = 1, zero initial state: ONE fused gate matmul ----
    z = jnp.dot(feat.astype(wlstm_ref.dtype), wlstm_ref[...],
                preferred_element_type=f32) + lbias       # (B, 8*GP)

    def direction(base):                         # gate blocks [i, f, g, o]
        i_g = jax.nn.sigmoid(z[:, base + 0 * GP:base + 1 * GP])
        c_g = jnp.tanh(z[:, base + 2 * GP:base + 3 * GP])
        o_g = jax.nn.sigmoid(z[:, base + 3 * GP:base + 4 * GP])
        # forget gate multiplies c0 == 0 -> contributes nothing for seq_len==1
        return o_g * jnp.tanh(i_g * c_g)         # (B, GP); pad lanes exactly 0

    h_cat = jnp.concatenate([direction(0), direction(4 * GP)], axis=1)  # (B, 512)

    # ---- Dense_TF: Linear(320,160)+ReLU+Dropout(id)+Linear(160,1)+sigmoid --
    t = jnp.maximum(jnp.dot(h_cat.astype(w1tf_ref.dtype), w1tf_ref[...],
                            preferred_element_type=f32) + b1, 0.0)    # (B, H)
    logit = jnp.sum(t * w2, axis=1, keepdims=True) + b2               # (B, 1)
    o_ref[...] = jax.nn.sigmoid(logit)


# ------------------------------------------------------------------ wrapper
@jax.jit
def staple_forward(input_DNA, input_Dnase, params):
    B, c_dna, L = input_DNA.shape
    assert L == LP * POOL, "model requires L == 96 (Linear(320,160) after LSTM)"
    assert c_dna == 4 and input_Dnase.shape == (B, 1, L)

    def im2col(x):                               # (B, Cin, L) -> (B*L, Cin*K)
        xpad = jnp.pad(x, ((0, 0), (0, 0), (PAD, PAD)))
        taps = jnp.stack([xpad[:, :, k:k + L] for k in range(K)], axis=2)
        return jnp.transpose(taps, (0, 3, 1, 2)).reshape(B * L, -1)

    # fused lane-dense im2col for both streams (~35 KB) -- one contiguous DMA
    xcol = jnp.concatenate([im2col(input_DNA), im2col(input_Dnase)],
                           axis=1).astype(jnp.bfloat16)          # (B*L, 45)

    args = (xcol, params["w_conv"], params["w_lstm"], params["w1_tf"],
            params["consts"])

    return pl.pallas_call(
        staple_fused_kernel,
        out_shape=jax.ShapeDtypeStruct((B, 1), jnp.float32),
        grid=(1,),
        in_specs=[pl.BlockSpec(a.shape, lambda i, nd=a.ndim: (0,) * nd)
                  for a in args],
        out_specs=pl.BlockSpec((B, 1), lambda i: (0, 0)),
        compiler_params=pltpu.CompilerParams(
            dimension_semantics=("arbitrary",)),   # tiny grid, no megacore split
    )(*args)


# ------------------------------------------------------------------- params
def make_params(key):
    f32, bf16 = jnp.float32, jnp.bfloat16
    ks = jax.random.split(key, 20)

    def init(k, shape, fan_in):
        return jax.random.normal(k, shape, f32) / jnp.sqrt(float(fan_in))

    # ExtractInv / ExtractATAC conv weights already in im2col layout
    # (row = cin*K + k), fused block-diagonally; each stream padded to CP lanes.
    w_dna = init(ks[0], (4 * K, COUT), 4 * K)
    w_atac = init(ks[1], (1 * K, COUT), 1 * K)
    b_dna = 0.01 * jax.random.normal(ks[2], (COUT,), f32)
    b_atac = 0.01 * jax.random.normal(ks[3], (COUT,), f32)
    w_conv = jnp.zeros((KC, 2 * CP), f32)
    w_conv = w_conv.at[0:4 * K, 0:COUT].set(w_dna)
    w_conv = w_conv.at[4 * K:KC, CP:CP + COUT].set(w_atac)

    # HAN attention (hidden dim 6), pre-transposed
    w1t = init(ks[4], (ATT, LP), LP)
    u_t = init(ks[5], (ATT,), ATT)

    # biLSTM: W_ih per gate [i, f, g, o] x 2 directions, gate stride padded to
    # GP lanes; bias = b_ih + b_hh folded; W_hh irrelevant (h0 == 0).
    w_lstm = jnp.zeros((2 * LP, 8 * GP), f32)
    l_bias = jnp.zeros((8 * GP,), f32)
    gate_bias = 0.01 * jax.random.normal(ks[14], (8, H), f32)
    for blk in range(8):
        w_lstm = w_lstm.at[:, blk * GP:blk * GP + H].set(
            init(ks[6 + blk], (2 * LP, H), 2 * LP))
        l_bias = l_bias.at[blk * GP:blk * GP + H].set(gate_bias[blk])

    # Dense_TF Linear(320,160) split per LSTM direction at 256-lane row stride
    w1_tf = jnp.zeros((2 * GP, H), f32)
    w1_tf = w1_tf.at[0:H, :].set(init(ks[15], (H, H), 2 * H))
    w1_tf = w1_tf.at[GP:GP + H, :].set(init(ks[16], (H, H), 2 * H))
    b1 = 0.01 * jax.random.normal(ks[17], (H,), f32)
    w2 = init(ks[18], (H,), H)
    b2 = 0.01 * jax.random.normal(ks[19], (1,), f32)

    # pack every small f32 parameter into one lane-dense slab -> one DMA
    consts = jnp.zeros((8, 8 * GP), f32)
    consts = consts.at[0, 0:2 * CP].set(
        jnp.concatenate([b_dna, jnp.zeros(CP - COUT, f32),
                         b_atac, jnp.zeros(CP - COUT, f32)]))
    consts = consts.at[0, C_OFF_UT:C_OFF_UT + ATT].set(u_t)
    consts = consts.at[1, :].set(l_bias)
    consts = consts.at[2, 0:H].set(b1)
    consts = consts.at[2, C_OFF_W2:C_OFF_W2 + H].set(w2)
    consts = consts.at[2, C_OFF_B2].set(b2[0])
    consts = consts.at[2:2 + ATT, C_OFF_W1T:C_OFF_W1T + LP].set(w1t)

    return {
        "w_conv": w_conv.astype(bf16),     # (45, 768)
        "w_lstm": w_lstm.astype(bf16),     # (24, 2048)
        "w1_tf": w1_tf.astype(bf16),       # (512, 160)
        "consts": consts,                  # (8, 2048) f32
    }


# --------------------------------------------------------------------- main
if __name__ == "__main__":
    B, L = 2, 96                 # 96 / maxpool(8) = 12 ; 12 + 12 = 24 = LSTM input
    key = jax.random.PRNGKey(0)
    k_dna, k_dnase, k_params = jax.random.split(key, 3)

    input_DNA = jax.random.normal(k_dna, (B, 4, L), jnp.float32)      # NCL
    input_Dnase = jax.random.normal(k_dnase, (B, 1, L), jnp.float32)  # NCL

    params = make_params(k_params)

    out = staple_forward(input_DNA, input_Dnase, params)
    out = jax.block_until_ready(out)

    assert out.shape == (B, 1), out.shape
    assert bool(jnp.all(jnp.isfinite(out)))
    assert bool(jnp.all((out >= 0.0) & (out <= 1.0)))   # sigmoid output
    print("KERNEL_OK")
</pallas_src>

<mosaic_0001>
module attributes {stable_mosaic.version = 11 : i64} {
  func.func @staple_fused_kernel(%arg0: i32, %arg1: memref<192x45xbf16, #tpu.memory_space<vmem>>, %arg2: memref<45x768xbf16, #tpu.memory_space<vmem>>, %arg3: memref<24x2048xbf16, #tpu.memory_space<vmem>>, %arg4: memref<512x160xbf16, #tpu.memory_space<vmem>>, %arg5: memref<8x2048xf32, #tpu.memory_space<vmem>>, %arg6: memref<2x1xf32, #tpu.memory_space<vmem>>) attributes {dimension_semantics = [#tpu.dimension_semantics<arbitrary>], iteration_bounds = array<i64: 1>, scalar_prefetch = 0 : i64, scratch_operands = 0 : i64, tpu.core_type = #tpu.core_type<tc>, window_params = [{pipeline_mode = #tpu.pipeline_mode<synchronous>, transform_indices = @transform_0, window_bounds = array<i64: 192, 45>}, {pipeline_mode = #tpu.pipeline_mode<synchronous>, transform_indices = @transform_1, window_bounds = array<i64: 45, 768>}, {pipeline_mode = #tpu.pipeline_mode<synchronous>, transform_indices = @transform_2, window_bounds = array<i64: 24, 2048>}, {pipeline_mode = #tpu.pipeline_mode<synchronous>, transform_indices = @transform_3, window_bounds = array<i64: 512, 160>}, {pipeline_mode = #tpu.pipeline_mode<synchronous>, transform_indices = @transform_4, window_bounds = array<i64: 8, 2048>}, {pipeline_mode = #tpu.pipeline_mode<synchronous>, transform_indices = @transform_5, window_bounds = array<i64: 2, 1>}]} {
    %c0 = arith.constant 0 : index
    %c0_0 = arith.constant 0 : index
    %0 = vector.load %arg5[%c0, %c0_0] : memref<8x2048xf32, #tpu.memory_space<vmem>>, vector<8x2048xf32>
    %1 = vector.extract_strided_slice %0 {offsets = [0, 0], sizes = [1, 768], strides = [1, 1]} : vector<8x2048xf32> to vector<1x768xf32>
    %2 = vector.extract_strided_slice %0 {offsets = [0, 1024], sizes = [1, 6], strides = [1, 1]} : vector<8x2048xf32> to vector<1x6xf32>
    %3 = vector.extract_strided_slice %0 {offsets = [2, 1024], sizes = [6, 12], strides = [1, 1]} : vector<8x2048xf32> to vector<6x12xf32>
    %4 = vector.extract_strided_slice %0 {offsets = [1, 0], sizes = [1, 2048], strides = [1, 1]} : vector<8x2048xf32> to vector<1x2048xf32>
    %5 = vector.extract_strided_slice %0 {offsets = [2, 0], sizes = [1, 160], strides = [1, 1]} : vector<8x2048xf32> to vector<1x160xf32>
    %6 = vector.extract_strided_slice %0 {offsets = [2, 256], sizes = [1, 160], strides = [1, 1]} : vector<8x2048xf32> to vector<1x160xf32>
    %7 = vector.extract_strided_slice %0 {offsets = [2, 512], sizes = [1, 1], strides = [1, 1]} : vector<8x2048xf32> to vector<1x1xf32>
    %c0_1 = arith.constant 0 : index
    %c0_2 = arith.constant 0 : index
    %8 = vector.load %arg1[%c0_1, %c0_2] : memref<192x45xbf16, #tpu.memory_space<vmem>>, vector<192x45xbf16>
    %c0_3 = arith.constant 0 : index
    %c0_4 = arith.constant 0 : index
    %9 = vector.load %arg2[%c0_3, %c0_4] : memref<45x768xbf16, #tpu.memory_space<vmem>>, vector<45x768xbf16>
    %cst = arith.constant dense<0.000000e+00> : vector<192x768xf32>
    %10 = tpu.matmul %8, %9, %cst {dimension_numbers = #tpu.dot_dimension_numbers<[1], [0], [0], [1], [0, 0, 1, 1], [], []>} : vector<192x45xbf16>, vector<45x768xbf16>, vector<192x768xf32> -> vector<192x768xf32>
    %11 = vector.broadcast %1 : vector<1x768xf32> to vector<192x768xf32>
    %12 = arith.addf %10, %11 : vector<192x768xf32>
    %cst_5 = arith.constant 0.000000e+00 : f32
    %13 = vector.broadcast %cst_5 : f32 to vector<192x768xf32>
    %14 = arith.maximumf %12, %13 : vector<192x768xf32>
    %15 = vector.extract_strided_slice %14 {offsets = [0, 0], sizes = [96, 768], strides = [1, 1]} : vector<192x768xf32> to vector<96x768xf32>
    %16 = vector.shape_cast %15 : vector<96x768xf32> to vector<12x8x768xf32>
    %cst_6 = arith.constant dense<0xFF800000> : vector<12x768xf32>
    %17 = vector.multi_reduction <maximumf>, %16, %cst_6 [1] : vector<12x8x768xf32> to vector<12x768xf32>
    %18 = vector.extract_strided_slice %14 {offsets = [96, 0], sizes = [96, 768], strides = [1, 1]} : vector<192x768xf32> to vector<96x768xf32>
    %19 = vector.shape_cast %18 : vector<96x768xf32> to vector<12x8x768xf32>
    %cst_7 = arith.constant dense<0xFF800000> : vector<12x768xf32>
    %20 = vector.multi_reduction <maximumf>, %19, %cst_7 [1] : vector<12x8x768xf32> to vector<12x768xf32>
    %21 = tpu.concatenate %17, %20 in 1 : vector<12x768xf32>, vector<12x768xf32> -> vector<12x1536xf32>
    %cst_8 = arith.constant dense<0.000000e+00> : vector<6x1536xf32>
    %22 = tpu.matmul %3, %21, %cst_8 {dimension_numbers = #tpu.dot_dimension_numbers<[1], [0], [0], [1], [0, 0, 1, 1], [], []>} : vector<6x12xf32>, vector<12x1536xf32>, vector<6x1536xf32> -> vector<6x1536xf32>
    %23 = math.tanh %22 : vector<6x1536xf32>
    %cst_9 = arith.constant dense<0.000000e+00> : vector<1x1536xf32>
    %24 = tpu.matmul %2, %23, %cst_9 {dimension_numbers = #tpu.dot_dimension_numbers<[1], [0], [0], [1], [0, 0, 1, 1], [], []>} : vector<1x6xf32>, vector<6x1536xf32>, vector<1x1536xf32> -> vector<1x1536xf32>
    %25 = tpu.iota {dimensions = array<i32: 0>} : vector<12x12xi32>
    %26 = tpu.iota {dimensions = array<i32: 1>} : vector<12x12xi32>
    %27 = arith.cmpi eq, %25, %26 : vector<12x12xi32>
    %28 = arith.extui %27 : vector<12x12xi1> to vector<12x12xi32>
    %29 = arith.sitofp %28 : vector<12x12xi32> to vector<12x12xf32>
    %30 = vector.extract_strided_slice %24 {offsets = [0, 384], sizes = [1, 320], strides = [1, 1]} : vector<1x1536xf32> to vector<1x320xf32>
    %31 = vector.extract_strided_slice %21 {offsets = [0, 384], sizes = [12, 320], strides = [1, 1]} : vector<12x1536xf32> to vector<12x320xf32>
    %cst_10 = arith.constant dense<0xFF800000> : vector<1xf32>
    %32 = vector.multi_reduction <maximumf>, %30, %cst_10 [1] : vector<1x320xf32> to vector<1xf32>
    %33 = vector.shape_cast %32 : vector<1xf32> to vector<1x1xf32>
    %34 = vector.broadcast %33 : vector<1x1xf32> to vector<1x320xf32>
    %35 = arith.subf %30, %34 : vector<1x320xf32>
    %36 = math.exp %35 : vector<1x320xf32>
    %cst_11 = arith.constant dense<0.000000e+00> : vector<1xf32>
    %37 = vector.multi_reduction <add>, %36, %cst_11 [1] : vector<1x320xf32> to vector<1xf32>
    %38 = vector.shape_cast %37 : vector<1xf32> to vector<1x1xf32>
    %39 = tpu.reciprocal %38 {approx = true} : vector<1x1xf32> -> vector<1x1xf32>
    %40 = vector.broadcast %39 : vector<1x1xf32> to vector<1x320xf32>
    %41 = arith.mulf %36, %40 : vector<1x320xf32>
    %42 = vector.broadcast %41 : vector<1x320xf32> to vector<12x320xf32>
    %43 = arith.mulf %31, %42 : vector<12x320xf32>
    %cst_12 = arith.constant dense<0.000000e+00> : vector<12xf32>
    %44 = vector.multi_reduction <add>, %43, %cst_12 [1] : vector<12x320xf32> to vector<12xf32>
    %45 = vector.shape_cast %44 : vector<12xf32> to vector<12x1xf32>
    %46 = vector.broadcast %45 : vector<12x1xf32> to vector<12x12xf32>
    %47 = arith.mulf %46, %29 : vector<12x12xf32>
    %cst_13 = arith.constant dense<0.000000e+00> : vector<12xf32>
    %48 = vector.multi_reduction <add>, %47, %cst_13 [0] : vector<12x12xf32> to vector<12xf32>
    %49 = vector.shape_cast %48 : vector<12xf32> to vector<1x12xf32>
    %50 = vector.extract_strided_slice %24 {offsets = [0, 0], sizes = [1, 320], strides = [1, 1]} : vector<1x1536xf32> to vector<1x320xf32>
    %51 = vector.extract_strided_slice %21 {offsets = [0, 0], sizes = [12, 320], strides = [1, 1]} : vector<12x1536xf32> to vector<12x320xf32>
    %cst_14 = arith.constant dense<0xFF800000> : vector<1xf32>
    %52 = vector.multi_reduction <maximumf>, %50, %cst_14 [1] : vector<1x320xf32> to vector<1xf32>
    %53 = vector.shape_cast %52 : vector<1xf32> to vector<1x1xf32>
    %54 = vector.broadcast %53 : vector<1x1xf32> to vector<1x320xf32>
    %55 = arith.subf %50, %54 : vector<1x320xf32>
    %56 = math.exp %55 : vector<1x320xf32>
    %cst_15 = arith.constant dense<0.000000e+00> : vector<1xf32>
    %57 = vector.multi_reduction <add>, %56, %cst_15 [1] : vector<1x320xf32> to vector<1xf32>
    %58 = vector.shape_cast %57 : vector<1xf32> to vector<1x1xf32>
    %59 = tpu.reciprocal %58 {approx = true} : vector<1x1xf32> -> vector<1x1xf32>
    %60 = vector.broadcast %59 : vector<1x1xf32> to vector<1x320xf32>
    %61 = arith.mulf %56, %60 : vector<1x320xf32>
    %62 = vector.broadcast %61 : vector<1x320xf32> to vector<12x320xf32>
    %63 = arith.mulf %51, %62 : vector<12x320xf32>
    %cst_16 = arith.constant dense<0.000000e+00> : vector<12xf32>
    %64 = vector.multi_reduction <add>, %63, %cst_16 [1] : vector<12x320xf32> to vector<12xf32>
    %65 = vector.shape_cast %64 : vector<12xf32> to vector<12x1xf32>
    %66 = vector.broadcast %65 : vector<12x1xf32> to vector<12x12xf32>
    %67 = arith.mulf %66, %29 : vector<12x12xf32>
    %cst_17 = arith.constant dense<0.000000e+00> : vector<12xf32>
    %68 = vector.multi_reduction <add>, %67, %cst_17 [0] : vector<12x12xf32> to vector<12xf32>
    %69 = vector.shape_cast %68 : vector<12xf32> to vector<1x12xf32>
    %70 = tpu.concatenate %49, %69 in 1 : vector<1x12xf32>, vector<1x12xf32> -> vector<1x24xf32>
    %71 = vector.extract_strided_slice %24 {offsets = [0, 1152], sizes = [1, 320], strides = [1, 1]} : vector<1x1536xf32> to vector<1x320xf32>
    %72 = vector.extract_strided_slice %21 {offsets = [0, 1152], sizes = [12, 320], strides = [1, 1]} : vector<12x1536xf32> to vector<12x320xf32>
    %cst_18 = arith.constant dense<0xFF800000> : vector<1xf32>
    %73 = vector.multi_reduction <maximumf>, %71, %cst_18 [1] : vector<1x320xf32> to vector<1xf32>
    %74 = vector.shape_cast %73 : vector<1xf32> to vector<1x1xf32>
    %75 = vector.broadcast %74 : vector<1x1xf32> to vector<1x320xf32>
    %76 = arith.subf %71, %75 : vector<1x320xf32>
    %77 = math.exp %76 : vector<1x320xf32>
    %cst_19 = arith.constant dense<0.000000e+00> : vector<1xf32>
    %78 = vector.multi_reduction <add>, %77, %cst_19 [1] : vector<1x320xf32> to vector<1xf32>
    %79 = vector.shape_cast %78 : vector<1xf32> to vector<1x1xf32>
    %80 = tpu.reciprocal %79 {approx = true} : vector<1x1xf32> -> vector<1x1xf32>
    %81 = vector.broadcast %80 : vector<1x1xf32> to vector<1x320xf32>
    %82 = arith.mulf %77, %81 : vector<1x320xf32>
    %83 = vector.broadcast %82 : vector<1x320xf32> to vector<12x320xf32>
    %84 = arith.mulf %72, %83 : vector<12x320xf32>
    %cst_20 = arith.constant dense<0.000000e+00> : vector<12xf32>
    %85 = vector.multi_reduction <add>, %84, %cst_20 [1] : vector<12x320xf32> to vector<12xf32>
    %86 = vector.shape_cast %85 : vector<12xf32> to vector<12x1xf32>
    %87 = vector.broadcast %86 : vector<12x1xf32> to vector<12x12xf32>
    %88 = arith.mulf %87, %29 : vector<12x12xf32>
    %cst_21 = arith.constant dense<0.000000e+00> : vector<12xf32>
    %89 = vector.multi_reduction <add>, %88, %cst_21 [0] : vector<12x12xf32> to vector<12xf32>
    %90 = vector.shape_cast %89 : vector<12xf32> to vector<1x12xf32>
    %91 = vector.extract_strided_slice %24 {offsets = [0, 768], sizes = [1, 320], strides = [1, 1]} : vector<1x1536xf32> to vector<1x320xf32>
    %92 = vector.extract_strided_slice %21 {offsets = [0, 768], sizes = [12, 320], strides = [1, 1]} : vector<12x1536xf32> to vector<12x320xf32>
    %cst_22 = arith.constant dense<0xFF800000> : vector<1xf32>
    %93 = vector.multi_reduction <maximumf>, %91, %cst_22 [1] : vector<1x320xf32> to vector<1xf32>
    %94 = vector.shape_cast %93 : vector<1xf32> to vector<1x1xf32>
    %95 = vector.broadcast %94 : vector<1x1xf32> to vector<1x320xf32>
    %96 = arith.subf %91, %95 : vector<1x320xf32>
    %97 = math.exp %96 : vector<1x320xf32>
    %cst_23 = arith.constant dense<0.000000e+00> : vector<1xf32>
    %98 = vector.multi_reduction <add>, %97, %cst_23 [1] : vector<1x320xf32> to vector<1xf32>
    %99 = vector.shape_cast %98 : vector<1xf32> to vector<1x1xf32>
    %100 = tpu.reciprocal %99 {approx = true} : vector<1x1xf32> -> vector<1x1xf32>
    %101 = vector.broadcast %100 : vector<1x1xf32> to vector<1x320xf32>
    %102 = arith.mulf %97, %101 : vector<1x320xf32>
    %103 = vector.broadcast %102 : vector<1x320xf32> to vector<12x320xf32>
    %104 = arith.mulf %92, %103 : vector<12x320xf32>
    %cst_24 = arith.constant dense<0.000000e+00> : vector<12xf32>
    %105 = vector.multi_reduction <add>, %104, %cst_24 [1] : vector<12x320xf32> to vector<12xf32>
    %106 = vector.shape_cast %105 : vector<12xf32> to vector<12x1xf32>
    %107 = vector.broadcast %106 : vector<12x1xf32> to vector<12x12xf32>
    %108 = arith.mulf %107, %29 : vector<12x12xf32>
    %cst_25 = arith.constant dense<0.000000e+00> : vector<12xf32>
    %109 = vector.multi_reduction <add>, %108, %cst_25 [0] : vector<12x12xf32> to vector<12xf32>
    %110 = vector.shape_cast %109 : vector<12xf32> to vector<1x12xf32>
    %111 = tpu.concatenate %90, %110 in 1 : vector<1x12xf32>, vector<1x12xf32> -> vector<1x24xf32>
    %112 = tpu.concatenate %70, %111 in 0 : vector<1x24xf32>, vector<1x24xf32> -> vector<2x24xf32>
    %113 = arith.truncf %112 : vector<2x24xf32> to vector<2x24xbf16>
    %c0_26 = arith.constant 0 : index
    %c0_27 = arith.constant 0 : index
    %114 = vector.load %arg3[%c0_26, %c0_27] : memref<24x2048xbf16, #tpu.memory_space<vmem>>, vector<24x2048xbf16>
    %cst_28 = arith.constant dense<0.000000e+00> : vector<2x2048xf32>
    %115 = tpu.matmul %113, %114, %cst_28 {dimension_numbers = #tpu.dot_dimension_numbers<[1], [0], [0], [1], [0, 0, 1, 1], [], []>} : vector<2x24xbf16>, vector<24x2048xbf16>, vector<2x2048xf32> -> vector<2x2048xf32>
    %116 = vector.broadcast %4 : vector<1x2048xf32> to vector<2x2048xf32>
    %117 = arith.addf %115, %116 : vector<2x2048xf32>
    %118 = vector.extract_strided_slice %117 {offsets = [0, 0], sizes = [2, 256], strides = [1, 1]} : vector<2x2048xf32> to vector<2x256xf32>
    %119 = arith.negf %118 : vector<2x256xf32>
    %120 = math.exp %119 : vector<2x256xf32>
    %cst_29 = arith.constant 1.000000e+00 : f32
    %121 = vector.broadcast %cst_29 : f32 to vector<2x256xf32>
    %122 = arith.addf %121, %120 : vector<2x256xf32>
    %123 = arith.divf %121, %122 : vector<2x256xf32>
    %124 = vector.extract_strided_slice %117 {offsets = [0, 512], sizes = [2, 256], strides = [1, 1]} : vector<2x2048xf32> to vector<2x256xf32>
    %125 = math.tanh %124 : vector<2x256xf32>
    %126 = vector.extract_strided_slice %117 {offsets = [0, 768], sizes = [2, 256], strides = [1, 1]} : vector<2x2048xf32> to vector<2x256xf32>
    %127 = arith.negf %126 : vector<2x256xf32>
    %128 = math.exp %127 : vector<2x256xf32>
    %cst_30 = arith.constant 1.000000e+00 : f32
    %129 = vector.broadcast %cst_30 : f32 to vector<2x256xf32>
    %130 = arith.addf %129, %128 : vector<2x256xf32>
    %131 = arith.divf %129, %130 : vector<2x256xf32>
    %132 = arith.mulf %123, %125 : vector<2x256xf32>
    %133 = math.tanh %132 : vector<2x256xf32>
    %134 = arith.mulf %131, %133 : vector<2x256xf32>
    %135 = vector.extract_strided_slice %117 {offsets = [0, 1024], sizes = [2, 256], strides = [1, 1]} : vector<2x2048xf32> to vector<2x256xf32>
    %136 = arith.negf %135 : vector<2x256xf32>
    %137 = math.exp %136 : vector<2x256xf32>
    %cst_31 = arith.constant 1.000000e+00 : f32
    %138 = vector.broadcast %cst_31 : f32 to vector<2x256xf32>
    %139 = arith.addf %138, %137 : vector<2x256xf32>
    %140 = arith.divf %138, %139 : vector<2x256xf32>
    %141 = vector.extract_strided_slice %117 {offsets = [0, 1536], sizes = [2, 256], strides = [1, 1]} : vector<2x2048xf32> to vector<2x256xf32>
    %142 = math.tanh %141 : vector<2x256xf32>
    %143 = vector.extract_strided_slice %117 {offsets = [0, 1792], sizes = [2, 256], strides = [1, 1]} : vector<2x2048xf32> to vector<2x256xf32>
    %144 = arith.negf %143 : vector<2x256xf32>
    %145 = math.exp %144 : vector<2x256xf32>
    %cst_32 = arith.constant 1.000000e+00 : f32
    %146 = vector.broadcast %cst_32 : f32 to vector<2x256xf32>
    %147 = arith.addf %146, %145 : vector<2x256xf32>
    %148 = arith.divf %146, %147 : vector<2x256xf32>
    %149 = arith.mulf %140, %142 : vector<2x256xf32>
    %150 = math.tanh %149 : vector<2x256xf32>
    %151 = arith.mulf %148, %150 : vector<2x256xf32>
    %152 = tpu.concatenate %134, %151 in 1 : vector<2x256xf32>, vector<2x256xf32> -> vector<2x512xf32>
    %153 = arith.truncf %152 : vector<2x512xf32> to vector<2x512xbf16>
    %c0_33 = arith.constant 0 : index
    %c0_34 = arith.constant 0 : index
    %154 = vector.load %arg4[%c0_33, %c0_34] : memref<512x160xbf16, #tpu.memory_space<vmem>>, vector<512x160xbf16>
    %cst_35 = arith.constant dense<0.000000e+00> : vector<2x160xf32>
    %155 = tpu.matmul %153, %154, %cst_35 {dimension_numbers = #tpu.dot_dimension_numbers<[1], [0], [0], [1], [0, 0, 1, 1], [], []>} : vector<2x512xbf16>, vector<512x160xbf16>, vector<2x160xf32> -> vector<2x160xf32>
    %156 = vector.broadcast %5 : vector<1x160xf32> to vector<2x160xf32>
    %157 = arith.addf %155, %156 : vector<2x160xf32>
    %cst_36 = arith.constant 0.000000e+00 : f32
    %158 = vector.broadcast %cst_36 : f32 to vector<2x160xf32>
    %159 = arith.maximumf %157, %158 : vector<2x160xf32>
    %160 = vector.broadcast %6 : vector<1x160xf32> to vector<2x160xf32>
    %161 = arith.mulf %159, %160 : vector<2x160xf32>
    %cst_37 = arith.constant dense<0.000000e+00> : vector<2xf32>
    %162 = vector.multi_reduction <add>, %161, %cst_37 [1] : vector<2x160xf32> to vector<2xf32>
    %163 = vector.shape_cast %162 : vector<2xf32> to vector<2x1xf32>
    %164 = vector.broadcast %7 : vector<1x1xf32> to vector<2x1xf32>
    %165 = arith.addf %163, %164 : vector<2x1xf32>
    %166 = arith.negf %165 : vector<2x1xf32>
    %167 = math.exp %166 : vector<2x1xf32>
    %cst_38 = arith.constant 1.000000e+00 : f32
    %168 = vector.broadcast %cst_38 : f32 to vector<2x1xf32>
    %169 = arith.addf %168, %167 : vector<2x1xf32>
    %170 = arith.divf %168, %169 : vector<2x1xf32>
    %c0_39 = arith.constant 0 : index
    %c0_40 = arith.constant 0 : index
    %171 = vector.load %arg6[%c0_39, %c0_40] : memref<2x1xf32, #tpu.memory_space<vmem>>, vector<2x1xf32>
    tpu.vector_store %arg6[%c0_39, %c0_40], %170 {strides = array<i32>} : memref<2x1xf32, #tpu.memory_space<vmem>>, vector<2x1xf32>,
    return
  }
  func.func @transform_0(%arg0: i32) -> (i32, i32) {
    %c0_i32 = arith.constant 0 : i32
    %c0_i32_0 = arith.constant 0 : i32
    %c0_i32_1 = arith.constant 0 : i32
    return %c0_i32, %c0_i32_0 : i32, i32
  }
  func.func @transform_1(%arg0: i32) -> (i32, i32) {
    %c0_i32 = arith.constant 0 : i32
    %c0_i32_0 = arith.constant 0 : i32
    %c0_i32_1 = arith.constant 0 : i32
    return %c0_i32, %c0_i32_0 : i32, i32
  }
  func.func @transform_2(%arg0: i32) -> (i32, i32) {
    %c0_i32 = arith.constant 0 : i32
    %c0_i32_0 = arith.constant 0 : i32
    %c0_i32_1 = arith.constant 0 : i32
    return %c0_i32, %c0_i32_0 : i32, i32
  }
  func.func @transform_3(%arg0: i32) -> (i32, i32) {
    %c0_i32 = arith.constant 0 : i32
    %c0_i32_0 = arith.constant 0 : i32
    %c0_i32_1 = arith.constant 0 : i32
    return %c0_i32, %c0_i32_0 : i32, i32
  }
  func.func @transform_4(%arg0: i32) -> (i32, i32) {
    %c0_i32 = arith.constant 0 : i32
    %c0_i32_0 = arith.constant 0 : i32
    %c0_i32_1 = arith.constant 0 : i32
    return %c0_i32, %c0_i32_0 : i32, i32
  }
  func.func @transform_5(%arg0: i32) -> (i32, i32) {
    %c0_i32 = arith.constant 0 : i32
    %c0_i32_0 = arith.constant 0 : i32
    %c0_i32_1 = arith.constant 0 : i32
    return %c0_i32, %c0_i32_0 : i32, i32
  }
}

</mosaic_0001>

<llo_original>
// kernel: staple_forward.1
$region0: #{staple_forward.1}
  #allocation0 [shape = 'u32[]', space=smem, size = 0x4, offset = 0x4, fixed_abs, tag = 'smem constant byte address 0x4 - core index']
  #allocation1 [shape = 'u32[72,128]{1,0:T(1,128)}', space=vmem, size = 0x9000, scoped, tag = 'internal scratch']
  %s0 = inlined_call_operand.vmem [shape: bf16[192,45], index: 0, kind: input, shape index: {}]
  %s1 = inlined_call_operand.vmem [shape: bf16[45,768], index: 1, kind: input, shape index: {}]
  %s2 = inlined_call_operand.vmem [shape: bf16[24,2048], index: 2, kind: input, shape index: {}]
  %s3 = inlined_call_operand.vmem [shape: bf16[512,160], index: 3, kind: input, shape index: {}]
  %s4 = inlined_call_operand.vmem [shape: f32[8,2048], index: 4, kind: input, shape index: {}]
  %s5 = inlined_call_operand.vmem [shape: f32[2,1], index: 5, kind: output, shape index: {}]
  %s6 = sld [smem:[#allocation0]]
  $region30: #{staple_forward.1} parent=0
    _
  %s8 = ssub.s32 1, %s6
  %s9 = scalar_select 0, %s8, %s6
  // Predicated region
  $region2: #{staple_forward.1} parent=0 // pred_check
    _
  $region3: #{staple_forward.1} parent=0 // pred_check_branch
    %11 = sbr.rel (0) target = $region5
  $region4: #{staple_forward.1} parent=0 // pred_region
    _
  $region5: #{staple_forward.1} parent=0 // pred_fallthru
    _
  // Predicated region
  $region6: #{staple_forward.1} parent=0 // pred_check
    _
  $region7: #{staple_forward.1} parent=0 // pred_check_branch
    %13 = sbr.rel (0) target = $region9
  $region8: #{staple_forward.1} parent=0 // pred_region
    _
  $region9: #{staple_forward.1} parent=0 // pred_fallthru
    _
  // Predicated region
  $region10: #{staple_forward.1} parent=0 // pred_check
    _
  $region11: #{staple_forward.1} parent=0 // pred_check_branch
    %15 = sbr.rel (0) target = $region13
  $region12: #{staple_forward.1} parent=0 // pred_region
    _
  $region13: #{staple_forward.1} parent=0 // pred_fallthru
    _
  // Predicated region
  $region14: #{staple_forward.1} parent=0 // pred_check
    _
  $region15: #{staple_forward.1} parent=0 // pred_check_branch
    %17 = sbr.rel (0) target = $region17
  $region16: #{staple_forward.1} parent=0 // pred_region
    _
  $region17: #{staple_forward.1} parent=0 // pred_fallthru
    _
  // Predicated region
  $region18: #{staple_forward.1} parent=0 // pred_check
    _
  $region19: #{staple_forward.1} parent=0 // pred_check_branch
    %19 = sbr.rel (0) target = $region21
  $region20: #{staple_forward.1} parent=0 // pred_region
    _
  $region21: #{staple_forward.1} parent=0 // pred_fallthru
    _
  %v21 = vld [vmem:[%s4] sm:$0xff]
  %v22 = vld [vmem:[%s4 + $0x8] sm:$0xff]
  %v23 = vld [vmem:[%s4 + $0x10] sm:$0xff]
  %v24 = vld [vmem:[%s4 + $0x18] sm:$0xff]
  %v25 = vld [vmem:[%s4 + $0x20] sm:$0xff]
  %v26 = vld [vmem:[%s4 + $0x28] sm:$0xff]
  %v27 = vld [vmem:[%s4 + $0x30] sm:$0xff]
  %v28 = vld [vmem:[%s4 + $0x38] sm:$0xff]
  %v29 = vld [vmem:[%s4 + $0x40] sm:$0xff]
  %v30 = vld [vmem:[%s4 + $0x48] sm:$0xff]
  %v31 = vld [vmem:[%s4 + $0x60] sm:$0xff]
  %v32 = vld [vmem:[%s4 + $0x68] sm:$0xff]
  %v33 = vld [vmem:[%s4 + $0x70] sm:$0xff]
  %v34 = vld [vmem:[%s4 + $0x78] sm:$0xff]
  %v35 = vld [vmem:[%s0] sm:$0xf]
  %v36 = vld [vmem:[%s0 + $0x4] sm:$0xf]
  %v37 = vld [vmem:[%s0 + $0x8] sm:$0xf]
  %v38 = vld [vmem:[%s0 + $0xc] sm:$0xf]
  %v39 = vld [vmem:[%s0 + $0x10] sm:$0xf]
  %v40 = vld [vmem:[%s0 + $0x14] sm:$0xf]
  %v41 = vld [vmem:[%s0 + $0x18] sm:$0xf]
  %v42 = vld [vmem:[%s0 + $0x1c] sm:$0xf]
  %v43 = vld [vmem:[%s0 + $0x20] sm:$0xf]
  %v44 = vld [vmem:[%s0 + $0x24] sm:$0xf]
  %v45 = vld [vmem:[%s0 + $0x28] sm:$0xf]
  %v46 = vld [vmem:[%s0 + $0x2c] sm:$0xf]
  %v47 = vld [vmem:[%s0 + $0x30] sm:$0xf]
  %v48 = vld [vmem:[%s0 + $0x34] sm:$0xf]
  %v49 = vld [vmem:[%s0 + $0x38] sm:$0xf]
  %v50 = vld [vmem:[%s0 + $0x3c] sm:$0xf]
  %v51 = vld [vmem:[%s0 + $0x40] sm:$0xf]
  %v52 = vld [vmem:[%s0 + $0x44] sm:$0xf]
  %v53 = vld [vmem:[%s0 + $0x48] sm:$0xf]
  %v54 = vld [vmem:[%s0 + $0x4c] sm:$0xf]
  %v55 = vld [vmem:[%s0 + $0x50] sm:$0xf]
  %v56 = vld [vmem:[%s0 + $0x54] sm:$0xf]
  %v57 = vld [vmem:[%s0 + $0x58] sm:$0xf]
  %v58 = vld [vmem:[%s0 + $0x5c] sm:$0xf]
  %v59 = vld [vmem:[%s1] sm:$0xff]
  %v60 = vld [vmem:[%s1 + $0x8] sm:$0xff]
  %v61 = vld [vmem:[%s1 + $0x10] sm:$0xff]
  %v62 = vld [vmem:[%s1 + $0x18] sm:$0xff]
  %v63 = vld [vmem:[%s1 + $0x20] sm:$0xff]
  %v64 = vld [vmem:[%s1 + $0x28] sm:$0xff]
  %v65 = vld [vmem:[%s1 + $0x30] sm:$0xff]
  %v66 = vld [vmem:[%s1 + $0x38] sm:$0xff]
  %v67 = vld [vmem:[%s1 + $0x40] sm:$0xff]
  %v68 = vld [vmem:[%s1 + $0x48] sm:$0xff]
  %v69 = vld [vmem:[%s1 + $0x50] sm:$0xff]
  %v70 = vld [vmem:[%s1 + $0x58] sm:$0xff]
  %v71 = vld [vmem:[%s1 + $0x60] sm:$0xff]
  %v72 = vld [vmem:[%s1 + $0x68] sm:$0xff]
  %v73 = vld [vmem:[%s1 + $0x70] sm:$0xff]
  %v74 = vld [vmem:[%s1 + $0x78] sm:$0x77]
  %v75 = vld [vmem:[%s1 + $0x80] sm:$0x77]
  %v76 = vld [vmem:[%s1 + $0x88] sm:$0x77]
  %v77 = vperm.slane %v21, 0
  %v78 = vperm.slane %v22, 0
  %v79 = vperm.slane %v23, 0
  %v80 = vperm.slane %v24, 0
  %v81 = vperm.slane %v25, 0
  %v82 = vperm.slane %v26, 0
  %v107 = vunpack.c.l.b16 %v35
  %v108 = vunpack.c.l.b16 %v36
  %v109 = vunpack.c.l.b16 %v37
  %v110 = vunpack.c.l.b16 %v38
  %v111 = vunpack.c.l.b16 %v39
  %v112 = vunpack.c.l.b16 %v40
  %v113 = vunpack.c.l.b16 %v41
  %v114 = vunpack.c.l.b16 %v42
  %v115 = vunpack.c.l.b16 %v43
  %v116 = vunpack.c.l.b16 %v44
  %v117 = vunpack.c.l.b16 %v45
  %v118 = vunpack.c.l.b16 %v46
  %v119 = vunpack.c.l.b16 %v47
  %v120 = vunpack.c.l.b16 %v48
  %v121 = vunpack.c.l.b16 %v49
  %v122 = vunpack.c.l.b16 %v50
  %v123 = vunpack.c.l.b16 %v51
  %v124 = vunpack.c.l.b16 %v52
  %v125 = vunpack.c.l.b16 %v53
  %v126 = vunpack.c.l.b16 %v54
  %v127 = vunpack.c.l.b16 %v55
  %v128 = vunpack.c.l.b16 %v56
  %v129 = vunpack.c.l.b16 %v57
  %v130 = vunpack.c.l.b16 %v58
  %v131 = vpack.c.b16 %v108, %v107
  %v132 = vpack.c.b16 %v110, %v109
  %v133 = vpack.c.b16 %v112, %v111
  %v134 = vpack.c.b16 %v114, %v113
  %v135 = vpack.c.b16 %v116, %v115
  %v136 = vpack.c.b16 %v118, %v117
  %v137 = vpack.c.b16 %v120, %v119
  %v138 = vpack.c.b16 %v122, %v121
  %v139 = vpack.c.b16 %v124, %v123
  %v140 = vpack.c.b16 %v126, %v125
  %v141 = vpack.c.b16 %v128, %v127
  %v142 = vpack.c.b16 %v130, %v129
  %v161 = vunpack.c.l.b16 %v59
  %v162 = vunpack.c.h.b16 %v59
  %v163 = vunpack.c.l.b16 %v60
  %v164 = vunpack.c.h.b16 %v60
  %v165 = vunpack.c.l.b16 %v61
  %v166 = vunpack.c.h.b16 %v61
  %v167 = vunpack.c.l.b16 %v62
  %v168 = vunpack.c.h.b16 %v62
  %v169 = vunpack.c.l.b16 %v63
  %v170 = vunpack.c.h.b16 %v63
  %v171 = vunpack.c.l.b16 %v64
  %v172 = vunpack.c.h.b16 %v64
  %v173 = vunpack.c.l.b16 %v65
  %v174 = vunpack.c.h.b16 %v65
  %v175 = vunpack.c.l.b16 %v66
  %v176 = vunpack.c.h.b16 %v66
  %v177 = vunpack.c.l.b16 %v67
  %v178 = vunpack.c.h.b16 %v67
  %v179 = vunpack.c.l.b16 %v68
  %v180 = vunpack.c.h.b16 %v68
  %v181 = vunpack.c.l.b16 %v69
  %v182 = vunpack.c.h.b16 %v69
  %v183 = vunpack.c.l.b16 %v70
  %v184 = vunpack.c.h.b16 %v70
  %v185 = vunpack.c.l.b16 %v71
  %v186 = vunpack.c.h.b16 %v71
  %v187 = vunpack.c.l.b16 %v72
  %v188 = vunpack.c.h.b16 %v72
  %v189 = vunpack.c.l.b16 %v73
  %v190 = vunpack.c.h.b16 %v73
  %v191 = vunpack.c.l.b16 %v74
  %v192 = vunpack.c.h.b16 %v74
  %v193 = vunpack.c.l.b16 %v75
  %v194 = vunpack.c.h.b16 %v75
  %v195 = vunpack.c.l.b16 %v76
  %v196 = vunpack.c.h.b16 %v76
  %v197 = vpack.c.b16 %v167, %v161
  %v198 = vpack.c.b16 %v168, %v162
  %v199 = vpack.c.b16 %v169, %v163
  %v200 = vpack.c.b16 %v170, %v164
  %v201 = vpack.c.b16 %v171, %v165
  %v202 = vpack.c.b16 %v172, %v166
  %v203 = vpack.c.b16 %v179, %v173
  %v204 = vpack.c.b16 %v180, %v174
  %v205 = vpack.c.b16 %v181, %v175
  %v206 = vpack.c.b16 %v182, %v176
  %v207 = vpack.c.b16 %v183, %v177
  %v208 = vpack.c.b16 %v184, %v178
  %v209 = vpack.c.b16 %v191, %v185
  %v210 = vpack.c.b16 %v192, %v186
  %v211 = vpack.c.b16 %v193, %v187
  %v212 = vpack.c.b16 %v194, %v188
  %v213 = vpack.c.b16 %v195, %v189
  %v214 = vpack.c.b16 %v196, %v190
  %vm227 = vcmask 367616
  %v229 = vsel %vm227, %v131, 0
  %v232 = vsel %vm227, %v132, 0
  %v235 = vsel %vm227, %v133, 0
  %v238 = vsel %vm227, %v134, 0
  %v241 = vsel %vm227, %v135, 0
  %v244 = vsel %vm227, %v136, 0
  %v247 = vsel %vm227, %v137, 0
  %v250 = vsel %vm227, %v138, 0
  %v253 = vsel %vm227, %v139, 0
  %v256 = vsel %vm227, %v140, 0
  %v259 = vsel %vm227, %v141, 0
  %v262 = vsel %vm227, %v142, 0
  %vm264 = vcmask 1045504
  %vm265 = vcmask 1046528
  %v266 = vsel %vm264, 4294967295, 65535
  %v267 = vsel %vm265, %v266, 0
  %v269 = vand.u32 %v209, %v267
  %v272 = vand.u32 %v210, %v267
  %v275 = vand.u32 %v211, %v267
  %v278 = vand.u32 %v212, %v267
  %v281 = vand.u32 %v213, %v267
  %v284 = vand.u32 %v214, %v267
  %286 = vmatpush.bf16.msra.mxu0 0
  %287 = vmatpush.bf16.msra.mxu0 0
  %288 = vmatpush.bf16.msra.mxu0 0
  %289 = vmatpush.bf16.msra.mxu0 0
  %290 = vmatpush.bf16.msra.mxu0 0
  %291 = vmatpush.bf16.msra.mxu0 %v269
  %292 = vmatpush.bf16.msra.mxu0 %v203
  %293 = vmatpush.bf16.msra.mxu0 %v197
  %294 = vmatmul.bf16.gmra.mxu0 %v229
  %v295 = vpop.f32.mrf.mxu0
  %v296 = vadd.f32 %v77, %v295
  %v297 = vpop.f32.mrf.mxu0
  %v298 = vadd.f32 %v77, %v297
  %299 = vmatmul.bf16.gmra.mxu0 %v232
  %v300 = vpop.f32.mrf.mxu0
  %v301 = vadd.f32 %v77, %v300
  %v302 = vpop.f32.mrf.mxu0
  %v303 = vadd.f32 %v77, %v302
  %304 = vmatmul.bf16.gmra.mxu0 %v235
  %v305 = vpop.f32.mrf.mxu0
  %v306 = vadd.f32 %v77, %v305
  %v307 = vpop.f32.mrf.mxu0
  %v308 = vadd.f32 %v77, %v307
  %309 = vmatmul.bf16.gmra.mxu0 %v238
  %v310 = vpop.f32.mrf.mxu0
  %v311 = vadd.f32 %v77, %v310
  %v312 = vpop.f32.mrf.mxu0
  %v313 = vadd.f32 %v77, %v312
  %314 = vmatmul.bf16.gmra.mxu0 %v241
  %v315 = vpop.f32.mrf.mxu0
  %v316 = vadd.f32 %v77, %v315
  %v317 = vpop.f32.mrf.mxu0
  %v318 = vadd.f32 %v77, %v317
  %319 = vmatmul.bf16.gmra.mxu0 %v244
  %v320 = vpop.f32.mrf.mxu0
  %v321 = vadd.f32 %v77, %v320
  %v322 = vpop.f32.mrf.mxu0
  %v323 = vadd.f32 %v77, %v322
  %324 = vmatmul.bf16.gmra.mxu0 %v247
  %v325 = vpop.f32.mrf.mxu0
  %v326 = vadd.f32 %v77, %v325
  %v327 = vpop.f32.mrf.mxu0
  %v328 = vadd.f32 %v77, %v327
  %329 = vmatmul.bf16.gmra.mxu0 %v250
  %v330 = vpop.f32.mrf.mxu0
  %v331 = vadd.f32 %v77, %v330
  %v332 = vpop.f32.mrf.mxu0
  %v333 = vadd.f32 %v77, %v332
  %334 = vmatmul.bf16.gmra.mxu0 %v253
  %v335 = vpop.f32.mrf.mxu0
  %v336 = vadd.f32 %v77, %v335
  %v337 = vpop.f32.mrf.mxu0
  %v338 = vadd.f32 %v77, %v337
  %339 = vmatmul.bf16.gmra.mxu0 %v256
  %v340 = vpop.f32.mrf.mxu0
  %v341 = vadd.f32 %v77, %v340
  %v342 = vpop.f32.mrf.mxu0
  %v343 = vadd.f32 %v77, %v342
  %344 = vmatmul.bf16.gmra.mxu0 %v259
  %v345 = vpop.f32.mrf.mxu0
  %v346 = vadd.f32 %v77, %v345
  %v347 = vpop.f32.mrf.mxu0
  %v348 = vadd.f32 %v77, %v347
  %349 = vmatmul.bf16.gmra.mxu0 %v262
  %v350 = vpop.f32.mrf.mxu0
  %v351 = vadd.f32 %v77, %v350
  %v352 = vpop.f32.mrf.mxu0
  %v353 = vadd.f32 %v77, %v352
  %354 = vdwg.mxu0
  %355 = vmatpush.bf16.msra.mxu0 0
  %356 = vmatpush.bf16.msra.mxu0 0
  %357 = vmatpush.bf16.msra.mxu0 0
  %358 = vmatpush.bf16.msra.mxu0 0
  %359 = vmatpush.bf16.msra.mxu0 0
  %360 = vmatpush.bf16.msra.mxu0 %v272
  %361 = vmatpush.bf16.msra.mxu0 %v204
  %362 = vmatpush.bf16.msra.mxu0 %v198
  %363 = vmatmul.bf16.gmra.mxu0 %v229
  %v364 = vpop.f32.mrf.mxu0
  %v365 = vadd.f32 %v78, %v364
  %v366 = vpop.f32.mrf.mxu0
  %v367 = vadd.f32 %v78, %v366
  %368 = vmatmul.bf16.gmra.mxu0 %v232
  %v369 = vpop.f32.mrf.mxu0
  %v370 = vadd.f32 %v78, %v369
  %v371 = vpop.f32.mrf.mxu0
  %v372 = vadd.f32 %v78, %v371
  %373 = vmatmul.bf16.gmra.mxu0 %v235
  %v374 = vpop.f32.mrf.mxu0
  %v375 = vadd.f32 %v78, %v374
  %v376 = vpop.f32.mrf.mxu0
  %v377 = vadd.f32 %v78, %v376
  %378 = vmatmul.bf16.gmra.mxu0 %v238
  %v379 = vpop.f32.mrf.mxu0
  %v380 = vadd.f32 %v78, %v379
  %v381 = vpop.f32.mrf.mxu0
  %v382 = vadd.f32 %v78, %v381
  %383 = vmatmul.bf16.gmra.mxu0 %v241
  %v384 = vpop.f32.mrf.mxu0
  %v385 = vadd.f32 %v78, %v384
  %v386 = vpop.f32.mrf.mxu0
  %v387 = vadd.f32 %v78, %v386
  %388 = vmatmul.bf16.gmra.mxu0 %v244
  %v389 = vpop.f32.mrf.mxu0
  %v390 = vadd.f32 %v78, %v389
  %v391 = vpop.f32.mrf.mxu0
  %v392 = vadd.f32 %v78, %v391
  %393 = vmatmul.bf16.gmra.mxu0 %v247
  %v394 = vpop.f32.mrf.mxu0
  %v395 = vadd.f32 %v78, %v394
  %v396 = vpop.f32.mrf.mxu0
  %v397 = vadd.f32 %v78, %v396
  %398 = vmatmul.bf16.gmra.mxu0 %v250
  %v399 = vpop.f32.mrf.mxu0
  %v400 = vadd.f32 %v78, %v399
  %v401 = vpop.f32.mrf.mxu0
  %v402 = vadd.f32 %v78, %v401
  %403 = vmatmul.bf16.gmra.mxu0 %v253
  %v404 = vpop.f32.mrf.mxu0
  %v405 = vadd.f32 %v78, %v404
  %v406 = vpop.f32.mrf.mxu0
  %v407 = vadd.f32 %v78, %v406
  %408 = vmatmul.bf16.gmra.mxu0 %v256
  %v409 = vpop.f32.mrf.mxu0
  %v410 = vadd.f32 %v78, %v409
  %v411 = vpop.f32.mrf.mxu0
  %v412 = vadd.f32 %v78, %v411
  %413 = vmatmul.bf16.gmra.mxu0 %v259
  %v414 = vpop.f32.mrf.mxu0
  %v415 = vadd.f32 %v78, %v414
  %v416 = vpop.f32.mrf.mxu0
  %v417 = vadd.f32 %v78, %v416
  %418 = vmatmul.bf16.gmra.mxu0 %v262
  %v419 = vpop.f32.mrf.mxu0
  %v420 = vadd.f32 %v78, %v419
  %v421 = vpop.f32.mrf.mxu0
  %v422 = vadd.f32 %v78, %v421
  %423 = vdwg.mxu0
  %424 = vmatpush.bf16.msra.mxu0 0
  %425 = vmatpush.bf16.msra.mxu0 0
  %426 = vmatpush.bf16.msra.mxu0 0
  %427 = vmatpush.bf16.msra.mxu0 0
  %428 = vmatpush.bf16.msra.mxu0 0
  %429 = vmatpush.bf16.msra.mxu0 %v275
  %430 = vmatpush.bf16.msra.mxu0 %v205
  %431 = vmatpush.bf16.msra.mxu0 %v199
  %432 = vmatmul.bf16.gmra.mxu0 %v229
  %v433 = vpop.f32.mrf.mxu0
  %v434 = vadd.f32 %v79, %v433
  %v435 = vpop.f32.mrf.mxu0
  %v436 = vadd.f32 %v79, %v435
  %437 = vmatmul.bf16.gmra.mxu0 %v232
  %v438 = vpop.f32.mrf.mxu0
  %v439 = vadd.f32 %v79, %v438
  %v440 = vpop.f32.mrf.mxu0
  %v441 = vadd.f32 %v79, %v440
  %442 = vmatmul.bf16.gmra.mxu0 %v235
  %v443 = vpop.f32.mrf.mxu0
  %v444 = vadd.f32 %v79, %v443
  %v445 = vpop.f32.mrf.mxu0
  %v446 = vadd.f32 %v79, %v445
  %447 = vmatmul.bf16.gmra.mxu0 %v238
  %v448 = vpop.f32.mrf.mxu0
  %v449 = vadd.f32 %v79, %v448
  %v450 = vpop.f32.mrf.mxu0
  %v451 = vadd.f32 %v79, %v450
  %452 = vmatmul.bf16.gmra.mxu0 %v241
  %v453 = vpop.f32.mrf.mxu0
  %v454 = vadd.f32 %v79, %v453
  %v455 = vpop.f32.mrf.mxu0
  %v456 = vadd.f32 %v79, %v455
  %457 = vmatmul.bf16.gmra.mxu0 %v244
  %v458 = vpop.f32.mrf.mxu0
  %v459 = vadd.f32 %v79, %v458
  %v460 = vpop.f32.mrf.mxu0
  %v461 = vadd.f32 %v79, %v460
  %462 = vmatmul.bf16.gmra.mxu0 %v247
  %v463 = vpop.f32.mrf.mxu0
  %v464 = vadd.f32 %v79, %v463
  %v465 = vpop.f32.mrf.mxu0
  %v466 = vadd.f32 %v79, %v465
  %467 = vmatmul.bf16.gmra.mxu0 %v250
  %v468 = vpop.f32.mrf.mxu0
  %v469 = vadd.f32 %v79, %v468
  %v470 = vpop.f32.mrf.mxu0
  %v471 = vadd.f32 %v79, %v470
  %472 = vmatmul.bf16.gmra.mxu0 %v253
  %v473 = vpop.f32.mrf.mxu0
  %v474 = vadd.f32 %v79, %v473
  %v475 = vpop.f32.mrf.mxu0
  %v476 = vadd.f32 %v79, %v475
  %477 = vmatmul.bf16.gmra.mxu0 %v256
  %v478 = vpop.f32.mrf.mxu0
  %v479 = vadd.f32 %v79, %v478
  %v480 = vpop.f32.mrf.mxu0
  %v481 = vadd.f32 %v79, %v480
  %482 = vmatmul.bf16.gmra.mxu0 %v259
  %v483 = vpop.f32.mrf.mxu0
  %v484 = vadd.f32 %v79, %v483
  %v485 = vpop.f32.mrf.mxu0
  %v486 = vadd.f32 %v79, %v485
  %487 = vmatmul.bf16.gmra.mxu0 %v262
  %v488 = vpop.f32.mrf.mxu0
  %v489 = vadd.f32 %v79, %v488
  %v490 = vpop.f32.mrf.mxu0
  %v491 = vadd.f32 %v79, %v490
  %492 = vdwg.mxu0
  %493 = vmatpush.bf16.msra.mxu0 0
  %494 = vmatpush.bf16.msra.mxu0 0
  %495 = vmatpush.bf16.msra.mxu0 0
  %496 = vmatpush.bf16.msra.mxu0 0
  %497 = vmatpush.bf16.msra.mxu0 0
  %498 = vmatpush.bf16.msra.mxu0 %v278
  %499 = vmatpush.bf16.msra.mxu0 %v206
  %500 = vmatpush.bf16.msra.mxu0 %v200
  %501 = vmatmul.bf16.gmra.mxu0 %v229
  %v502 = vpop.f32.mrf.mxu0
  %v503 = vadd.f32 %v80, %v502
  %v504 = vpop.f32.mrf.mxu0
  %v505 = vadd.f32 %v80, %v504
  %506 = vmatmul.bf16.gmra.mxu0 %v232
  %v507 = vpop.f32.mrf.mxu0
  %v508 = vadd.f32 %v80, %v507
  %v509 = vpop.f32.mrf.mxu0
  %v510 = vadd.f32 %v80, %v509
  %511 = vmatmul.bf16.gmra.mxu0 %v235
  %v512 = vpop.f32.mrf.mxu0
  %v513 = vadd.f32 %v80, %v512
  %v514 = vpop.f32.mrf.mxu0
  %v515 = vadd.f32 %v80, %v514
  %516 = vmatmul.bf16.gmra.mxu0 %v238
  %v517 = vpop.f32.mrf.mxu0
  %v518 = vadd.f32 %v80, %v517
  %v519 = vpop.f32.mrf.mxu0
  %v520 = vadd.f32 %v80, %v519
  %521 = vmatmul.bf16.gmra.mxu0 %v241
  %v522 = vpop.f32.mrf.mxu0
  %v523 = vadd.f32 %v80, %v522
  %v524 = vpop.f32.mrf.mxu0
  %v525 = vadd.f32 %v80, %v524
  %526 = vmatmul.bf16.gmra.mxu0 %v244
  %v527 = vpop.f32.mrf.mxu0
  %v528 = vadd.f32 %v80, %v527
  %v529 = vpop.f32.mrf.mxu0
  %v530 = vadd.f32 %v80, %v529
  %531 = vmatmul.bf16.gmra.mxu0 %v247
  %v532 = vpop.f32.mrf.mxu0
  %v533 = vadd.f32 %v80, %v532
  %v534 = vpop.f32.mrf.mxu0
  %v535 = vadd.f32 %v80, %v534
  %536 = vmatmul.bf16.gmra.mxu0 %v250
  %v537 = vpop.f32.mrf.mxu0
  %v538 = vadd.f32 %v80, %v537
  %v539 = vpop.f32.mrf.mxu0
  %v540 = vadd.f32 %v80, %v539
  %541 = vmatmul.bf16.gmra.mxu0 %v253
  %v542 = vpop.f32.mrf.mxu0
  %v543 = vadd.f32 %v80, %v542
  %v544 = vpop.f32.mrf.mxu0
  %v545 = vadd.f32 %v80, %v544
  %546 = vmatmul.bf16.gmra.mxu0 %v256
  %v547 = vpop.f32.mrf.mxu0
  %v548 = vadd.f32 %v80, %v547
  %v549 = vpop.f32.mrf.mxu0
  %v550 = vadd.f32 %v80, %v549
  %551 = vmatmul.bf16.gmra.mxu0 %v259
  %v552 = vpop.f32.mrf.mxu0
  %v553 = vadd.f32 %v80, %v552
  %v554 = vpop.f32.mrf.mxu0
  %v555 = vadd.f32 %v80, %v554
  %556 = vmatmul.bf16.gmra.mxu0 %v262
  %v557 = vpop.f32.mrf.mxu0
  %v558 = vadd.f32 %v80, %v557
  %v559 = vpop.f32.mrf.mxu0
  %v560 = vadd.f32 %v80, %v559
  %561 = vdwg.mxu0
  %562 = vmatpush.bf16.msra.mxu0 0
  %563 = vmatpush.bf16.msra.mxu0 0
  %564 = vmatpush.bf16.msra.mxu0 0
  %565 = vmatpush.bf16.msra.mxu0 0
  %566 = vmatpush.bf16.msra.mxu0 0
  %567 = vmatpush.bf16.msra.mxu0 %v281
  %568 = vmatpush.bf16.msra.mxu0 %v207
  %569 = vmatpush.bf16.msra.mxu0 %v201
  %570 = vmatmul.bf16.gmra.mxu0 %v229
  %v571 = vpop.f32.mrf.mxu0
  %v572 = vadd.f32 %v81, %v571
  %v573 = vpop.f32.mrf.mxu0
  %v574 = vadd.f32 %v81, %v573
  %575 = vmatmul.bf16.gmra.mxu0 %v232
  %v576 = vpop.f32.mrf.mxu0
  %v577 = vadd.f32 %v81, %v576
  %v578 = vpop.f32.mrf.mxu0
  %v579 = vadd.f32 %v81, %v578
  %580 = vmatmul.bf16.gmra.mxu0 %v235
  %v581 = vpop.f32.mrf.mxu0
  %v582 = vadd.f32 %v81, %v581
  %v583 = vpop.f32.mrf.mxu0
  %v584 = vadd.f32 %v81, %v583
  %585 = vmatmul.bf16.gmra.mxu0 %v238
  %v586 = vpop.f32.mrf.mxu0
  %v587 = vadd.f32 %v81, %v586
  %v588 = vpop.f32.mrf.mxu0
  %v589 = vadd.f32 %v81, %v588
  %590 = vmatmul.bf16.gmra.mxu0 %v241
  %v591 = vpop.f32.mrf.mxu0
  %v592 = vadd.f32 %v81, %v591
  %v593 = vpop.f32.mrf.mxu0
  %v594 = vadd.f32 %v81, %v593
  %595 = vmatmul.bf16.gmra.mxu0 %v244
  %v596 = vpop.f32.mrf.mxu0
  %v597 = vadd.f32 %v81, %v596
  %v598 = vpop.f32.mrf.mxu0
  %v599 = vadd.f32 %v81, %v598
  %600 = vmatmul.bf16.gmra.mxu0 %v247
  %v601 = vpop.f32.mrf.mxu0
  %v602 = vadd.f32 %v81, %v601
  %v603 = vpop.f32.mrf.mxu0
  %v604 = vadd.f32 %v81, %v603
  %605 = vmatmul.bf16.gmra.mxu0 %v250
  %v606 = vpop.f32.mrf.mxu0
  %v607 = vadd.f32 %v81, %v606
  %v608 = vpop.f32.mrf.mxu0
  %v609 = vadd.f32 %v81, %v608
  %610 = vmatmul.bf16.gmra.mxu0 %v253
  %v611 = vpop.f32.mrf.mxu0
  %v612 = vadd.f32 %v81, %v611
  %v613 = vpop.f32.mrf.mxu0
  %v614 = vadd.f32 %v81, %v613
  %615 = vmatmul.bf16.gmra.mxu0 %v256
  %v616 = vpop.f32.mrf.mxu0
  %v617 = vadd.f32 %v81, %v616
  %v618 = vpop.f32.mrf.mxu0
  %v619 = vadd.f32 %v81, %v618
  %620 = vmatmul.bf16.gmra.mxu0 %v259
  %v621 = vpop.f32.mrf.mxu0
  %v622 = vadd.f32 %v81, %v621
  %v623 = vpop.f32.mrf.mxu0
  %v624 = vadd.f32 %v81, %v623
  %625 = vmatmul.bf16.gmra.mxu0 %v262
  %v626 = vpop.f32.mrf.mxu0
  %v627 = vadd.f32 %v81, %v626
  %v628 = vpop.f32.mrf.mxu0
  %v629 = vadd.f32 %v81, %v628
  %630 = vdwg.mxu0
  %631 = vmatpush.bf16.msra.mxu0 0
  %632 = vmatpush.bf16.msra.mxu0 0
  %633 = vmatpush.bf16.msra.mxu0 0
  %634 = vmatpush.bf16.msra.mxu0 0
  %635 = vmatpush.bf16.msra.mxu0 0
  %636 = vmatpush.bf16.msra.mxu0 %v284
  %637 = vmatpush.bf16.msra.mxu0 %v208
  %638 = vmatpush.bf16.msra.mxu0 %v202
  %639 = vmatmul.bf16.gmra.mxu0 %v229
  %v640 = vpop.f32.mrf.mxu0
  %v641 = vadd.f32 %v82, %v640
  %v642 = vpop.f32.mrf.mxu0
  %v643 = vadd.f32 %v82, %v642
  %644 = vmatmul.bf16.gmra.mxu0 %v232
  %v645 = vpop.f32.mrf.mxu0
  %v646 = vadd.f32 %v82, %v645
  %v647 = vpop.f32.mrf.mxu0
  %v648 = vadd.f32 %v82, %v647
  %649 = vmatmul.bf16.gmra.mxu0 %v235
  %v650 = vpop.f32.mrf.mxu0
  %v651 = vadd.f32 %v82, %v650
  %v652 = vpop.f32.mrf.mxu0
  %v653 = vadd.f32 %v82, %v652
  %654 = vmatmul.bf16.gmra.mxu0 %v238
  %v655 = vpop.f32.mrf.mxu0
  %v656 = vadd.f32 %v82, %v655
  %v657 = vpop.f32.mrf.mxu0
  %v658 = vadd.f32 %v82, %v657
  %659 = vmatmul.bf16.gmra.mxu0 %v241
  %v660 = vpop.f32.mrf.mxu0
  %v661 = vadd.f32 %v82, %v660
  %v662 = vpop.f32.mrf.mxu0
  %v663 = vadd.f32 %v82, %v662
  %664 = vmatmul.bf16.gmra.mxu0 %v244
  %v665 = vpop.f32.mrf.mxu0
  %v666 = vadd.f32 %v82, %v665
  %v667 = vpop.f32.mrf.mxu0
  %v668 = vadd.f32 %v82, %v667
  %669 = vmatmul.bf16.gmra.mxu0 %v247
  %v670 = vpop.f32.mrf.mxu0
  %v671 = vadd.f32 %v82, %v670
  %v672 = vpop.f32.mrf.mxu0
  %v673 = vadd.f32 %v82, %v672
  %674 = vmatmul.bf16.gmra.mxu0 %v250
  %v675 = vpop.f32.mrf.mxu0
  %v676 = vadd.f32 %v82, %v675
  %v677 = vpop.f32.mrf.mxu0
  %v678 = vadd.f32 %v82, %v677
  %679 = vmatmul.bf16.gmra.mxu0 %v253
  %v680 = vpop.f32.mrf.mxu0
  %v681 = vadd.f32 %v82, %v680
  %v682 = vpop.f32.mrf.mxu0
  %v683 = vadd.f32 %v82, %v682
  %684 = vmatmul.bf16.gmra.mxu0 %v256
  %v685 = vpop.f32.mrf.mxu0
  %v686 = vadd.f32 %v82, %v685
  %v687 = vpop.f32.mrf.mxu0
  %v688 = vadd.f32 %v82, %v687
  %689 = vmatmul.bf16.gmra.mxu0 %v259
  %v690 = vpop.f32.mrf.mxu0
  %v691 = vadd.f32 %v82, %v690
  %v692 = vpop.f32.mrf.mxu0
  %v693 = vadd.f32 %v82, %v692
  %694 = vmatmul.bf16.gmra.mxu0 %v262
  %v695 = vpop.f32.mrf.mxu0
  %v696 = vadd.f32 %v82, %v695
  %v697 = vpop.f32.mrf.mxu0
  %v698 = vadd.f32 %v82, %v697
  %699 = vdwg.mxu0
  %v700 = vmax.f32 %v296, 0.0
  %v701 = vmax.f32 %v365, 0.0
  %v702 = vmax.f32 %v434, 0.0
  %v703 = vmax.f32 %v503, 0.0
  %v704 = vmax.f32 %v572, 0.0
  %v705 = vmax.f32 %v641, 0.0
  %v706 = vmax.f32 %v298, 0.0
  %v707 = vmax.f32 %v367, 0.0
  %v708 = vmax.f32 %v436, 0.0
  %v709 = vmax.f32 %v505, 0.0
  %v710 = vmax.f32 %v574, 0.0
  %v711 = vmax.f32 %v643, 0.0
  %v712 = vmax.f32 %v301, 0.0
  %v713 = vmax.f32 %v370, 0.0
  %v714 = vmax.f32 %v439, 0.0
  %v715 = vmax.f32 %v508, 0.0
  %v716 = vmax.f32 %v577, 0.0
  %v717 = vmax.f32 %v646, 0.0
  %v718 = vmax.f32 %v303, 0.0
  %v719 = vmax.f32 %v372, 0.0
  %v720 = vmax.f32 %v441, 0.0
  %v721 = vmax.f32 %v510, 0.0
  %v722 = vmax.f32 %v579, 0.0
  %v723 = vmax.f32 %v648, 0.0
  %v724 = vmax.f32 %v306, 0.0
  %v725 = vmax.f32 %v375, 0.0
  %v726 = vmax.f32 %v444, 0.0
  %v727 = vmax.f32 %v513, 0.0
  %v728 = vmax.f32 %v582, 0.0
  %v729 = vmax.f32 %v651, 0.0
  %v730 = vmax.f32 %v308, 0.0
  %v731 = vmax.f32 %v377, 0.0
  %v732 = vmax.f32 %v446, 0.0
  %v733 = vmax.f32 %v515, 0.0
  %v734 = vmax.f32 %v584, 0.0
  %v735 = vmax.f32 %v653, 0.0
  %v736 = vmax.f32 %v311, 0.0
  %v737 = vmax.f32 %v380, 0.0
  %v738 = vmax.f32 %v449, 0.0
  %v739 = vmax.f32 %v518, 0.0
  %v740 = vmax.f32 %v587, 0.0
  %v741 = vmax.f32 %v656, 0.0
  %v742 = vmax.f32 %v313, 0.0
  %v743 = vmax.f32 %v382, 0.0
  %v744 = vmax.f32 %v451, 0.0
  %v745 = vmax.f32 %v520, 0.0
  %v746 = vmax.f32 %v589, 0.0
  %v747 = vmax.f32 %v658, 0.0
  %v748 = vmax.f32 %v316, 0.0
  %v749 = vmax.f32 %v385, 0.0
  %v750 = vmax.f32 %v454, 0.0
  %v751 = vmax.f32 %v523, 0.0
  %v752 = vmax.f32 %v592, 0.0
  %v753 = vmax.f32 %v661, 0.0
  %v754 = vmax.f32 %v318, 0.0
  %v755 = vmax.f32 %v387, 0.0
  %v756 = vmax.f32 %v456, 0.0
  %v757 = vmax.f32 %v525, 0.0
  %v758 = vmax.f32 %v594, 0.0
  %v759 = vmax.f32 %v663, 0.0
  %v760 = vmax.f32 %v321, 0.0
  %v761 = vmax.f32 %v390, 0.0
  %v762 = vmax.f32 %v459, 0.0
  %v763 = vmax.f32 %v528, 0.0
  %v764 = vmax.f32 %v597, 0.0
  %v765 = vmax.f32 %v666, 0.0
  %v766 = vmax.f32 %v323, 0.0
  %v767 = vmax.f32 %v392, 0.0
  %v768 = vmax.f32 %v461, 0.0
  %v769 = vmax.f32 %v530, 0.0
  %v770 = vmax.f32 %v599, 0.0
  %v771 = vmax.f32 %v668, 0.0
  %v772 = vmax.f32 %v326, 0.0
  %v773 = vmax.f32 %v395, 0.0
  %v774 = vmax.f32 %v464, 0.0
  %v775 = vmax.f32 %v533, 0.0
  %v776 = vmax.f32 %v602, 0.0
  %v777 = vmax.f32 %v671, 0.0
  %v778 = vmax.f32 %v328, 0.0
  %v779 = vmax.f32 %v397, 0.0
  %v780 = vmax.f32 %v466, 0.0
  %v781 = vmax.f32 %v535, 0.0
  %v782 = vmax.f32 %v604, 0.0
  %v783 = vmax.f32 %v673, 0.0
  %v784 = vmax.f32 %v331, 0.0
  %v785 = vmax.f32 %v400, 0.0
  %v786 = vmax.f32 %v469, 0.0
  %v787 = vmax.f32 %v538, 0.0
  %v788 = vmax.f32 %v607, 0.0
  %v789 = vmax.f32 %v676, 0.0
  %v790 = vmax.f32 %v333, 0.0
  %v791 = vmax.f32 %v402, 0.0
  %v792 = vmax.f32 %v471, 0.0
  %v793 = vmax.f32 %v540, 0.0
  %v794 = vmax.f32 %v609, 0.0
  %v795 = vmax.f32 %v678, 0.0
  %v796 = vmax.f32 %v336, 0.0
  %v797 = vmax.f32 %v405, 0.0
  %v798 = vmax.f32 %v474, 0.0
  %v799 = vmax.f32 %v543, 0.0
  %v800 = vmax.f32 %v612, 0.0
  %v801 = vmax.f32 %v681, 0.0
  %v802 = vmax.f32 %v338, 0.0
  %v803 = vmax.f32 %v407, 0.0
  %v804 = vmax.f32 %v476, 0.0
  %v805 = vmax.f32 %v545, 0.0
  %v806 = vmax.f32 %v614, 0.0
  %v807 = vmax.f32 %v683, 0.0
  %v808 = vmax.f32 %v341, 0.0
  %v809 = vmax.f32 %v410, 0.0
  %v810 = vmax.f32 %v479, 0.0
  %v811 = vmax.f32 %v548, 0.0
  %v812 = vmax.f32 %v617, 0.0
  %v813 = vmax.f32 %v686, 0.0
  %v814 = vmax.f32 %v343, 0.0
  %v815 = vmax.f32 %v412, 0.0
  %v816 = vmax.f32 %v481, 0.0
  %v817 = vmax.f32 %v550, 0.0
  %v818 = vmax.f32 %v619, 0.0
  %v819 = vmax.f32 %v688, 0.0
  %v820 = vmax.f32 %v346, 0.0
  %v821 = vmax.f32 %v415, 0.0
  %v822 = vmax.f32 %v484, 0.0
  %v823 = vmax.f32 %v553, 0.0
  %v824 = vmax.f32 %v622, 0.0
  %v825 = vmax.f32 %v691, 0.0
  %v826 = vmax.f32 %v348, 0.0
  %v827 = vmax.f32 %v417, 0.0
  %v828 = vmax.f32 %v486, 0.0
  %v829 = vmax.f32 %v555, 0.0
  %v830 = vmax.f32 %v624, 0.0
  %v831 = vmax.f32 %v693, 0.0
  %v832 = vmax.f32 %v351, 0.0
  %v833 = vmax.f32 %v420, 0.0
  %v834 = vmax.f32 %v489, 0.0
  %v835 = vmax.f32 %v558, 0.0
  %v836 = vmax.f32 %v627, 0.0
  %v837 = vmax.f32 %v696, 0.0
  %v838 = vmax.f32 %v353, 0.0
  %v839 = vmax.f32 %v422, 0.0
  %v840 = vmax.f32 %v491, 0.0
  %v841 = vmax.f32 %v560, 0.0
  %v842 = vmax.f32 %v629, 0.0
  %v843 = vmax.f32 %v698, 0.0
  %v844 = vrot.slane %v700, 4
  %v845 = vmax.f32 %v700, %v844
  %v846 = vrot.slane %v845, 2
  %v847 = vmax.f32 %v845, %v846
  %v848 = vrot.slane %v847, 1
  %v849 = vmax.f32 %v847, %v848
  %v850 = vrot.slane %v701, 4
  %v851 = vmax.f32 %v701, %v850
  %v852 = vrot.slane %v851, 2
  %v853 = vmax.f32 %v851, %v852
  %v854 = vrot.slane %v853, 1
  %v855 = vmax.f32 %v853, %v854
  %v856 = vrot.slane %v702, 4
  %v857 = vmax.f32 %v702, %v856
  %v858 = vrot.slane %v857, 2
  %v859 = vmax.f32 %v857, %v858
  %v860 = vrot.slane %v859, 1
  %v861 = vmax.f32 %v859, %v860
  %v862 = vrot.slane %v703, 4
  %v863 = vmax.f32 %v703, %v862
  %v864 = vrot.slane %v863, 2
  %v865 = vmax.f32 %v863, %v864
  %v866 = vrot.slane %v865, 1
  %v867 = vmax.f32 %v865, %v866
  %v868 = vrot.slane %v704, 4
  %v869 = vmax.f32 %v704, %v868
  %v870 = vrot.slane %v869, 2
  %v871 = vmax.f32 %v869, %v870
  %v872 = vrot.slane %v871, 1
  %v873 = vmax.f32 %v871, %v872
  %v874 = vrot.slane %v705, 4
  %v875 = vmax.f32 %v705, %v874
  %v876 = vrot.slane %v875, 2
  %v877 = vmax.f32 %v875, %v876
  %v878 = vrot.slane %v877, 1
  %v879 = vmax.f32 %v877, %v878
  %v880 = vrot.slane %v706, 4
  %v881 = vmax.f32 %v706, %v880
  %v882 = vrot.slane %v881, 2
  %v883 = vmax.f32 %v881, %v882
  %v884 = vrot.slane %v883, 1
  %v885 = vmax.f32 %v883, %v884
  %v886 = vrot.slane %v707, 4
  %v887 = vmax.f32 %v707, %v886
  %v888 = vrot.slane %v887, 2
  %v889 = vmax.f32 %v887, %v888
  %v890 = vrot.slane %v889, 1
  %v891 = vmax.f32 %v889, %v890
  %v892 = vrot.slane %v708, 4
  %v893 = vmax.f32 %v708, %v892
  %v894 = vrot.slane %v893, 2
  %v895 = vmax.f32 %v893, %v894
  %v896 = vrot.slane %v895, 1
  %v897 = vmax.f32 %v895, %v896
  %v898 = vrot.slane %v709, 4
  %v899 = vmax.f32 %v709, %v898
  %v900 = vrot.slane %v899, 2
  %v901 = vmax.f32 %v899, %v900
  %v902 = vrot.slane %v901, 1
  %v903 = vmax.f32 %v901, %v902
  %v904 = vrot.slane %v710, 4
  %v905 = vmax.f32 %v710, %v904
  %v906 = vrot.slane %v905, 2
  %v907 = vmax.f32 %v905, %v906
  %v908 = vrot.slane %v907, 1
  %v909 = vmax.f32 %v907, %v908
  %v910 = vrot.slane %v711, 4
  %v911 = vmax.f32 %v711, %v910
  %v912 = vrot.slane %v911, 2
  %v913 = vmax.f32 %v911, %v912
  %v914 = vrot.slane %v913, 1
  %v915 = vmax.f32 %v913, %v914
  %v916 = vrot.slane %v712, 4
  %v917 = vmax.f32 %v712, %v916
  %v918 = vrot.slane %v917, 2
  %v919 = vmax.f32 %v917, %v918
  %v920 = vrot.slane %v919, 1
  %v921 = vmax.f32 %v919, %v920
  %v922 = vrot.slane %v713, 4
  %v923 = vmax.f32 %v713, %v922
  %v924 = vrot.slane %v923, 2
  %v925 = vmax.f32 %v923, %v924
  %v926 = vrot.slane %v925, 1
  %v927 = vmax.f32 %v925, %v926
  %v928 = vrot.slane %v714, 4
  %v929 = vmax.f32 %v714, %v928
  %v930 = vrot.slane %v929, 2
  %v931 = vmax.f32 %v929, %v930
  %v932 = vrot.slane %v931, 1
  %v933 = vmax.f32 %v931, %v932
  %v934 = vrot.slane %v715, 4
  %v935 = vmax.f32 %v715, %v934
  %v936 = vrot.slane %v935, 2
  %v937 = vmax.f32 %v935, %v936
  %v938 = vrot.slane %v937, 1
  %v939 = vmax.f32 %v937, %v938
  %v940 = vrot.slane %v716, 4
  %v941 = vmax.f32 %v716, %v940
  %v942 = vrot.slane %v941, 2
  %v943 = vmax.f32 %v941, %v942
  %v944 = vrot.slane %v943, 1
  %v945 = vmax.f32 %v943, %v944
  %v946 = vrot.slane %v717, 4
  %v947 = vmax.f32 %v717, %v946
  %v948 = vrot.slane %v947, 2
  %v949 = vmax.f32 %v947, %v948
  %v950 = vrot.slane %v949, 1
  %v951 = vmax.f32 %v949, %v950
  %v952 = vrot.slane %v718, 4
  %v953 = vmax.f32 %v718, %v952
  %v954 = vrot.slane %v953, 2
  %v955 = vmax.f32 %v953, %v954
  %v956 = vrot.slane %v955, 1
  %v957 = vmax.f32 %v955, %v956
  %v958 = vrot.slane %v719, 4
  %v959 = vmax.f32 %v719, %v958
  %v960 = vrot.slane %v959, 2
  %v961 = vmax.f32 %v959, %v960
  %v962 = vrot.slane %v961, 1
  %v963 = vmax.f32 %v961, %v962
  %v964 = vrot.slane %v720, 4
  %v965 = vmax.f32 %v720, %v964
  %v966 = vrot.slane %v965, 2
  %v967 = vmax.f32 %v965, %v966
  %v968 = vrot.slane %v967, 1
  %v969 = vmax.f32 %v967, %v968
  %v970 = vrot.slane %v721, 4
  %v971 = vmax.f32 %v721, %v970
  %v972 = vrot.slane %v971, 2
  %v973 = vmax.f32 %v971, %v972
  %v974 = vrot.slane %v973, 1
  %v975 = vmax.f32 %v973, %v974
  %v976 = vrot.slane %v722, 4
  %v977 = vmax.f32 %v722, %v976
  %v978 = vrot.slane %v977, 2
  %v979 = vmax.f32 %v977, %v978
  %v980 = vrot.slane %v979, 1
  %v981 = vmax.f32 %v979, %v980
  %v982 = vrot.slane %v723, 4
  %v983 = vmax.f32 %v723, %v982
  %v984 = vrot.slane %v983, 2
  %v985 = vmax.f32 %v983, %v984
  %v986 = vrot.slane %v985, 1
  %v987 = vmax.f32 %v985, %v986
  %v988 = vrot.slane %v724, 4
  %v989 = vmax.f32 %v724, %v988
  %v990 = vrot.slane %v989, 2
  %v991 = vmax.f32 %v989, %v990
  %v992 = vrot.slane %v991, 1
  %v993 = vmax.f32 %v991, %v992
  %v994 = vrot.slane %v725, 4
  %v995 = vmax.f32 %v725, %v994
  %v996 = vrot.slane %v995, 2
  %v997 = vmax.f32 %v995, %v996
  %v998 = vrot.slane %v997, 1
  %v999 = vmax.f32 %v997, %v998
  %v1000 = vrot.slane %v726, 4
  %v1001 = vmax.f32 %v726, %v1000
  %v1002 = vrot.slane %v1001, 2
  %v1003 = vmax.f32 %v1001, %v1002
  %v1004 = vrot.slane %v1003, 1
  %v1005 = vmax.f32 %v1003, %v1004
  %v1006 = vrot.slane %v727, 4
  %v1007 = vmax.f32 %v727, %v1006
  %v1008 = vrot.slane %v1007, 2
  %v1009 = vmax.f32 %v1007, %v1008
  %v1010 = vrot.slane %v1009, 1
  %v1011 = vmax.f32 %v1009, %v1010
  %v1012 = vrot.slane %v728, 4
  %v1013 = vmax.f32 %v728, %v1012
  %v1014 = vrot.slane %v1013, 2
  %v1015 = vmax.f32 %v1013, %v1014
  %v1016 = vrot.slane %v1015, 1
  %v1017 = vmax.f32 %v1015, %v1016
  %v1018 = vrot.slane %v729, 4
  %v1019 = vmax.f32 %v729, %v1018
  %v1020 = vrot.slane %v1019, 2
  %v1021 = vmax.f32 %v1019, %v1020
  %v1022 = vrot.slane %v1021, 1
  %v1023 = vmax.f32 %v1021, %v1022
  %v1024 = vrot.slane %v730, 4
  %v1025 = vmax.f32 %v730, %v1024
  %v1026 = vrot.slane %v1025, 2
  %v1027 = vmax.f32 %v1025, %v1026
  %v1028 = vrot.slane %v1027, 1
  %v1029 = vmax.f32 %v1027, %v1028
  %v1030 = vrot.slane %v731, 4
  %v1031 = vmax.f32 %v731, %v1030
  %v1032 = vrot.slane %v1031, 2
  %v1033 = vmax.f32 %v1031, %v1032
  %v1034 = vrot.slane %v1033, 1
  %v1035 = vmax.f32 %v1033, %v1034
  %v1036 = vrot.slane %v732, 4
  %v1037 = vmax.f32 %v732, %v1036
  %v1038 = vrot.slane %v1037, 2
  %v1039 = vmax.f32 %v1037, %v1038
  %v1040 = vrot.slane %v1039, 1
  %v1041 = vmax.f32 %v1039, %v1040
  %v1042 = vrot.slane %v733, 4
  %v1043 = vmax.f32 %v733, %v1042
  %v1044 = vrot.slane %v1043, 2
  %v1045 = vmax.f32 %v1043, %v1044
  %v1046 = vrot.slane %v1045, 1
  %v1047 = vmax.f32 %v1045, %v1046
  %v1048 = vrot.slane %v734, 4
  %v1049 = vmax.f32 %v734, %v1048
  %v1050 = vrot.slane %v1049, 2
  %v1051 = vmax.f32 %v1049, %v1050
  %v1052 = vrot.slane %v1051, 1
  %v1053 = vmax.f32 %v1051, %v1052
  %v1054 = vrot.slane %v735, 4
  %v1055 = vmax.f32 %v735, %v1054
  %v1056 = vrot.slane %v1055, 2
  %v1057 = vmax.f32 %v1055, %v1056
  %v1058 = vrot.slane %v1057, 1
  %v1059 = vmax.f32 %v1057, %v1058
  %v1060 = vrot.slane %v736, 4
  %v1061 = vmax.f32 %v736, %v1060
  %v1062 = vrot.slane %v1061, 2
  %v1063 = vmax.f32 %v1061, %v1062
  %v1064 = vrot.slane %v1063, 1
  %v1065 = vmax.f32 %v1063, %v1064
  %v1066 = vrot.slane %v737, 4
  %v1067 = vmax.f32 %v737, %v1066
  %v1068 = vrot.slane %v1067, 2
  %v1069 = vmax.f32 %v1067, %v1068
  %v1070 = vrot.slane %v1069, 1
  %v1071 = vmax.f32 %v1069, %v1070
  %v1072 = vrot.slane %v738, 4
  %v1073 = vmax.f32 %v738, %v1072
  %v1074 = vrot.slane %v1073, 2
  %v1075 = vmax.f32 %v1073, %v1074
  %v1076 = vrot.slane %v1075, 1
  %v1077 = vmax.f32 %v1075, %v1076
  %v1078 = vrot.slane %v739, 4
  %v1079 = vmax.f32 %v739, %v1078
  %v1080 = vrot.slane %v1079, 2
  %v1081 = vmax.f32 %v1079, %v1080
  %v1082 = vrot.slane %v1081, 1
  %v1083 = vmax.f32 %v1081, %v1082
  %v1084 = vrot.slane %v740, 4
  %v1085 = vmax.f32 %v740, %v1084
  %v1086 = vrot.slane %v1085, 2
  %v1087 = vmax.f32 %v1085, %v1086
  %v1088 = vrot.slane %v1087, 1
  %v1089 = vmax.f32 %v1087, %v1088
  %v1090 = vrot.slane %v741, 4
  %v1091 = vmax.f32 %v741, %v1090
  %v1092 = vrot.slane %v1091, 2
  %v1093 = vmax.f32 %v1091, %v1092
  %v1094 = vrot.slane %v1093, 1
  %v1095 = vmax.f32 %v1093, %v1094
  %v1096 = vrot.slane %v742, 4
  %v1097 = vmax.f32 %v742, %v1096
  %v1098 = vrot.slane %v1097, 2
  %v1099 = vmax.f32 %v1097, %v1098
  %v1100 = vrot.slane %v1099, 1
  %v1101 = vmax.f32 %v1099, %v1100
  %v1102 = vrot.slane %v743, 4
  %v1103 = vmax.f32 %v743, %v1102
  %v1104 = vrot.slane %v1103, 2
  %v1105 = vmax.f32 %v1103, %v1104
  %v1106 = vrot.slane %v1105, 1
  %v1107 = vmax.f32 %v1105, %v1106
  %v1108 = vrot.slane %v744, 4
  %v1109 = vmax.f32 %v744, %v1108
  %v1110 = vrot.slane %v1109, 2
  %v1111 = vmax.f32 %v1109, %v1110
  %v1112 = vrot.slane %v1111, 1
  %v1113 = vmax.f32 %v1111, %v1112
  %v1114 = vrot.slane %v745, 4
  %v1115 = vmax.f32 %v745, %v1114
  %v1116 = vrot.slane %v1115, 2
  %v1117 = vmax.f32 %v1115, %v1116
  %v1118 = vrot.slane %v1117, 1
  %v1119 = vmax.f32 %v1117, %v1118
  %v1120 = vrot.slane %v746, 4
  %v1121 = vmax.f32 %v746, %v1120
  %v1122 = vrot.slane %v1121, 2
  %v1123 = vmax.f32 %v1121, %v1122
  %v1124 = vrot.slane %v1123, 1
  %v1125 = vmax.f32 %v1123, %v1124
  %v1126 = vrot.slane %v747, 4
  %v1127 = vmax.f32 %v747, %v1126
  %v1128 = vrot.slane %v1127, 2
  %v1129 = vmax.f32 %v1127, %v1128
  %v1130 = vrot.slane %v1129, 1
  %v1131 = vmax.f32 %v1129, %v1130
  %v1132 = vrot.slane %v748, 4
  %v1133 = vmax.f32 %v748, %v1132
  %v1134 = vrot.slane %v1133, 2
  %v1135 = vmax.f32 %v1133, %v1134
  %v1136 = vrot.slane %v1135, 1
  %v1137 = vmax.f32 %v1135, %v1136
  %v1138 = vrot.slane %v749, 4
  %v1139 = vmax.f32 %v749, %v1138
  %v1140 = vrot.slane %v1139, 2
  %v1141 = vmax.f32 %v1139, %v1140
  %v1142 = vrot.slane %v1141, 1
  %v1143 = vmax.f32 %v1141, %v1142
  %v1144 = vrot.slane %v750, 4
  %v1145 = vmax.f32 %v750, %v1144
  %v1146 = vrot.slane %v1145, 2
  %v1147 = vmax.f32 %v1145, %v1146
  %v1148 = vrot.slane %v1147, 1
  %v1149 = vmax.f32 %v1147, %v1148
  %v1150 = vrot.slane %v751, 4
  %v1151 = vmax.f32 %v751, %v1150
  %v1152 = vrot.slane %v1151, 2
  %v1153 = vmax.f32 %v1151, %v1152
  %v1154 = vrot.slane %v1153, 1
  %v1155 = vmax.f32 %v1153, %v1154
  %v1156 = vrot.slane %v752, 4
  %v1157 = vmax.f32 %v752, %v1156
  %v1158 = vrot.slane %v1157, 2
  %v1159 = vmax.f32 %v1157, %v1158
  %v1160 = vrot.slane %v1159, 1
  %v1161 = vmax.f32 %v1159, %v1160
  %v1162 = vrot.slane %v753, 4
  %v1163 = vmax.f32 %v753, %v1162
  %v1164 = vrot.slane %v1163, 2
  %v1165 = vmax.f32 %v1163, %v1164
  %v1166 = vrot.slane %v1165, 1
  %v1167 = vmax.f32 %v1165, %v1166
  %v1168 = vrot.slane %v754, 4
  %v1169 = vmax.f32 %v754, %v1168
  %v1170 = vrot.slane %v1169, 2
  %v1171 = vmax.f32 %v1169, %v1170
  %v1172 = vrot.slane %v1171, 1
  %v1173 = vmax.f32 %v1171, %v1172
  %v1174 = vrot.slane %v755, 4
  %v1175 = vmax.f32 %v755, %v1174
  %v1176 = vrot.slane %v1175, 2
  %v1177 = vmax.f32 %v1175, %v1176
  %v1178 = vrot.slane %v1177, 1
  %v1179 = vmax.f32 %v1177, %v1178
  %v1180 = vrot.slane %v756, 4
  %v1181 = vmax.f32 %v756, %v1180
  %v1182 = vrot.slane %v1181, 2
  %v1183 = vmax.f32 %v1181, %v1182
  %v1184 = vrot.slane %v1183, 1
  %v1185 = vmax.f32 %v1183, %v1184
  %v1186 = vrot.slane %v757, 4
  %v1187 = vmax.f32 %v757, %v1186
  %v1188 = vrot.slane %v1187, 2
  %v1189 = vmax.f32 %v1187, %v1188
  %v1190 = vrot.slane %v1189, 1
  %v1191 = vmax.f32 %v1189, %v1190
  %v1192 = vrot.slane %v758, 4
  %v1193 = vmax.f32 %v758, %v1192
  %v1194 = vrot.slane %v1193, 2
  %v1195 = vmax.f32 %v1193, %v1194
  %v1196 = vrot.slane %v1195, 1
  %v1197 = vmax.f32 %v1195, %v1196
  %v1198 = vrot.slane %v759, 4
  %v1199 = vmax.f32 %v759, %v1198
  %v1200 = vrot.slane %v1199, 2
  %v1201 = vmax.f32 %v1199, %v1200
  %v1202 = vrot.slane %v1201, 1
  %v1203 = vmax.f32 %v1201, %v1202
  %v1204 = vrot.slane %v760, 4
  %v1205 = vmax.f32 %v760, %v1204
  %v1206 = vrot.slane %v1205, 2
  %v1207 = vmax.f32 %v1205, %v1206
  %v1208 = vrot.slane %v1207, 1
  %v1209 = vmax.f32 %v1207, %v1208
  %v1210 = vrot.slane %v761, 4
  %v1211 = vmax.f32 %v761, %v1210
  %v1212 = vrot.slane %v1211, 2
  %v1213 = vmax.f32 %v1211, %v1212
  %v1214 = vrot.slane %v1213, 1
  %v1215 = vmax.f32 %v1213, %v1214
  %v1216 = vrot.slane %v762, 4
  %v1217 = vmax.f32 %v762, %v1216
  %v1218 = vrot.slane %v1217, 2
  %v1219 = vmax.f32 %v1217, %v1218
  %v1220 = vrot.slane %v1219, 1
  %v1221 = vmax.f32 %v1219, %v1220
  %v1222 = vrot.slane %v763, 4
  %v1223 = vmax.f32 %v763, %v1222
  %v1224 = vrot.slane %v1223, 2
  %v1225 = vmax.f32 %v1223, %v1224
  %v1226 = vrot.slane %v1225, 1
  %v1227 = vmax.f32 %v1225, %v1226
  %v1228 = vrot.slane %v764, 4
  %v1229 = vmax.f32 %v764, %v1228
  %v1230 = vrot.slane %v1229, 2
  %v1231 = vmax.f32 %v1229, %v1230
  %v1232 = vrot.slane %v1231, 1
  %v1233 = vmax.f32 %v1231, %v1232
  %v1234 = vrot.slane %v765, 4
  %v1235 = vmax.f32 %v765, %v1234
  %v1236 = vrot.slane %v1235, 2
  %v1237 = vmax.f32 %v1235, %v1236
  %v1238 = vrot.slane %v1237, 1
  %v1239 = vmax.f32 %v1237, %v1238
  %v1240 = vrot.slane %v766, 4
  %v1241 = vmax.f32 %v766, %v1240
  %v1242 = vrot.slane %v1241, 2
  %v1243 = vmax.f32 %v1241, %v1242
  %v1244 = vrot.slane %v1243, 1
  %v1245 = vmax.f32 %v1243, %v1244
  %v1246 = vrot.slane %v767, 4
  %v1247 = vmax.f32 %v767, %v1246
  %v1248 = vrot.slane %v1247, 2
  %v1249 = vmax.f32 %v1247, %v1248
  %v1250 = vrot.slane %v1249, 1
  %v1251 = vmax.f32 %v1249, %v1250
  %v1252 = vrot.slane %v768, 4
  %v1253 = vmax.f32 %v768, %v1252
  %v1254 = vrot.slane %v1253, 2
  %v1255 = vmax.f32 %v1253, %v1254
  %v1256 = vrot.slane %v1255, 1
  %v1257 = vmax.f32 %v1255, %v1256
  %v1258 = vrot.slane %v769, 4
  %v1259 = vmax.f32 %v769, %v1258
  %v1260 = vrot.slane %v1259, 2
  %v1261 = vmax.f32 %v1259, %v1260
  %v1262 = vrot.slane %v1261, 1
  %v1263 = vmax.f32 %v1261, %v1262
  %v1264 = vrot.slane %v770, 4
  %v1265 = vmax.f32 %v770, %v1264
  %v1266 = vrot.slane %v1265, 2
  %v1267 = vmax.f32 %v1265, %v1266
  %v1268 = vrot.slane %v1267, 1
  %v1269 = vmax.f32 %v1267, %v1268
  %v1270 = vrot.slane %v771, 4
  %v1271 = vmax.f32 %v771, %v1270
  %v1272 = vrot.slane %v1271, 2
  %v1273 = vmax.f32 %v1271, %v1272
  %v1274 = vrot.slane %v1273, 1
  %v1275 = vmax.f32 %v1273, %v1274
  %v1276 = vrot.slane %v772, 4
  %v1277 = vmax.f32 %v772, %v1276
  %v1278 = vrot.slane %v1277, 2
  %v1279 = vmax.f32 %v1277, %v1278
  %v1280 = vrot.slane %v1279, 1
  %v1281 = vmax.f32 %v1279, %v1280
  %v1282 = vrot.slane %v773, 4
  %v1283 = vmax.f32 %v773, %v1282
  %v1284 = vrot.slane %v1283, 2
  %v1285 = vmax.f32 %v1283, %v1284
  %v1286 = vrot.slane %v1285, 1
  %v1287 = vmax.f32 %v1285, %v1286
  %v1288 = vrot.slane %v774, 4
  %v1289 = vmax.f32 %v774, %v1288
  %v1290 = vrot.slane %v1289, 2
  %v1291 = vmax.f32 %v1289, %v1290
  %v1292 = vrot.slane %v1291, 1
  %v1293 = vmax.f32 %v1291, %v1292
  %v1294 = vrot.slane %v775, 4
  %v1295 = vmax.f32 %v775, %v1294
  %v1296 = vrot.slane %v1295, 2
  %v1297 = vmax.f32 %v1295, %v1296
  %v1298 = vrot.slane %v1297, 1
  %v1299 = vmax.f32 %v1297, %v1298
  %v1300 = vrot.slane %v776, 4
  %v1301 = vmax.f32 %v776, %v1300
  %v1302 = vrot.slane %v1301, 2
  %v1303 = vmax.f32 %v1301, %v1302
  %v1304 = vrot.slane %v1303, 1
  %v1305 = vmax.f32 %v1303, %v1304
  %v1306 = vrot.slane %v777, 4
  %v1307 = vmax.f32 %v777, %v1306
  %v1308 = vrot.slane %v1307, 2
  %v1309 = vmax.f32 %v1307, %v1308
  %v1310 = vrot.slane %v1309, 1
  %v1311 = vmax.f32 %v1309, %v1310
  %v1312 = vrot.slane %v778, 4
  %v1313 = vmax.f32 %v778, %v1312
  %v1314 = vrot.slane %v1313, 2
  %v1315 = vmax.f32 %v1313, %v1314
  %v1316 = vrot.slane %v1315, 1
  %v1317 = vmax.f32 %v1315, %v1316
  %v1318 = vrot.slane %v779, 4
  %v1319 = vmax.f32 %v779, %v1318
  %v1320 = vrot.slane %v1319, 2
  %v1321 = vmax.f32 %v1319, %v1320
  %v1322 = vrot.slane %v1321, 1
  %v1323 = vmax.f32 %v1321, %v1322
  %v1324 = vrot.slane %v780, 4
  %v1325 = vmax.f32 %v780, %v1324
  %v1326 = vrot.slane %v1325, 2
  %v1327 = vmax.f32 %v1325, %v1326
  %v1328 = vrot.slane %v1327, 1
  %v1329 = vmax.f32 %v1327, %v1328
  %v1330 = vrot.slane %v781, 4
  %v1331 = vmax.f32 %v781, %v1330
  %v1332 = vrot.slane %v1331, 2
  %v1333 = vmax.f32 %v1331, %v1332
  %v1334 = vrot.slane %v1333, 1
  %v1335 = vmax.f32 %v1333, %v1334
  %v1336 = vrot.slane %v782, 4
  %v1337 = vmax.f32 %v782, %v1336
  %v1338 = vrot.slane %v1337, 2
  %v1339 = vmax.f32 %v1337, %v1338
  %v1340 = vrot.slane %v1339, 1
  %v1341 = vmax.f32 %v1339, %v1340
  %v1342 = vrot.slane %v783, 4
  %v1343 = vmax.f32 %v783, %v1342
  %v1344 = vrot.slane %v1343, 2
  %v1345 = vmax.f32 %v1343, %v1344
  %v1346 = vrot.slane %v1345, 1
  %v1347 = vmax.f32 %v1345, %v1346
  %v1348 = vrot.slane %v784, 4
  %v1349 = vmax.f32 %v784, %v1348
  %v1350 = vrot.slane %v1349, 2
  %v1351 = vmax.f32 %v1349, %v1350
  %v1352 = vrot.slane %v1351, 1
  %v1353 = vmax.f32 %v1351, %v1352
  %v1354 = vrot.slane %v785, 4
  %v1355 = vmax.f32 %v785, %v1354
  %v1356 = vrot.slane %v1355, 2
  %v1357 = vmax.f32 %v1355, %v1356
  %v1358 = vrot.slane %v1357, 1
  %v1359 = vmax.f32 %v1357, %v1358
  %v1360 = vrot.slane %v786, 4
  %v1361 = vmax.f32 %v786, %v1360
  %v1362 = vrot.slane %v1361, 2
  %v1363 = vmax.f32 %v1361, %v1362
  %v1364 = vrot.slane %v1363, 1
  %v1365 = vmax.f32 %v1363, %v1364
  %v1366 = vrot.slane %v787, 4
  %v1367 = vmax.f32 %v787, %v1366
  %v1368 = vrot.slane %v1367, 2
  %v1369 = vmax.f32 %v1367, %v1368
  %v1370 = vrot.slane %v1369, 1
  %v1371 = vmax.f32 %v1369, %v1370
  %v1372 = vrot.slane %v788, 4
  %v1373 = vmax.f32 %v788, %v1372
  %v1374 = vrot.slane %v1373, 2
  %v1375 = vmax.f32 %v1373, %v1374
  %v1376 = vrot.slane %v1375, 1
  %v1377 = vmax.f32 %v1375, %v1376
  %v1378 = vrot.slane %v789, 4
  %v1379 = vmax.f32 %v789, %v1378
  %v1380 = vrot.slane %v1379, 2
  %v1381 = vmax.f32 %v1379, %v1380
  %v1382 = vrot.slane %v1381, 1
  %v1383 = vmax.f32 %v1381, %v1382
  %v1384 = vrot.slane %v790, 4
  %v1385 = vmax.f32 %v790, %v1384
  %v1386 = vrot.slane %v1385, 2
  %v1387 = vmax.f32 %v1385, %v1386
  %v1388 = vrot.slane %v1387, 1
  %v1389 = vmax.f32 %v1387, %v1388
  %v1390 = vrot.slane %v791, 4
  %v1391 = vmax.f32 %v791, %v1390
  %v1392 = vrot.slane %v1391, 2
  %v1393 = vmax.f32 %v1391, %v1392
  %v1394 = vrot.slane %v1393, 1
  %v1395 = vmax.f32 %v1393, %v1394
  %v1396 = vrot.slane %v792, 4
  %v1397 = vmax.f32 %v792, %v1396
  %v1398 = vrot.slane %v1397, 2
  %v1399 = vmax.f32 %v1397, %v1398
  %v1400 = vrot.slane %v1399, 1
  %v1401 = vmax.f32 %v1399, %v1400
  %v1402 = vrot.slane %v793, 4
  %v1403 = vmax.f32 %v793, %v1402
  %v1404 = vrot.slane %v1403, 2
  %v1405 = vmax.f32 %v1403, %v1404
  %v1406 = vrot.slane %v1405, 1
  %v1407 = vmax.f32 %v1405, %v1406
  %v1408 = vrot.slane %v794, 4
  %v1409 = vmax.f32 %v794, %v1408
  %v1410 = vrot.slane %v1409, 2
  %v1411 = vmax.f32 %v1409, %v1410
  %v1412 = vrot.slane %v1411, 1
  %v1413 = vmax.f32 %v1411, %v1412
  %v1414 = vrot.slane %v795, 4
  %v1415 = vmax.f32 %v795, %v1414
  %v1416 = vrot.slane %v1415, 2
  %v1417 = vmax.f32 %v1415, %v1416
  %v1418 = vrot.slane %v1417, 1
  %v1419 = vmax.f32 %v1417, %v1418
  %v1420 = vrot.slane %v796, 4
  %v1421 = vmax.f32 %v796, %v1420
  %v1422 = vrot.slane %v1421, 2
  %v1423 = vmax.f32 %v1421, %v1422
  %v1424 = vrot.slane %v1423, 1
  %v1425 = vmax.f32 %v1423, %v1424
  %v1426 = vrot.slane %v797, 4
  %v1427 = vmax.f32 %v797, %v1426
  %v1428 = vrot.slane %v1427, 2
  %v1429 = vmax.f32 %v1427, %v1428
  %v1430 = vrot.slane %v1429, 1
  %v1431 = vmax.f32 %v1429, %v1430
  %v1432 = vrot.slane %v798, 4
  %v1433 = vmax.f32 %v798, %v1432
  %v1434 = vrot.slane %v1433, 2
  %v1435 = vmax.f32 %v1433, %v1434
  %v1436 = vrot.slane %v1435, 1
  %v1437 = vmax.f32 %v1435, %v1436
  %v1438 = vrot.slane %v799, 4
  %v1439 = vmax.f32 %v799, %v1438
  %v1440 = vrot.slane %v1439, 2
  %v1441 = vmax.f32 %v1439, %v1440
  %v1442 = vrot.slane %v1441, 1
  %v1443 = vmax.f32 %v1441, %v1442
  %v1444 = vrot.slane %v800, 4
  %v1445 = vmax.f32 %v800, %v1444
  %v1446 = vrot.slane %v1445, 2
  %v1447 = vmax.f32 %v1445, %v1446
  %v1448 = vrot.slane %v1447, 1
  %v1449 = vmax.f32 %v1447, %v1448
  %v1450 = vrot.slane %v801, 4
  %v1451 = vmax.f32 %v801, %v1450
  %v1452 = vrot.slane %v1451, 2
  %v1453 = vmax.f32 %v1451, %v1452
  %v1454 = vrot.slane %v1453, 1
  %v1455 = vmax.f32 %v1453, %v1454
  %v1456 = vrot.slane %v802, 4
  %v1457 = vmax.f32 %v802, %v1456
  %v1458 = vrot.slane %v1457, 2
  %v1459 = vmax.f32 %v1457, %v1458
  %v1460 = vrot.slane %v1459, 1
  %v1461 = vmax.f32 %v1459, %v1460
  %v1462 = vrot.slane %v803, 4
  %v1463 = vmax.f32 %v803, %v1462
  %v1464 = vrot.slane %v1463, 2
  %v1465 = vmax.f32 %v1463, %v1464
  %v1466 = vrot.slane %v1465, 1
  %v1467 = vmax.f32 %v1465, %v1466
  %v1468 = vrot.slane %v804, 4
  %v1469 = vmax.f32 %v804, %v1468
  %v1470 = vrot.slane %v1469, 2
  %v1471 = vmax.f32 %v1469, %v1470
  %v1472 = vrot.slane %v1471, 1
  %v1473 = vmax.f32 %v1471, %v1472
  %v1474 = vrot.slane %v805, 4
  %v1475 = vmax.f32 %v805, %v1474
  %v1476 = vrot.slane %v1475, 2
  %v1477 = vmax.f32 %v1475, %v1476
  %v1478 = vrot.slane %v1477, 1
  %v1479 = vmax.f32 %v1477, %v1478
  %v1480 = vrot.slane %v806, 4
  %v1481 = vmax.f32 %v806, %v1480
  %v1482 = vrot.slane %v1481, 2
  %v1483 = vmax.f32 %v1481, %v1482
  %v1484 = vrot.slane %v1483, 1
  %v1485 = vmax.f32 %v1483, %v1484
  %v1486 = vrot.slane %v807, 4
  %v1487 = vmax.f32 %v807, %v1486
  %v1488 = vrot.slane %v1487, 2
  %v1489 = vmax.f32 %v1487, %v1488
  %v1490 = vrot.slane %v1489, 1
  %v1491 = vmax.f32 %v1489, %v1490
  %v1492 = vrot.slane %v808, 4
  %v1493 = vmax.f32 %v808, %v1492
  %v1494 = vrot.slane %v1493, 2
  %v1495 = vmax.f32 %v1493, %v1494
  %v1496 = vrot.slane %v1495, 1
  %v1497 = vmax.f32 %v1495, %v1496
  %v1498 = vrot.slane %v809, 4
  %v1499 = vmax.f32 %v809, %v1498
  %v1500 = vrot.slane %v1499, 2
  %v1501 = vmax.f32 %v1499, %v1500
  %v1502 = vrot.slane %v1501, 1
  %v1503 = vmax.f32 %v1501, %v1502
  %v1504 = vrot.slane %v810, 4
  %v1505 = vmax.f32 %v810, %v1504
  %v1506 = vrot.slane %v1505, 2
  %v1507 = vmax.f32 %v1505, %v1506
  %v1508 = vrot.slane %v1507, 1
  %v1509 = vmax.f32 %v1507, %v1508
  %v1510 = vrot.slane %v811, 4
  %v1511 = vmax.f32 %v811, %v1510
  %v1512 = vrot.slane %v1511, 2
  %v1513 = vmax.f32 %v1511, %v1512
  %v1514 = vrot.slane %v1513, 1
  %v1515 = vmax.f32 %v1513, %v1514
  %v1516 = vrot.slane %v812, 4
  %v1517 = vmax.f32 %v812, %v1516
  %v1518 = vrot.slane %v1517, 2
  %v1519 = vmax.f32 %v1517, %v1518
  %v1520 = vrot.slane %v1519, 1
  %v1521 = vmax.f32 %v1519, %v1520
  %v1522 = vrot.slane %v813, 4
  %v1523 = vmax.f32 %v813, %v1522
  %v1524 = vrot.slane %v1523, 2
  %v1525 = vmax.f32 %v1523, %v1524
  %v1526 = vrot.slane %v1525, 1
  %v1527 = vmax.f32 %v1525, %v1526
  %v1528 = vrot.slane %v814, 4
  %v1529 = vmax.f32 %v814, %v1528
  %v1530 = vrot.slane %v1529, 2
  %v1531 = vmax.f32 %v1529, %v1530
  %v1532 = vrot.slane %v1531, 1
  %v1533 = vmax.f32 %v1531, %v1532
  %v1534 = vrot.slane %v815, 4
  %v1535 = vmax.f32 %v815, %v1534
  %v1536 = vrot.slane %v1535, 2
  %v1537 = vmax.f32 %v1535, %v1536
  %v1538 = vrot.slane %v1537, 1
  %v1539 = vmax.f32 %v1537, %v1538
  %v1540 = vrot.slane %v816, 4
  %v1541 = vmax.f32 %v816, %v1540
  %v1542 = vrot.slane %v1541, 2
  %v1543 = vmax.f32 %v1541, %v1542
  %v1544 = vrot.slane %v1543, 1
  %v1545 = vmax.f32 %v1543, %v1544
  %v1546 = vrot.slane %v817, 4
  %v1547 = vmax.f32 %v817, %v1546
  %v1548 = vrot.slane %v1547, 2
  %v1549 = vmax.f32 %v1547, %v1548
  %v1550 = vrot.slane %v1549, 1
  %v1551 = vmax.f32 %v1549, %v1550
  %v1552 = vrot.slane %v818, 4
  %v1553 = vmax.f32 %v818, %v1552
  %v1554 = vrot.slane %v1553, 2
  %v1555 = vmax.f32 %v1553, %v1554
  %v1556 = vrot.slane %v1555, 1
  %v1557 = vmax.f32 %v1555, %v1556
  %v1558 = vrot.slane %v819, 4
  %v1559 = vmax.f32 %v819, %v1558
  %v1560 = vrot.slane %v1559, 2
  %v1561 = vmax.f32 %v1559, %v1560
  %v1562 = vrot.slane %v1561, 1
  %v1563 = vmax.f32 %v1561, %v1562
  %v1564 = vrot.slane %v820, 4
  %v1565 = vmax.f32 %v820, %v1564
  %v1566 = vrot.slane %v1565, 2
  %v1567 = vmax.f32 %v1565, %v1566
  %v1568 = vrot.slane %v1567, 1
  %v1569 = vmax.f32 %v1567, %v1568
  %v1570 = vrot.slane %v821, 4
  %v1571 = vmax.f32 %v821, %v1570
  %v1572 = vrot.slane %v1571, 2
  %v1573 = vmax.f32 %v1571, %v1572
  %v1574 = vrot.slane %v1573, 1
  %v1575 = vmax.f32 %v1573, %v1574
  %v1576 = vrot.slane %v822, 4
  %v1577 = vmax.f32 %v822, %v1576
  %v1578 = vrot.slane %v1577, 2
  %v1579 = vmax.f32 %v1577, %v1578
  %v1580 = vrot.slane %v1579, 1
  %v1581 = vmax.f32 %v1579, %v1580
  %v1582 = vrot.slane %v823, 4
  %v1583 = vmax.f32 %v823, %v1582
  %v1584 = vrot.slane %v1583, 2
  %v1585 = vmax.f32 %v1583, %v1584
  %v1586 = vrot.slane %v1585, 1
  %v1587 = vmax.f32 %v1585, %v1586
  %v1588 = vrot.slane %v824, 4
  %v1589 = vmax.f32 %v824, %v1588
  %v1590 = vrot.slane %v1589, 2
  %v1591 = vmax.f32 %v1589, %v1590
  %v1592 = vrot.slane %v1591, 1
  %v1593 = vmax.f32 %v1591, %v1592
  %v1594 = vrot.slane %v825, 4
  %v1595 = vmax.f32 %v825, %v1594
  %v1596 = vrot.slane %v1595, 2
  %v1597 = vmax.f32 %v1595, %v1596
  %v1598 = vrot.slane %v1597, 1
  %v1599 = vmax.f32 %v1597, %v1598
  %v1600 = vrot.slane %v826, 4
  %v1601 = vmax.f32 %v826, %v1600
  %v1602 = vrot.slane %v1601, 2
  %v1603 = vmax.f32 %v1601, %v1602
  %v1604 = vrot.slane %v1603, 1
  %v1605 = vmax.f32 %v1603, %v1604
  %v1606 = vrot.slane %v827, 4
  %v1607 = vmax.f32 %v827, %v1606
  %v1608 = vrot.slane %v1607, 2
  %v1609 = vmax.f32 %v1607, %v1608
  %v1610 = vrot.slane %v1609, 1
  %v1611 = vmax.f32 %v1609, %v1610
  %v1612 = vrot.slane %v828, 4
  %v1613 = vmax.f32 %v828, %v1612
  %v1614 = vrot.slane %v1613, 2
  %v1615 = vmax.f32 %v1613, %v1614
  %v1616 = vrot.slane %v1615, 1
  %v1617 = vmax.f32 %v1615, %v1616
  %v1618 = vrot.slane %v829, 4
  %v1619 = vmax.f32 %v829, %v1618
  %v1620 = vrot.slane %v1619, 2
  %v1621 = vmax.f32 %v1619, %v1620
  %v1622 = vrot.slane %v1621, 1
  %v1623 = vmax.f32 %v1621, %v1622
  %v1624 = vrot.slane %v830, 4
  %v1625 = vmax.f32 %v830, %v1624
  %v1626 = vrot.slane %v1625, 2
  %v1627 = vmax.f32 %v1625, %v1626
  %v1628 = vrot.slane %v1627, 1
  %v1629 = vmax.f32 %v1627, %v1628
  %v1630 = vrot.slane %v831, 4
  %v1631 = vmax.f32 %v831, %v1630
  %v1632 = vrot.slane %v1631, 2
  %v1633 = vmax.f32 %v1631, %v1632
  %v1634 = vrot.slane %v1633, 1
  %v1635 = vmax.f32 %v1633, %v1634
  %v1636 = vrot.slane %v832, 4
  %v1637 = vmax.f32 %v832, %v1636
  %v1638 = vrot.slane %v1637, 2
  %v1639 = vmax.f32 %v1637, %v1638
  %v1640 = vrot.slane %v1639, 1
  %v1641 = vmax.f32 %v1639, %v1640
  %v1642 = vrot.slane %v833, 4
  %v1643 = vmax.f32 %v833, %v1642
  %v1644 = vrot.slane %v1643, 2
  %v1645 = vmax.f32 %v1643, %v1644
  %v1646 = vrot.slane %v1645, 1
  %v1647 = vmax.f32 %v1645, %v1646
  %v1648 = vrot.slane %v834, 4
  %v1649 = vmax.f32 %v834, %v1648
  %v1650 = vrot.slane %v1649, 2
  %v1651 = vmax.f32 %v1649, %v1650
  %v1652 = vrot.slane %v1651, 1
  %v1653 = vmax.f32 %v1651, %v1652
  %v1654 = vrot.slane %v835, 4
  %v1655 = vmax.f32 %v835, %v1654
  %v1656 = vrot.slane %v1655, 2
  %v1657 = vmax.f32 %v1655, %v1656
  %v1658 = vrot.slane %v1657, 1
  %v1659 = vmax.f32 %v1657, %v1658
  %v1660 = vrot.slane %v836, 4
  %v1661 = vmax.f32 %v836, %v1660
  %v1662 = vrot.slane %v1661, 2
  %v1663 = vmax.f32 %v1661, %v1662
  %v1664 = vrot.slane %v1663, 1
  %v1665 = vmax.f32 %v1663, %v1664
  %v1666 = vrot.slane %v837, 4
  %v1667 = vmax.f32 %v837, %v1666
  %v1668 = vrot.slane %v1667, 2
  %v1669 = vmax.f32 %v1667, %v1668
  %v1670 = vrot.slane %v1669, 1
  %v1671 = vmax.f32 %v1669, %v1670
  %v1672 = vrot.slane %v838, 4
  %v1673 = vmax.f32 %v838, %v1672
  %v1674 = vrot.slane %v1673, 2
  %v1675 = vmax.f32 %v1673, %v1674
  %v1676 = vrot.slane %v1675, 1
  %v1677 = vmax.f32 %v1675, %v1676
  %v1678 = vrot.slane %v839, 4
  %v1679 = vmax.f32 %v839, %v1678
  %v1680 = vrot.slane %v1679, 2
  %v1681 = vmax.f32 %v1679, %v1680
  %v1682 = vrot.slane %v1681, 1
  %v1683 = vmax.f32 %v1681, %v1682
  %v1684 = vrot.slane %v840, 4
  %v1685 = vmax.f32 %v840, %v1684
  %v1686 = vrot.slane %v1685, 2
  %v1687 = vmax.f32 %v1685, %v1686
  %v1688 = vrot.slane %v1687, 1
  %v1689 = vmax.f32 %v1687, %v1688
  %v1690 = vrot.slane %v841, 4
  %v1691 = vmax.f32 %v841, %v1690
  %v1692 = vrot.slane %v1691, 2
  %v1693 = vmax.f32 %v1691, %v1692
  %v1694 = vrot.slane %v1693, 1
  %v1695 = vmax.f32 %v1693, %v1694
  %v1696 = vrot.slane %v842, 4
  %v1697 = vmax.f32 %v842, %v1696
  %v1698 = vrot.slane %v1697, 2
  %v1699 = vmax.f32 %v1697, %v1698
  %v1700 = vrot.slane %v1699, 1
  %v1701 = vmax.f32 %v1699, %v1700
  %v1702 = vrot.slane %v843, 4
  %v1703 = vmax.f32 %v843, %v1702
  %v1704 = vrot.slane %v1703, 2
  %v1705 = vmax.f32 %v1703, %v1704
  %v1706 = vrot.slane %v1705, 1
  %v1707 = vmax.f32 %v1705, %v1706
  %vm1780 = vcmask 1041409
  %v1781 = vsel %vm1780, %v885, %v849
  %vm1782 = vcmask 1042434
  %v1783 = vsel %vm1782, %v921, %v1781
  %vm1784 = vcmask 1043459
  %v1785 = vsel %vm1784, %v957, %v1783
  %vm1786 = vcmask 1044484
  %v1787 = vsel %vm1786, %v993, %v1785
  %vm1788 = vcmask 1045509
  %v1789 = vsel %vm1788, %v1029, %v1787
  %vm1790 = vcmask 1046534
  %v1791 = vsel %vm1790, %v1065, %v1789
  %vm1792 = vcmask 1047559
  %v1793 = vsel %vm1792, %v1101, %v1791
  %v1794 = vsel %vm1780, %v891, %v855
  %v1795 = vsel %vm1782, %v927, %v1794
  %v1796 = vsel %vm1784, %v963, %v1795
  %v1797 = vsel %vm1786, %v999, %v1796
  %v1798 = vsel %vm1788, %v1035, %v1797
  %v1799 = vsel %vm1790, %v1071, %v1798
  %v1800 = vsel %vm1792, %v1107, %v1799
  %v1801 = vsel %vm1780, %v897, %v861
  %v1802 = vsel %vm1782, %v933, %v1801
  %v1803 = vsel %vm1784, %v969, %v1802
  %v1804 = vsel %vm1786, %v1005, %v1803
  %v1805 = vsel %vm1788, %v1041, %v1804
  %v1806 = vsel %vm1790, %v1077, %v1805
  %v1807 = vsel %vm1792, %v1113, %v1806
  %v1808 = vsel %vm1780, %v903, %v867
  %v1809 = vsel %vm1782, %v939, %v1808
  %v1810 = vsel %vm1784, %v975, %v1809
  %v1811 = vsel %vm1786, %v1011, %v1810
  %v1812 = vsel %vm1788, %v1047, %v1811
  %v1813 = vsel %vm1790, %v1083, %v1812
  %v1814 = vsel %vm1792, %v1119, %v1813
  %v1815 = vsel %vm1780, %v909, %v873
  %v1816 = vsel %vm1782, %v945, %v1815
  %v1817 = vsel %vm1784, %v981, %v1816
  %v1818 = vsel %vm1786, %v1017, %v1817
  %v1819 = vsel %vm1788, %v1053, %v1818
  %v1820 = vsel %vm1790, %v1089, %v1819
  %v1821 = vsel %vm1792, %v1125, %v1820
  %v1822 = vsel %vm1780, %v915, %v879
  %v1823 = vsel %vm1782, %v951, %v1822
  %v1824 = vsel %vm1784, %v987, %v1823
  %v1825 = vsel %vm1786, %v1023, %v1824
  %v1826 = vsel %vm1788, %v1059, %v1825
  %v1827 = vsel %vm1790, %v1095, %v1826
  %v1828 = vsel %vm1792, %v1131, %v1827
  %v1829 = vsel %vm1780, %v1173, %v1137
  %v1830 = vsel %vm1782, %v1209, %v1829
  %v1831 = vsel %vm1784, %v1245, %v1830
  %v1832 = vsel %vm1780, %v1179, %v1143
  %v1833 = vsel %vm1782, %v1215, %v1832
  %v1834 = vsel %vm1784, %v1251, %v1833
  %v1835 = vsel %vm1780, %v1185, %v1149
  %v1836 = vsel %vm1782, %v1221, %v1835
  %v1837 = vsel %vm1784, %v1257, %v1836
  %v1838 = vsel %vm1780, %v1191, %v1155
  %v1839 = vsel %vm1782, %v1227, %v1838
  %v1840 = vsel %vm1784, %v1263, %v1839
  %v1841 = vsel %vm1780, %v1197, %v1161
  %v1842 = vsel %vm1782, %v1233, %v1841
  %v1843 = vsel %vm1784, %v1269, %v1842
  %v1844 = vsel %vm1780, %v1203, %v1167
  %v1845 = vsel %vm1782, %v1239, %v1844
  %v1846 = vsel %vm1784, %v1275, %v1845
  %v1931 = vsel %vm1780, %v1317, %v1281
  %v1932 = vsel %vm1782, %v1353, %v1931
  %v1933 = vsel %vm1784, %v1389, %v1932
  %v1934 = vsel %vm1786, %v1425, %v1933
  %v1935 = vsel %vm1788, %v1461, %v1934
  %v1936 = vsel %vm1790, %v1497, %v1935
  %v1937 = vsel %vm1792, %v1533, %v1936
  %v1938 = vsel %vm1780, %v1323, %v1287
  %v1939 = vsel %vm1782, %v1359, %v1938
  %v1940 = vsel %vm1784, %v1395, %v1939
  %v1941 = vsel %vm1786, %v1431, %v1940
  %v1942 = vsel %vm1788, %v1467, %v1941
  %v1943 = vsel %vm1790, %v1503, %v1942
  %v1944 = vsel %vm1792, %v1539, %v1943
  %v1945 = vsel %vm1780, %v1329, %v1293
  %v1946 = vsel %vm1782, %v1365, %v1945
  %v1947 = vsel %vm1784, %v1401, %v1946
  %v1948 = vsel %vm1786, %v1437, %v1947
  %v1949 = vsel %vm1788, %v1473, %v1948
  %v1950 = vsel %vm1790, %v1509, %v1949
  %v1951 = vsel %vm1792, %v1545, %v1950
  %v1952 = vsel %vm1780, %v1335, %v1299
  %v1953 = vsel %vm1782, %v1371, %v1952
  %v1954 = vsel %vm1784, %v1407, %v1953
  %v1955 = vsel %vm1786, %v1443, %v1954
  %v1956 = vsel %vm1788, %v1479, %v1955
  %v1957 = vsel %vm1790, %v1515, %v1956
  %v1958 = vsel %vm1792, %v1551, %v1957
  %v1959 = vsel %vm1780, %v1341, %v1305
  %v1960 = vsel %vm1782, %v1377, %v1959
  %v1961 = vsel %vm1784, %v1413, %v1960
  %v1962 = vsel %vm1786, %v1449, %v1961
  %v1963 = vsel %vm1788, %v1485, %v1962
  %v1964 = vsel %vm1790, %v1521, %v1963
  %v1965 = vsel %vm1792, %v1557, %v1964
  %v1966 = vsel %vm1780, %v1347, %v1311
  %v1967 = vsel %vm1782, %v1383, %v1966
  %v1968 = vsel %vm1784, %v1419, %v1967
  %v1969 = vsel %vm1786, %v1455, %v1968
  %v1970 = vsel %vm1788, %v1491, %v1969
  %v1971 = vsel %vm1790, %v1527, %v1970
  %v1972 = vsel %vm1792, %v1563, %v1971
  %v1973 = vsel %vm1780, %v1605, %v1569
  %v1974 = vsel %vm1782, %v1641, %v1973
  %v1975 = vsel %vm1784, %v1677, %v1974
  %v1976 = vsel %vm1780, %v1611, %v1575
  %v1977 = vsel %vm1782, %v1647, %v1976
  %v1978 = vsel %vm1784, %v1683, %v1977
  %v1979 = vsel %vm1780, %v1617, %v1581
  %v1980 = vsel %vm1782, %v1653, %v1979
  %v1981 = vsel %vm1784, %v1689, %v1980
  %v1982 = vsel %vm1780, %v1623, %v1587
  %v1983 = vsel %vm1782, %v1659, %v1982
  %v1984 = vsel %vm1784, %v1695, %v1983
  %v1985 = vsel %vm1780, %v1629, %v1593
  %v1986 = vsel %vm1782, %v1665, %v1985
  %v1987 = vsel %vm1784, %v1701, %v1986
  %v1988 = vsel %vm1780, %v1635, %v1599
  %v1989 = vsel %vm1782, %v1671, %v1988
  %v1990 = vsel %vm1784, %v1707, %v1989
  %v2004 = vrot.slane %v29, 2
  %vm2005 = vcmask 97280
  %v2006 = vsel %vm2005, %v2004, 0
  %vm2008 = vcmask 1043456
  %v2009 = vsel %vm2008, %v1831, 0
  %v2011 = vsel %vm2008, %v1834, 0
  %v2013 = vsel %vm2008, %v1837, 0
  %v2015 = vsel %vm2008, %v1840, 0
  %v2017 = vsel %vm2008, %v1843, 0
  %v2019 = vsel %vm2008, %v1846, 0
  %v2021 = vsel %vm2008, %v1975, 0
  %v2023 = vsel %vm2008, %v1978, 0
  %v2025 = vsel %vm2008, %v1981, 0
  %v2027 = vsel %vm2008, %v1984, 0
  %v2029 = vsel %vm2008, %v1987, 0
  %v2031 = vsel %vm2008, %v1990, 0
  %2033 = vmatpush.msra.mxu0 0.0
  %2034 = vmatpush.msra.mxu0 0.0
  %2035 = vmatpush.msra.mxu0 0.0
  %2036 = vmatpush.msra.mxu0 0.0
  %2037 = vmatpush.msra.mxu0 0.0
  %2038 = vmatpush.msra.mxu0 0.0
  %2039 = vmatpush.msra.mxu0 0.0
  %2040 = vmatpush.msra.mxu0 0.0
  %2041 = vmatpush.msra.mxu0 0.0
  %2042 = vmatpush.msra.mxu0 0.0
  %2043 = vmatpush.msra.mxu0 0.0
  %2044 = vmatpush.msra.mxu0 0.0
  %2045 = vmatpush.msra.mxu0 0.0
  %2046 = vmatpush.msra.mxu0 0.0
  %2047 = vmatpush.msra.mxu0 %v2009
  %2048 = vmatpush.msra.mxu0 %v1793
  %2049 = vmatmul.f32.gmra.mxu0 %v2006
  %v2050 = vpop.f32.mrf.mxu0
  %v2051 = vadd.f32 0.0, %v2050
  %2052 = vdwg.mxu0
  %2053 = vmatpush.msra.mxu0 0.0
  %2054 = vmatpush.msra.mxu0 0.0
  %2055 = vmatpush.msra.mxu0 0.0
  %2056 = vmatpush.msra.mxu0 0.0
  %2057 = vmatpush.msra.mxu0 0.0
  %2058 = vmatpush.msra.mxu0 0.0
  %2059 = vmatpush.msra.mxu0 0.0
  %2060 = vmatpush.msra.mxu0 0.0
  %2061 = vmatpush.msra.mxu0 0.0
  %2062 = vmatpush.msra.mxu0 0.0
  %2063 = vmatpush.msra.mxu0 0.0
  %2064 = vmatpush.msra.mxu0 0.0
  %2065 = vmatpush.msra.mxu0 0.0
  %2066 = vmatpush.msra.mxu0 0.0
  %2067 = vmatpush.msra.mxu0 %v2011
  %2068 = vmatpush.msra.mxu0 %v1800
  %2069 = vmatmul.f32.gmra.mxu0 %v2006
  %v2070 = vpop.f32.mrf.mxu0
  %v2071 = vadd.f32 0.0, %v2070
  %2072 = vdwg.mxu0
  %2073 = vmatpush.msra.mxu0 0.0
  %2074 = vmatpush.msra.mxu0 0.0
  %2075 = vmatpush.msra.mxu0 0.0
  %2076 = vmatpush.msra.mxu0 0.0
  %2077 = vmatpush.msra.mxu0 0.0
  %2078 = vmatpush.msra.mxu0 0.0
  %2079 = vmatpush.msra.mxu0 0.0
  %2080 = vmatpush.msra.mxu0 0.0
  %2081 = vmatpush.msra.mxu0 0.0
  %2082 = vmatpush.msra.mxu0 0.0
  %2083 = vmatpush.msra.mxu0 0.0
  %2084 = vmatpush.msra.mxu0 0.0
  %2085 = vmatpush.msra.mxu0 0.0
  %2086 = vmatpush.msra.mxu0 0.0
  %2087 = vmatpush.msra.mxu0 %v2013
  %2088 = vmatpush.msra.mxu0 %v1807
  %2089 = vmatmul.f32.gmra.mxu0 %v2006
  %v2090 = vpop.f32.mrf.mxu0
  %v2091 = vadd.f32 0.0, %v2090
  %2092 = vdwg.mxu0
  %2093 = vmatpush.msra.mxu0 0.0
  %2094 = vmatpush.msra.mxu0 0.0
  %2095 = vmatpush.msra.mxu0 0.0
  %2096 = vmatpush.msra.mxu0 0.0
  %2097 = vmatpush.msra.mxu0 0.0
  %2098 = vmatpush.msra.mxu0 0.0
  %2099 = vmatpush.msra.mxu0 0.0
  %2100 = vmatpush.msra.mxu0 0.0
  %2101 = vmatpush.msra.mxu0 0.0
  %2102 = vmatpush.msra.mxu0 0.0
  %2103 = vmatpush.msra.mxu0 0.0
  %2104 = vmatpush.msra.mxu0 0.0
  %2105 = vmatpush.msra.mxu0 0.0
  %2106 = vmatpush.msra.mxu0 0.0
  %2107 = vmatpush.msra.mxu0 %v2015
  %2108 = vmatpush.msra.mxu0 %v1814
  %2109 = vmatmul.f32.gmra.mxu0 %v2006
  %v2110 = vpop.f32.mrf.mxu0
  %v2111 = vadd.f32 0.0, %v2110
  %2112 = vdwg.mxu0
  %2113 = vmatpush.msra.mxu0 0.0
  %2114 = vmatpush.msra.mxu0 0.0
  %2115 = vmatpush.msra.mxu0 0.0
  %2116 = vmatpush.msra.mxu0 0.0
  %2117 = vmatpush.msra.mxu0 0.0
  %2118 = vmatpush.msra.mxu0 0.0
  %2119 = vmatpush.msra.mxu0 0.0
  %2120 = vmatpush.msra.mxu0 0.0
  %2121 = vmatpush.msra.mxu0 0.0
  %2122 = vmatpush.msra.mxu0 0.0
  %2123 = vmatpush.msra.mxu0 0.0
  %2124 = vmatpush.msra.mxu0 0.0
  %2125 = vmatpush.msra.mxu0 0.0
  %2126 = vmatpush.msra.mxu0 0.0
  %2127 = vmatpush.msra.mxu0 %v2017
  %2128 = vmatpush.msra.mxu0 %v1821
  %2129 = vmatmul.f32.gmra.mxu0 %v2006
  %v2130 = vpop.f32.mrf.mxu0
  %v2131 = vadd.f32 0.0, %v2130
  %2132 = vdwg.mxu0
  %2133 = vmatpush.msra.mxu0 0.0
  %2134 = vmatpush.msra.mxu0 0.0
  %2135 = vmatpush.msra.mxu0 0.0
  %2136 = vmatpush.msra.mxu0 0.0
  %2137 = vmatpush.msra.mxu0 0.0
  %2138 = vmatpush.msra.mxu0 0.0
  %2139 = vmatpush.msra.mxu0 0.0
  %2140 = vmatpush.msra.mxu0 0.0
  %2141 = vmatpush.msra.mxu0 0.0
  %2142 = vmatpush.msra.mxu0 0.0
  %2143 = vmatpush.msra.mxu0 0.0
  %2144 = vmatpush.msra.mxu0 0.0
  %2145 = vmatpush.msra.mxu0 0.0
  %2146 = vmatpush.msra.mxu0 0.0
  %2147 = vmatpush.msra.mxu0 %v2019
  %2148 = vmatpush.msra.mxu0 %v1828
  %2149 = vmatmul.f32.gmra.mxu0 %v2006
  %v2150 = vpop.f32.mrf.mxu0
  %v2151 = vadd.f32 0.0, %v2150
  %2152 = vdwg.mxu0
  %2153 = vmatpush.msra.mxu0 0.0
  %2154 = vmatpush.msra.mxu0 0.0
  %2155 = vmatpush.msra.mxu0 0.0
  %2156 = vmatpush.msra.mxu0 0.0
  %2157 = vmatpush.msra.mxu0 0.0
  %2158 = vmatpush.msra.mxu0 0.0
  %2159 = vmatpush.msra.mxu0 0.0
  %2160 = vmatpush.msra.mxu0 0.0
  %2161 = vmatpush.msra.mxu0 0.0
  %2162 = vmatpush.msra.mxu0 0.0
  %2163 = vmatpush.msra.mxu0 0.0
  %2164 = vmatpush.msra.mxu0 0.0
  %2165 = vmatpush.msra.mxu0 0.0
  %2166 = vmatpush.msra.mxu0 0.0
  %2167 = vmatpush.msra.mxu0 %v2021
  %2168 = vmatpush.msra.mxu0 %v1937
  %2169 = vmatmul.f32.gmra.mxu0 %v2006
  %v2170 = vpop.f32.mrf.mxu0
  %v2171 = vadd.f32 0.0, %v2170
  %2172 = vdwg.mxu0
  %2173 = vmatpush.msra.mxu0 0.0
  %2174 = vmatpush.msra.mxu0 0.0
  %2175 = vmatpush.msra.mxu0 0.0
  %2176 = vmatpush.msra.mxu0 0.0
  %2177 = vmatpush.msra.mxu0 0.0
  %2178 = vmatpush.msra.mxu0 0.0
  %2179 = vmatpush.msra.mxu0 0.0
  %2180 = vmatpush.msra.mxu0 0.0
  %2181 = vmatpush.msra.mxu0 0.0
  %2182 = vmatpush.msra.mxu0 0.0
  %2183 = vmatpush.msra.mxu0 0.0
  %2184 = vmatpush.msra.mxu0 0.0
  %2185 = vmatpush.msra.mxu0 0.0
  %2186 = vmatpush.msra.mxu0 0.0
  %2187 = vmatpush.msra.mxu0 %v2023
  %2188 = vmatpush.msra.mxu0 %v1944
  %2189 = vmatmul.f32.gmra.mxu0 %v2006
  %v2190 = vpop.f32.mrf.mxu0
  %v2191 = vadd.f32 0.0, %v2190
  %2192 = vdwg.mxu0
  %2193 = vmatpush.msra.mxu0 0.0
  %2194 = vmatpush.msra.mxu0 0.0
  %2195 = vmatpush.msra.mxu0 0.0
  %2196 = vmatpush.msra.mxu0 0.0
  %2197 = vmatpush.msra.mxu0 0.0
  %2198 = vmatpush.msra.mxu0 0.0
  %2199 = vmatpush.msra.mxu0 0.0
  %2200 = vmatpush.msra.mxu0 0.0
  %2201 = vmatpush.msra.mxu0 0.0
  %2202 = vmatpush.msra.mxu0 0.0
  %2203 = vmatpush.msra.mxu0 0.0
  %2204 = vmatpush.msra.mxu0 0.0
  %2205 = vmatpush.msra.mxu0 0.0
  %2206 = vmatpush.msra.mxu0 0.0
  %2207 = vmatpush.msra.mxu0 %v2025
  %2208 = vmatpush.msra.mxu0 %v1951
  %2209 = vmatmul.f32.gmra.mxu0 %v2006
  %v2210 = vpop.f32.mrf.mxu0
  %v2211 = vadd.f32 0.0, %v2210
  %2212 = vdwg.mxu0
  %2213 = vmatpush.msra.mxu0 0.0
  %2214 = vmatpush.msra.mxu0 0.0
  %2215 = vmatpush.msra.mxu0 0.0
  %2216 = vmatpush.msra.mxu0 0.0
  %2217 = vmatpush.msra.mxu0 0.0
  %2218 = vmatpush.msra.mxu0 0.0
  %2219 = vmatpush.msra.mxu0 0.0
  %2220 = vmatpush.msra.mxu0 0.0
  %2221 = vmatpush.msra.mxu0 0.0
  %2222 = vmatpush.msra.mxu0 0.0
  %2223 = vmatpush.msra.mxu0 0.0
  %2224 = vmatpush.msra.mxu0 0.0
  %2225 = vmatpush.msra.mxu0 0.0
  %2226 = vmatpush.msra.mxu0 0.0
  %2227 = vmatpush.msra.mxu0 %v2027
  %2228 = vmatpush.msra.mxu0 %v1958
  %2229 = vmatmul.f32.gmra.mxu0 %v2006
  %v2230 = vpop.f32.mrf.mxu0
  %v2231 = vadd.f32 0.0, %v2230
  %2232 = vdwg.mxu0
  %2233 = vmatpush.msra.mxu0 0.0
  %2234 = vmatpush.msra.mxu0 0.0
  %2235 = vmatpush.msra.mxu0 0.0
  %2236 = vmatpush.msra.mxu0 0.0
  %2237 = vmatpush.msra.mxu0 0.0
  %2238 = vmatpush.msra.mxu0 0.0
  %2239 = vmatpush.msra.mxu0 0.0
  %2240 = vmatpush.msra.mxu0 0.0
  %2241 = vmatpush.msra.mxu0 0.0
  %2242 = vmatpush.msra.mxu0 0.0
  %2243 = vmatpush.msra.mxu0 0.0
  %2244 = vmatpush.msra.mxu0 0.0
  %2245 = vmatpush.msra.mxu0 0.0
  %2246 = vmatpush.msra.mxu0 0.0
  %2247 = vmatpush.msra.mxu0 %v2029
  %2248 = vmatpush.msra.mxu0 %v1965
  %2249 = vmatmul.f32.gmra.mxu0 %v2006
  %v2250 = vpop.f32.mrf.mxu0
  %v2251 = vadd.f32 0.0, %v2250
  %2252 = vdwg.mxu0
  %2253 = vmatpush.msra.mxu0 0.0
  %2254 = vmatpush.msra.mxu0 0.0
  %2255 = vmatpush.msra.mxu0 0.0
  %2256 = vmatpush.msra.mxu0 0.0
  %2257 = vmatpush.msra.mxu0 0.0
  %2258 = vmatpush.msra.mxu0 0.0
  %2259 = vmatpush.msra.mxu0 0.0
  %2260 = vmatpush.msra.mxu0 0.0
  %2261 = vmatpush.msra.mxu0 0.0
  %2262 = vmatpush.msra.mxu0 0.0
  %2263 = vmatpush.msra.mxu0 0.0
  %2264 = vmatpush.msra.mxu0 0.0
  %2265 = vmatpush.msra.mxu0 0.0
  %2266 = vmatpush.msra.mxu0 0.0
  %2267 = vmatpush.msra.mxu0 %v2031
  %2268 = vmatpush.msra.mxu0 %v1972
  %2269 = vmatmul.f32.gmra.mxu0 %v2006
  %v2270 = vpop.f32.mrf.mxu0
  %v2271 = vadd.f32 0.0, %v2270
  %2272 = vdwg.mxu0
  %v2273 = vtanh.pop %v2051
  %v2274 = vtanh.pop %v2071
  %v2275 = vtanh.pop %v2091
  %v2276 = vtanh.pop %v2111
  %v2277 = vtanh.pop %v2131
  %v2278 = vtanh.pop %v2151
  %v2279 = vtanh.pop %v2171
  %v2280 = vtanh.pop %v2191
  %v2281 = vtanh.pop %v2211
  %v2282 = vtanh.pop %v2231
  %v2283 = vtanh.pop %v2251
  %v2284 = vtanh.pop %v2271
  %vm2285 = vcmask 48128
  %v2286 = vsel %vm2285, %v29, 0
  %v2289 = vsel %vm264, %v2273, 0
  %v2292 = vsel %vm264, %v2274, 0
  %v2295 = vsel %vm264, %v2275, 0
  %v2298 = vsel %vm264, %v2276, 0
  %v2301 = vsel %vm264, %v2277, 0
  %v2304 = vsel %vm264, %v2278, 0
  %v2307 = vsel %vm264, %v2279, 0
  %v2310 = vsel %vm264, %v2280, 0
  %v2313 = vsel %vm264, %v2281, 0
  %v2316 = vsel %vm264, %v2282, 0
  %v2319 = vsel %vm264, %v2283, 0
  %v2322 = vsel %vm264, %v2284, 0
  %2324 = vmatpush.msra.mxu0 0.0
  %2325 = vmatpush.msra.mxu0 0.0
  %2326 = vmatpush.msra.mxu0 0.0
  %2327 = vmatpush.msra.mxu0 0.0
  %2328 = vmatpush.msra.mxu0 0.0
  %2329 = vmatpush.msra.mxu0 0.0
  %2330 = vmatpush.msra.mxu0 0.0
  %2331 = vmatpush.msra.mxu0 0.0
  %2332 = vmatpush.msra.mxu0 0.0
  %2333 = vmatpush.msra.mxu0 0.0
  %2334 = vmatpush.msra.mxu0 0.0
  %2335 = vmatpush.msra.mxu0 0.0
  %2336 = vmatpush.msra.mxu0 0.0
  %2337 = vmatpush.msra.mxu0 0.0
  %2338 = vmatpush.msra.mxu0 0.0
  %2339 = vmatpush.msra.mxu0 %v2289
  %2340 = vmatmul.f32.gmra.mxu0 %v2286
  %v2341 = vpop.f32.mrf.mxu0
  %v2342 = vadd.f32 0.0, %v2341
  %2343 = vdwg.mxu0
  %2344 = vmatpush.msra.mxu0 0.0
  %2345 = vmatpush.msra.mxu0 0.0
  %2346 = vmatpush.msra.mxu0 0.0
  %2347 = vmatpush.msra.mxu0 0.0
  %2348 = vmatpush.msra.mxu0 0.0
  %2349 = vmatpush.msra.mxu0 0.0
  %2350 = vmatpush.msra.mxu0 0.0
  %2351 = vmatpush.msra.mxu0 0.0
  %2352 = vmatpush.msra.mxu0 0.0
  %2353 = vmatpush.msra.mxu0 0.0
  %2354 = vmatpush.msra.mxu0 0.0
  %2355 = vmatpush.msra.mxu0 0.0
  %2356 = vmatpush.msra.mxu0 0.0
  %2357 = vmatpush.msra.mxu0 0.0
  %2358 = vmatpush.msra.mxu0 0.0
  %2359 = vmatpush.msra.mxu0 %v2292
  %2360 = vmatmul.f32.gmra.mxu0 %v2286
  %v2361 = vpop.f32.mrf.mxu0
  %v2362 = vadd.f32 0.0, %v2361
  %2363 = vdwg.mxu0
  %2364 = vmatpush.msra.mxu0 0.0
  %2365 = vmatpush.msra.mxu0 0.0
  %2366 = vmatpush.msra.mxu0 0.0
  %2367 = vmatpush.msra.mxu0 0.0
  %2368 = vmatpush.msra.mxu0 0.0
  %2369 = vmatpush.msra.mxu0 0.0
  %2370 = vmatpush.msra.mxu0 0.0
  %2371 = vmatpush.msra.mxu0 0.0
  %2372 = vmatpush.msra.mxu0 0.0
  %2373 = vmatpush.msra.mxu0 0.0
  %2374 = vmatpush.msra.mxu0 0.0
  %2375 = vmatpush.msra.mxu0 0.0
  %2376 = vmatpush.msra.mxu0 0.0
  %2377 = vmatpush.msra.mxu0 0.0
  %2378 = vmatpush.msra.mxu0 0.0
  %2379 = vmatpush.msra.mxu0 %v2295
  %2380 = vmatmul.f32.gmra.mxu0 %v2286
  %v2381 = vpop.f32.mrf.mxu0
  %v2382 = vadd.f32 0.0, %v2381
  %2383 = vdwg.mxu0
  %2384 = vmatpush.msra.mxu0 0.0
  %2385 = vmatpush.msra.mxu0 0.0
  %2386 = vmatpush.msra.mxu0 0.0
  %2387 = vmatpush.msra.mxu0 0.0
  %2388 = vmatpush.msra.mxu0 0.0
  %2389 = vmatpush.msra.mxu0 0.0
  %2390 = vmatpush.msra.mxu0 0.0
  %2391 = vmatpush.msra.mxu0 0.0
  %2392 = vmatpush.msra.mxu0 0.0
  %2393 = vmatpush.msra.mxu0 0.0
  %2394 = vmatpush.msra.mxu0 0.0
  %2395 = vmatpush.msra.mxu0 0.0
  %2396 = vmatpush.msra.mxu0 0.0
  %2397 = vmatpush.msra.mxu0 0.0
  %2398 = vmatpush.msra.mxu0 0.0
  %2399 = vmatpush.msra.mxu0 %v2298
  %2400 = vmatmul.f32.gmra.mxu0 %v2286
  %v2401 = vpop.f32.mrf.mxu0
  %v2402 = vadd.f32 0.0, %v2401
  %2403 = vdwg.mxu0
  %2404 = vmatpush.msra.mxu0 0.0
  %2405 = vmatpush.msra.mxu0 0.0
  %2406 = vmatpush.msra.mxu0 0.0
  %2407 = vmatpush.msra.mxu0 0.0
  %2408 = vmatpush.msra.mxu0 0.0
  %2409 = vmatpush.msra.mxu0 0.0
  %2410 = vmatpush.msra.mxu0 0.0
  %2411 = vmatpush.msra.mxu0 0.0
  %2412 = vmatpush.msra.mxu0 0.0
  %2413 = vmatpush.msra.mxu0 0.0
  %2414 = vmatpush.msra.mxu0 0.0
  %2415 = vmatpush.msra.mxu0 0.0
  %2416 = vmatpush.msra.mxu0 0.0
  %2417 = vmatpush.msra.mxu0 0.0
  %2418 = vmatpush.msra.mxu0 0.0
  %2419 = vmatpush.msra.mxu0 %v2301
  %2420 = vmatmul.f32.gmra.mxu0 %v2286
  %v2421 = vpop.f32.mrf.mxu0
  %v2422 = vadd.f32 0.0, %v2421
  %2423 = vdwg.mxu0
  %2424 = vmatpush.msra.mxu0 0.0
  %2425 = vmatpush.msra.mxu0 0.0
  %2426 = vmatpush.msra.mxu0 0.0
  %2427 = vmatpush.msra.mxu0 0.0
  %2428 = vmatpush.msra.mxu0 0.0
  %2429 = vmatpush.msra.mxu0 0.0
  %2430 = vmatpush.msra.mxu0 0.0
  %2431 = vmatpush.msra.mxu0 0.0
  %2432 = vmatpush.msra.mxu0 0.0
  %2433 = vmatpush.msra.mxu0 0.0
  %2434 = vmatpush.msra.mxu0 0.0
  %2435 = vmatpush.msra.mxu0 0.0
  %2436 = vmatpush.msra.mxu0 0.0
  %2437 = vmatpush.msra.mxu0 0.0
  %2438 = vmatpush.msra.mxu0 0.0
  %2439 = vmatpush.msra.mxu0 %v2304
  %2440 = vmatmul.f32.gmra.mxu0 %v2286
  %v2441 = vpop.f32.mrf.mxu0
  %v2442 = vadd.f32 0.0, %v2441
  %2443 = vdwg.mxu0
  %2444 = vmatpush.msra.mxu0 0.0
  %2445 = vmatpush.msra.mxu0 0.0
  %2446 = vmatpush.msra.mxu0 0.0
  %2447 = vmatpush.msra.mxu0 0.0
  %2448 = vmatpush.msra.mxu0 0.0
  %2449 = vmatpush.msra.mxu0 0.0
  %2450 = vmatpush.msra.mxu0 0.0
  %2451 = vmatpush.msra.mxu0 0.0
  %2452 = vmatpush.msra.mxu0 0.0
  %2453 = vmatpush.msra.mxu0 0.0
  %2454 = vmatpush.msra.mxu0 0.0
  %2455 = vmatpush.msra.mxu0 0.0
  %2456 = vmatpush.msra.mxu0 0.0
  %2457 = vmatpush.msra.mxu0 0.0
  %2458 = vmatpush.msra.mxu0 0.0
  %2459 = vmatpush.msra.mxu0 %v2307
  %2460 = vmatmul.f32.gmra.mxu0 %v2286
  %v2461 = vpop.f32.mrf.mxu0
  %v2462 = vadd.f32 0.0, %v2461
  %2463 = vdwg.mxu0
  %2464 = vmatpush.msra.mxu0 0.0
  %2465 = vmatpush.msra.mxu0 0.0
  %2466 = vmatpush.msra.mxu0 0.0
  %2467 = vmatpush.msra.mxu0 0.0
  %2468 = vmatpush.msra.mxu0 0.0
  %2469 = vmatpush.msra.mxu0 0.0
  %2470 = vmatpush.msra.mxu0 0.0
  %2471 = vmatpush.msra.mxu0 0.0
  %2472 = vmatpush.msra.mxu0 0.0
  %2473 = vmatpush.msra.mxu0 0.0
  %2474 = vmatpush.msra.mxu0 0.0
  %2475 = vmatpush.msra.mxu0 0.0
  %2476 = vmatpush.msra.mxu0 0.0
  %2477 = vmatpush.msra.mxu0 0.0
  %2478 = vmatpush.msra.mxu0 0.0
  %2479 = vmatpush.msra.mxu0 %v2310
  %2480 = vmatmul.f32.gmra.mxu0 %v2286
  %v2481 = vpop.f32.mrf.mxu0
  %v2482 = vadd.f32 0.0, %v2481
  %2483 = vdwg.mxu0
  %2484 = vmatpush.msra.mxu0 0.0
  %2485 = vmatpush.msra.mxu0 0.0
  %2486 = vmatpush.msra.mxu0 0.0
  %2487 = vmatpush.msra.mxu0 0.0
  %2488 = vmatpush.msra.mxu0 0.0
  %2489 = vmatpush.msra.mxu0 0.0
  %2490 = vmatpush.msra.mxu0 0.0
  %2491 = vmatpush.msra.mxu0 0.0
  %2492 = vmatpush.msra.mxu0 0.0
  %2493 = vmatpush.msra.mxu0 0.0
  %2494 = vmatpush.msra.mxu0 0.0
  %2495 = vmatpush.msra.mxu0 0.0
  %2496 = vmatpush.msra.mxu0 0.0
  %2497 = vmatpush.msra.mxu0 0.0
  %2498 = vmatpush.msra.mxu0 0.0
  %2499 = vmatpush.msra.mxu0 %v2313
  %2500 = vmatmul.f32.gmra.mxu0 %v2286
  %v2501 = vpop.f32.mrf.mxu0
  %v2502 = vadd.f32 0.0, %v2501
  %2503 = vdwg.mxu0
  %2504 = vmatpush.msra.mxu0 0.0
  %2505 = vmatpush.msra.mxu0 0.0
  %2506 = vmatpush.msra.mxu0 0.0
  %2507 = vmatpush.msra.mxu0 0.0
  %2508 = vmatpush.msra.mxu0 0.0
  %2509 = vmatpush.msra.mxu0 0.0
  %2510 = vmatpush.msra.mxu0 0.0
  %2511 = vmatpush.msra.mxu0 0.0
  %2512 = vmatpush.msra.mxu0 0.0
  %2513 = vmatpush.msra.mxu0 0.0
  %2514 = vmatpush.msra.mxu0 0.0
  %2515 = vmatpush.msra.mxu0 0.0
  %2516 = vmatpush.msra.mxu0 0.0
  %2517 = vmatpush.msra.mxu0 0.0
  %2518 = vmatpush.msra.mxu0 0.0
  %2519 = vmatpush.msra.mxu0 %v2316
  %2520 = vmatmul.f32.gmra.mxu0 %v2286
  %v2521 = vpop.f32.mrf.mxu0
  %v2522 = vadd.f32 0.0, %v2521
  %2523 = vdwg.mxu0
  %2524 = vmatpush.msra.mxu0 0.0
  %2525 = vmatpush.msra.mxu0 0.0
  %2526 = vmatpush.msra.mxu0 0.0
  %2527 = vmatpush.msra.mxu0 0.0
  %2528 = vmatpush.msra.mxu0 0.0
  %2529 = vmatpush.msra.mxu0 0.0
  %2530 = vmatpush.msra.mxu0 0.0
  %2531 = vmatpush.msra.mxu0 0.0
  %2532 = vmatpush.msra.mxu0 0.0
  %2533 = vmatpush.msra.mxu0 0.0
  %2534 = vmatpush.msra.mxu0 0.0
  %2535 = vmatpush.msra.mxu0 0.0
  %2536 = vmatpush.msra.mxu0 0.0
  %2537 = vmatpush.msra.mxu0 0.0
  %2538 = vmatpush.msra.mxu0 0.0
  %2539 = vmatpush.msra.mxu0 %v2319
  %2540 = vmatmul.f32.gmra.mxu0 %v2286
  %v2541 = vpop.f32.mrf.mxu0
  %v2542 = vadd.f32 0.0, %v2541
  %2543 = vdwg.mxu0
  %2544 = vmatpush.msra.mxu0 0.0
  %2545 = vmatpush.msra.mxu0 0.0
  %2546 = vmatpush.msra.mxu0 0.0
  %2547 = vmatpush.msra.mxu0 0.0
  %2548 = vmatpush.msra.mxu0 0.0
  %2549 = vmatpush.msra.mxu0 0.0
  %2550 = vmatpush.msra.mxu0 0.0
  %2551 = vmatpush.msra.mxu0 0.0
  %2552 = vmatpush.msra.mxu0 0.0
  %2553 = vmatpush.msra.mxu0 0.0
  %2554 = vmatpush.msra.mxu0 0.0
  %2555 = vmatpush.msra.mxu0 0.0
  %2556 = vmatpush.msra.mxu0 0.0
  %2557 = vmatpush.msra.mxu0 0.0
  %2558 = vmatpush.msra.mxu0 0.0
  %2559 = vmatpush.msra.mxu0 %v2322
  %2560 = vmatmul.f32.gmra.mxu0 %v2286
  %v2561 = vpop.f32.mrf.mxu0
  %v2562 = vadd.f32 0.0, %v2561
  %2563 = vdwg.mxu0
  %v2564 = vlaneseq
  %v2565 = vshrl.u32 %v2564, 7
  %v2566 = vadd.s32 %v2565, 8
  %v2567 = vlaneseq
  %v2568 = vand.u32 %v2567, 127
  %vm2569 = vcmp.eq.s32.totalorder %v2565, %v2568
  %vm2570 = vcmp.eq.s32.totalorder %v2566, %v2568
  %v2571 = vsel %vm2569, 1, 0
  %v2572 = vsel %vm2570, 1, 0
  %v2573 = vcvt.s32.f32 %v2571
  %v2574 = vcvt.s32.f32 %v2572
  %vm2575 = vcmask 1040384
  %v2576 = vsel %vm2575, %v2402, -inf
  %v2577 = vsel %vm2575, %v2422, -inf
  %vm2578 = vcmask 516096
  %v2579 = vsel %vm2578, %v2442, -inf
  %v2580 = vmax.f32 %v2576, %v2577
  %v2581 = vmax.f32 %v2580, %v2579
  %2582 = vmax.xlane.f32.xlu0 %v2581
  %v2583 = vpop.xlane.xlu0 %2582
  %v2584 = vsub.f32 %v2402, %v2583
  %v2585 = vsub.f32 %v2422, %v2583
  %v2586 = vsub.f32 %v2442, %v2583
  %v2587 = vmul.f32 %v2584, 1.442695
  %v2588 = vpow.pop %v2587
  %v2589 = vmul.f32 %v2585, 1.442695
  %v2590 = vpow.pop %v2589
  %v2591 = vmul.f32 %v2586, 1.442695
  %v2592 = vpow.pop %v2591
  %v2593 = vsel %vm2575, %v2588, 0.0
  %v2594 = vsel %vm2575, %v2590, 0.0
  %v2595 = vadd.f32 %v2593, %v2594
  %v2596 = vsel %vm2578, %v2592, 0.0
  %v2597 = vadd.f32 %v2595, %v2596
  %2598 = vadd.xlane.f32.xlu0 %v2597
  %v2599 = vpop.xlane.xlu0 %2598
  %v2600 = vrcp.pop %v2599
  %v2601 = vmul.f32 %v2588, %v2600
  %v2602 = vmul.f32 %v2590, %v2600
  %v2603 = vmul.f32 %v2592, %v2600
  %v2604 = vperm.slane %v2601, 0
  %v2605 = vperm.slane %v2602, 0
  %v2606 = vperm.slane %v2603, 0
  %v2607 = vmul.f32 %v1814, %v2604
  %v2608 = vmul.f32 %v1821, %v2605
  %v2609 = vmul.f32 %v1828, %v2606
  %v2610 = vmul.f32 %v1840, %v2604
  %v2611 = vmul.f32 %v1843, %v2605
  %v2612 = vmul.f32 %v1846, %v2606
  %v2613 = vadd.f32 %v2607, %v2608
  %vm2614 = vcmask 523264
  %v2615 = vsel %vm2614, %v2609, 0.0
  %v2616 = vadd.f32 %v2613, %v2615
  %2617 = vadd.xlane.f32.xlu0 %v2616
  %v2618 = vpop.xlane.xlu0 %2617
  %v2619 = vsel %vm2008, %v2610, 0.0
  %v2620 = vsel %vm2008, %v2611, 0.0
  %v2621 = vadd.f32 %v2619, %v2620
  %vm2622 = vcmask 519168
  %v2623 = vsel %vm2622, %v2612, 0.0
  %v2624 = vadd.f32 %v2621, %v2623
  %2625 = vadd.xlane.f32.xlu0 %v2624
  %v2626 = vpop.xlane.xlu0 %2625
  %v2627 = vmul.f32 %v2618, %v2573
  %v2628 = vmul.f32 %v2626, %v2574
  %v2629 = vsel %vm2005, %v2627, 0.0
  %vm2630 = vcmask 93184
  %v2631 = vsel %vm2630, %v2628, 0.0
  %v2632 = vadd.f32 %v2629, %v2631
  %v2633 = vrot.slane %v2632, 4
  %v2634 = vadd.f32 %v2632, %v2633
  %v2635 = vrot.slane %v2634, 2
  %v2636 = vadd.f32 %v2634, %v2635
  %v2637 = vrot.slane %v2636, 1
  %v2638 = vadd.f32 %v2636, %v2637
  %v2639 = vsel %vm2575, %v2342, -inf
  %v2640 = vsel %vm2575, %v2362, -inf
  %v2641 = vsel %vm2578, %v2382, -inf
  %v2642 = vmax.f32 %v2639, %v2640
  %v2643 = vmax.f32 %v2642, %v2641
  %2644 = vmax.xlane.f32.xlu0 %v2643
  %v2645 = vpop.xlane.xlu0 %2644
  %v2646 = vsub.f32 %v2342, %v2645
  %v2647 = vsub.f32 %v2362, %v2645
  %v2648 = vsub.f32 %v2382, %v2645
  %v2649 = vmul.f32 %v2646, 1.442695
  %v2650 = vpow.pop %v2649
  %v2651 = vmul.f32 %v2647, 1.442695
  %v2652 = vpow.pop %v2651
  %v2653 = vmul.f32 %v2648, 1.442695
  %v2654 = vpow.pop %v2653
  %v2655 = vsel %vm2575, %v2650, 0.0
  %v2656 = vsel %vm2575, %v2652, 0.0
  %v2657 = vadd.f32 %v2655, %v2656
  %v2658 = vsel %vm2578, %v2654, 0.0
  %v2659 = vadd.f32 %v2657, %v2658
  %2660 = vadd.xlane.f32.xlu0 %v2659
  %v2661 = vpop.xlane.xlu0 %2660
  %v2662 = vrcp.pop %v2661
  %v2663 = vmul.f32 %v2650, %v2662
  %v2664 = vmul.f32 %v2652, %v2662
  %v2665 = vmul.f32 %v2654, %v2662
  %v2666 = vperm.slane %v2663, 0
  %v2667 = vperm.slane %v2664, 0
  %v2668 = vperm.slane %v2665, 0
  %v2669 = vmul.f32 %v1793, %v2666
  %v2670 = vmul.f32 %v1800, %v2667
  %v2671 = vmul.f32 %v1807, %v2668
  %v2672 = vmul.f32 %v1831, %v2666
  %v2673 = vmul.f32 %v1834, %v2667
  %v2674 = vmul.f32 %v1837, %v2668
  %v2675 = vadd.f32 %v2669, %v2670
  %v2676 = vsel %vm2614, %v2671, 0.0
  %v2677 = vadd.f32 %v2675, %v2676
  %2678 = vadd.xlane.f32.xlu0 %v2677
  %v2679 = vpop.xlane.xlu0 %2678
  %v2680 = vsel %vm2008, %v2672, 0.0
  %v2681 = vsel %vm2008, %v2673, 0.0
  %v2682 = vadd.f32 %v2680, %v2681
  %v2683 = vsel %vm2622, %v2674, 0.0
  %v2684 = vadd.f32 %v2682, %v2683
  %2685 = vadd.xlane.f32.xlu0 %v2684
  %v2686 = vpop.xlane.xlu0 %2685
  %v2687 = vmul.f32 %v2679, %v2573
  %v2688 = vmul.f32 %v2686, %v2574
  %v2689 = vsel %vm2005, %v2687, 0.0
  %v2690 = vsel %vm2630, %v2688, 0.0
  %v2691 = vadd.f32 %v2689, %v2690
  %v2692 = vrot.slane %v2691, 4
  %v2693 = vadd.f32 %v2691, %v2692
  %v2694 = vrot.slane %v2693, 2
  %v2695 = vadd.f32 %v2693, %v2694
  %v2696 = vrot.slane %v2695, 1
  %v2697 = vadd.f32 %v2695, %v2696
  %2699 = vrot.lane.b32.xlu0 %v2697, 12
  %v2700 = vpop.permute.xlu0 %2699
  %v2702 = vsel %vm2005, %v2638, %v2700
  %v2703 = vsel %vm2575, %v2522, -inf
  %v2704 = vsel %vm2575, %v2542, -inf
  %v2705 = vsel %vm2578, %v2562, -inf
  %v2706 = vmax.f32 %v2703, %v2704
  %v2707 = vmax.f32 %v2706, %v2705
  %2708 = vmax.xlane.f32.xlu0 %v2707
  %v2709 = vpop.xlane.xlu0 %2708
  %v2710 = vsub.f32 %v2522, %v2709
  %v2711 = vsub.f32 %v2542, %v2709
  %v2712 = vsub.f32 %v2562, %v2709
  %v2713 = vmul.f32 %v2710, 1.442695
  %v2714 = vpow.pop %v2713
  %v2715 = vmul.f32 %v2711, 1.442695
  %v2716 = vpow.pop %v2715
  %v2717 = vmul.f32 %v2712, 1.442695
  %v2718 = vpow.pop %v2717
  %v2719 = vsel %vm2575, %v2714, 0.0
  %v2720 = vsel %vm2575, %v2716, 0.0
  %v2721 = vadd.f32 %v2719, %v2720
  %v2722 = vsel %vm2578, %v2718, 0.0
  %v2723 = vadd.f32 %v2721, %v2722
  %2724 = vadd.xlane.f32.xlu0 %v2723
  %v2725 = vpop.xlane.xlu0 %2724
  %v2726 = vrcp.pop %v2725
  %v2727 = vmul.f32 %v2714, %v2726
  %v2728 = vmul.f32 %v2716, %v2726
  %v2729 = vmul.f32 %v2718, %v2726
  %v2730 = vperm.slane %v2727, 0
  %v2731 = vperm.slane %v2728, 0
  %v2732 = vperm.slane %v2729, 0
  %v2733 = vmul.f32 %v1958, %v2730
  %v2734 = vmul.f32 %v1965, %v2731
  %v2735 = vmul.f32 %v1972, %v2732
  %v2736 = vmul.f32 %v1984, %v2730
  %v2737 = vmul.f32 %v1987, %v2731
  %v2738 = vmul.f32 %v1990, %v2732
  %v2739 = vadd.f32 %v2733, %v2734
  %v2740 = vsel %vm2614, %v2735, 0.0
  %v2741 = vadd.f32 %v2739, %v2740
  %2742 = vadd.xlane.f32.xlu0 %v2741
  %v2743 = vpop.xlane.xlu0 %2742
  %v2744 = vsel %vm2008, %v2736, 0.0
  %v2745 = vsel %vm2008, %v2737, 0.0
  %v2746 = vadd.f32 %v2744, %v2745
  %v2747 = vsel %vm2622, %v2738, 0.0
  %v2748 = vadd.f32 %v2746, %v2747
  %2749 = vadd.xlane.f32.xlu0 %v2748
  %v2750 = vpop.xlane.xlu0 %2749
  %v2751 = vmul.f32 %v2743, %v2573
  %v2752 = vmul.f32 %v2750, %v2574
  %v2753 = vsel %vm2005, %v2751, 0.0
  %v2754 = vsel %vm2630, %v2752, 0.0
  %v2755 = vadd.f32 %v2753, %v2754
  %v2756 = vrot.slane %v2755, 4
  %v2757 = vadd.f32 %v2755, %v2756
  %v2758 = vrot.slane %v2757, 2
  %v2759 = vadd.f32 %v2757, %v2758
  %v2760 = vrot.slane %v2759, 1
  %v2761 = vadd.f32 %v2759, %v2760
  %v2762 = vsel %vm2575, %v2462, -inf
  %v2763 = vsel %vm2575, %v2482, -inf
  %v2764 = vsel %vm2578, %v2502, -inf
  %v2765 = vmax.f32 %v2762, %v2763
  %v2766 = vmax.f32 %v2765, %v2764
  %2767 = vmax.xlane.f32.xlu0 %v2766
  %v2768 = vpop.xlane.xlu0 %2767
  %v2769 = vsub.f32 %v2462, %v2768
  %v2770 = vsub.f32 %v2482, %v2768
  %v2771 = vsub.f32 %v2502, %v2768
  %v2772 = vmul.f32 %v2769, 1.442695
  %v2773 = vpow.pop %v2772
  %v2774 = vmul.f32 %v2770, 1.442695
  %v2775 = vpow.pop %v2774
  %v2776 = vmul.f32 %v2771, 1.442695
  %v2777 = vpow.pop %v2776
  %v2778 = vsel %vm2575, %v2773, 0.0
  %v2779 = vsel %vm2575, %v2775, 0.0
  %v2780 = vadd.f32 %v2778, %v2779
  %v2781 = vsel %vm2578, %v2777, 0.0
  %v2782 = vadd.f32 %v2780, %v2781
  %2783 = vadd.xlane.f32.xlu0 %v2782
  %v2784 = vpop.xlane.xlu0 %2783
  %v2785 = vrcp.pop %v2784
  %v2786 = vmul.f32 %v2773, %v2785
  %v2787 = vmul.f32 %v2775, %v2785
  %v2788 = vmul.f32 %v2777, %v2785
  %v2789 = vperm.slane %v2786, 0
  %v2790 = vperm.slane %v2787, 0
  %v2791 = vperm.slane %v2788, 0
  %v2792 = vmul.f32 %v1937, %v2789
  %v2793 = vmul.f32 %v1944, %v2790
  %v2794 = vmul.f32 %v1951, %v2791
  %v2795 = vmul.f32 %v1975, %v2789
  %v2796 = vmul.f32 %v1978, %v2790
  %v2797 = vmul.f32 %v1981, %v2791
  %v2798 = vadd.f32 %v2792, %v2793
  %v2799 = vsel %vm2614, %v2794, 0.0
  %v2800 = vadd.f32 %v2798, %v2799
  %2801 = vadd.xlane.f32.xlu0 %v2800
  %v2802 = vpop.xlane.xlu0 %2801
  %v2803 = vsel %vm2008, %v2795, 0.0
  %v2804 = vsel %vm2008, %v2796, 0.0
  %v2805 = vadd.f32 %v2803, %v2804
  %v2806 = vsel %vm2622, %v2797, 0.0
  %v2807 = vadd.f32 %v2805, %v2806
  %2808 = vadd.xlane.f32.xlu0 %v2807
  %v2809 = vpop.xlane.xlu0 %2808
  %v2810 = vmul.f32 %v2802, %v2573
  %v2811 = vmul.f32 %v2809, %v2574
  %v2812 = vsel %vm2005, %v2810, 0.0
  %v2813 = vsel %vm2630, %v2811, 0.0
  %v2814 = vadd.f32 %v2812, %v2813
  %v2815 = vrot.slane %v2814, 4
  %v2816 = vadd.f32 %v2814, %v2815
  %v2817 = vrot.slane %v2816, 2
  %v2818 = vadd.f32 %v2816, %v2817
  %v2819 = vrot.slane %v2818, 1
  %v2820 = vadd.f32 %v2818, %v2819
  %2822 = vrot.lane.b32.xlu0 %v2820, 12
  %v2823 = vpop.permute.xlu0 %2822
  %v2825 = vsel %vm2005, %v2761, %v2823
  %v2827 = vrot.slane %v2825, 7
  %v2829 = vsel %vm2575, %v2702, %v2827
  %v2830 = vpack.c.bf16 %v2829, %v2829
  %v2831 = vld [vmem:[%s2] sm:$0xff]
  %v2832 = vld [vmem:[%s2 + $0x10] sm:$0xff]
  %v2833 = vld [vmem:[%s2 + $0x18] sm:$0xff]
  %v2834 = vld [vmem:[%s2 + $0x20] sm:$0xff]
  %v2835 = vld [vmem:[%s2 + $0x30] sm:$0xff]
  %v2836 = vld [vmem:[%s2 + $0x38] sm:$0xff]
  %v2837 = vld [vmem:[%s2 + $0x40] sm:$0xff]
  %v2838 = vld [vmem:[%s2 + $0x50] sm:$0xff]
  %v2839 = vld [vmem:[%s2 + $0x58] sm:$0xff]
  %v2840 = vld [vmem:[%s2 + $0x60] sm:$0xff]
  %v2841 = vld [vmem:[%s2 + $0x70] sm:$0xff]
  %v2842 = vld [vmem:[%s2 + $0x78] sm:$0xff]
  %v2843 = vld [vmem:[%s2 + $0x80] sm:$0xff]
  %v2844 = vld [vmem:[%s2 + $0x90] sm:$0xff]
  %v2845 = vld [vmem:[%s2 + $0x98] sm:$0xff]
  %v2846 = vld [vmem:[%s2 + $0xa0] sm:$0xff]
  %v2847 = vld [vmem:[%s2 + $0xb0] sm:$0xff]
  %v2848 = vld [vmem:[%s2 + $0xb8] sm:$0xff]
  %v2849 = vperm.slane %v21, 1
  %v2850 = vperm.slane %v22, 1
  %v2851 = vperm.slane %v25, 1
  %v2852 = vperm.slane %v26, 1
  %v2853 = vperm.slane %v27, 1
  %v2854 = vperm.slane %v28, 1
  %v2855 = vperm.slane %v29, 1
  %v2856 = vperm.slane %v30, 1
  %v2857 = vperm.slane %v31, 1
  %v2858 = vperm.slane %v32, 1
  %v2859 = vperm.slane %v33, 1
  %v2860 = vperm.slane %v34, 1
  %v2879 = vunpack.c.l.b16 %v2831
  %v2880 = vunpack.c.h.b16 %v2831
  %v2881 = vunpack.c.l.b16 %v2832
  %v2882 = vunpack.c.h.b16 %v2832
  %v2883 = vunpack.c.l.b16 %v2833
  %v2884 = vunpack.c.h.b16 %v2833
  %v2885 = vunpack.c.l.b16 %v2834
  %v2886 = vunpack.c.h.b16 %v2834
  %v2887 = vunpack.c.l.b16 %v2835
  %v2888 = vunpack.c.h.b16 %v2835
  %v2889 = vunpack.c.l.b16 %v2836
  %v2890 = vunpack.c.h.b16 %v2836
  %v2891 = vunpack.c.l.b16 %v2837
  %v2892 = vunpack.c.h.b16 %v2837
  %v2893 = vunpack.c.l.b16 %v2838
  %v2894 = vunpack.c.h.b16 %v2838
  %v2895 = vunpack.c.l.b16 %v2839
  %v2896 = vunpack.c.h.b16 %v2839
  %v2897 = vunpack.c.l.b16 %v2840
  %v2898 = vunpack.c.h.b16 %v2840
  %v2899 = vunpack.c.l.b16 %v2841
  %v2900 = vunpack.c.h.b16 %v2841
  %v2901 = vunpack.c.l.b16 %v2842
  %v2902 = vunpack.c.h.b16 %v2842
  %v2903 = vunpack.c.l.b16 %v2843
  %v2904 = vunpack.c.h.b16 %v2843
  %v2905 = vunpack.c.l.b16 %v2844
  %v2906 = vunpack.c.h.b16 %v2844
  %v2907 = vunpack.c.l.b16 %v2845
  %v2908 = vunpack.c.h.b16 %v2845
  %v2909 = vunpack.c.l.b16 %v2846
  %v2910 = vunpack.c.h.b16 %v2846
  %v2911 = vunpack.c.l.b16 %v2847
  %v2912 = vunpack.c.h.b16 %v2847
  %v2913 = vunpack.c.l.b16 %v2848
  %v2914 = vunpack.c.h.b16 %v2848
  %v2915 = vpack.c.b16 %v2891, %v2879
  %v2916 = vpack.c.b16 %v2892, %v2880
  %v2917 = vpack.c.b16 %v2893, %v2881
  %v2918 = vpack.c.b16 %v2894, %v2882
  %v2919 = vpack.c.b16 %v2895, %v2883
  %v2920 = vpack.c.b16 %v2896, %v2884
  %v2921 = vpack.c.b16 %v2897, %v2885
  %v2922 = vpack.c.b16 %v2898, %v2886
  %v2923 = vpack.c.b16 %v2899, %v2887
  %v2924 = vpack.c.b16 %v2900, %v2888
  %v2925 = vpack.c.b16 %v2901, %v2889
  %v2926 = vpack.c.b16 %v2902, %v2890
  %v2927 = vpack.c.b16 %v2903, %v2903
  %v2928 = vpack.c.b16 %v2904, %v2904
  %v2929 = vpack.c.b16 %v2905, %v2905
  %v2930 = vpack.c.b16 %v2906, %v2906
  %v2931 = vpack.c.b16 %v2907, %v2907
  %v2932 = vpack.c.b16 %v2908, %v2908
  %v2933 = vpack.c.b16 %v2909, %v2909
  %v2934 = vpack.c.b16 %v2910, %v2910
  %v2935 = vpack.c.b16 %v2911, %v2911
  %v2936 = vpack.c.b16 %v2912, %v2912
  %v2937 = vpack.c.b16 %v2913, %v2913
  %v2938 = vpack.c.b16 %v2914, %v2914
  %vm2951 = vcmask 195584
  %v2953 = vsel %vm2951, %v2830, 0
  %v2956 = vsel %vm2008, %v2927, 0
  %v2959 = vsel %vm2008, %v2928, 0
  %v2962 = vsel %vm2008, %v2929, 0
  %v2965 = vsel %vm2008, %v2930, 0
  %v2968 = vsel %vm2008, %v2931, 0
  %v2971 = vsel %vm2008, %v2932, 0
  %v2974 = vsel %vm2008, %v2933, 0
  %v2977 = vsel %vm2008, %v2934, 0
  %v2980 = vsel %vm2008, %v2935, 0
  %v2983 = vsel %vm2008, %v2936, 0
  %v2986 = vsel %vm2008, %v2937, 0
  %v2989 = vsel %vm2008, %v2938, 0
  %2991 = vmatpush.bf16.msra.mxu0 0
  %2992 = vmatpush.bf16.msra.mxu0 0
  %2993 = vmatpush.bf16.msra.mxu0 0
  %2994 = vmatpush.bf16.msra.mxu0 0
  %2995 = vmatpush.bf16.msra.mxu0 0
  %2996 = vmatpush.bf16.msra.mxu0 0
  %2997 = vmatpush.bf16.msra.mxu0 %v2956
  %2998 = vmatpush.bf16.msra.mxu0 %v2915
  %2999 = vmatmul.bf16.gmra.mxu0 %v2953
  %v3000 = vpop.f32.mrf.mxu0
  %v3001 = vadd.f32 %v2849, %v3000
  %v3002 = vpop.f32.mrf.mxu0
  %3003 = vdwg.mxu0
  %3004 = vmatpush.bf16.msra.mxu0 0
  %3005 = vmatpush.bf16.msra.mxu0 0
  %3006 = vmatpush.bf16.msra.mxu0 0
  %3007 = vmatpush.bf16.msra.mxu0 0
  %3008 = vmatpush.bf16.msra.mxu0 0
  %3009 = vmatpush.bf16.msra.mxu0 0
  %3010 = vmatpush.bf16.msra.mxu0 %v2959
  %3011 = vmatpush.bf16.msra.mxu0 %v2916
  %3012 = vmatmul.bf16.gmra.mxu0 %v2953
  %v3013 = vpop.f32.mrf.mxu0
  %v3014 = vadd.f32 %v2850, %v3013
  %v3015 = vpop.f32.mrf.mxu0
  %3016 = vdwg.mxu0
  %3017 = vmatpush.bf16.msra.mxu0 0
  %3018 = vmatpush.bf16.msra.mxu0 0
  %3019 = vmatpush.bf16.msra.mxu0 0
  %3020 = vmatpush.bf16.msra.mxu0 0
  %3021 = vmatpush.bf16.msra.mxu0 0
  %3022 = vmatpush.bf16.msra.mxu0 0
  %3023 = vmatpush.bf16.msra.mxu0 %v2962
  %3024 = vmatpush.bf16.msra.mxu0 %v2917
  %3025 = vmatmul.bf16.gmra.mxu0 %v2953
  %v3026 = vpop.f32.mrf.mxu0
  %v3027 = vadd.f32 %v2851, %v3026
  %v3028 = vpop.f32.mrf.mxu0
  %3029 = vdwg.mxu0
  %3030 = vmatpush.bf16.msra.mxu0 0
  %3031 = vmatpush.bf16.msra.mxu0 0
  %3032 = vmatpush.bf16.msra.mxu0 0
  %3033 = vmatpush.bf16.msra.mxu0 0
  %3034 = vmatpush.bf16.msra.mxu0 0
  %3035 = vmatpush.bf16.msra.mxu0 0
  %3036 = vmatpush.bf16.msra.mxu0 %v2965
  %3037 = vmatpush.bf16.msra.mxu0 %v2918
  %3038 = vmatmul.bf16.gmra.mxu0 %v2953
  %v3039 = vpop.f32.mrf.mxu0
  %v3040 = vadd.f32 %v2852, %v3039
  %v3041 = vpop.f32.mrf.mxu0
  %3042 = vdwg.mxu0
  %3043 = vmatpush.bf16.msra.mxu0 0
  %3044 = vmatpush.bf16.msra.mxu0 0
  %3045 = vmatpush.bf16.msra.mxu0 0
  %3046 = vmatpush.bf16.msra.mxu0 0
  %3047 = vmatpush.bf16.msra.mxu0 0
  %3048 = vmatpush.bf16.msra.mxu0 0
  %3049 = vmatpush.bf16.msra.mxu0 %v2968
  %3050 = vmatpush.bf16.msra.mxu0 %v2919
  %3051 = vmatmul.bf16.gmra.mxu0 %v2953
  %v3052 = vpop.f32.mrf.mxu0
  %v3053 = vadd.f32 %v2853, %v3052
  %v3054 = vpop.f32.mrf.mxu0
  %3055 = vdwg.mxu0
  %3056 = vmatpush.bf16.msra.mxu0 0
  %3057 = vmatpush.bf16.msra.mxu0 0
  %3058 = vmatpush.bf16.msra.mxu0 0
  %3059 = vmatpush.bf16.msra.mxu0 0
  %3060 = vmatpush.bf16.msra.mxu0 0
  %3061 = vmatpush.bf16.msra.mxu0 0
  %3062 = vmatpush.bf16.msra.mxu0 %v2971
  %3063 = vmatpush.bf16.msra.mxu0 %v2920
  %3064 = vmatmul.bf16.gmra.mxu0 %v2953
  %v3065 = vpop.f32.mrf.mxu0
  %v3066 = vadd.f32 %v2854, %v3065
  %v3067 = vpop.f32.mrf.mxu0
  %3068 = vdwg.mxu0
  %3069 = vmatpush.bf16.msra.mxu0 0
  %3070 = vmatpush.bf16.msra.mxu0 0
  %3071 = vmatpush.bf16.msra.mxu0 0
  %3072 = vmatpush.bf16.msra.mxu0 0
  %3073 = vmatpush.bf16.msra.mxu0 0
  %3074 = vmatpush.bf16.msra.mxu0 0
  %3075 = vmatpush.bf16.msra.mxu0 %v2974
  %3076 = vmatpush.bf16.msra.mxu0 %v2921
  %3077 = vmatmul.bf16.gmra.mxu0 %v2953
  %v3078 = vpop.f32.mrf.mxu0
  %v3079 = vadd.f32 %v2855, %v3078
  %v3080 = vpop.f32.mrf.mxu0
  %3081 = vdwg.mxu0
  %3082 = vmatpush.bf16.msra.mxu0 0
  %3083 = vmatpush.bf16.msra.mxu0 0
  %3084 = vmatpush.bf16.msra.mxu0 0
  %3085 = vmatpush.bf16.msra.mxu0 0
  %3086 = vmatpush.bf16.msra.mxu0 0
  %3087 = vmatpush.bf16.msra.mxu0 0
  %3088 = vmatpush.bf16.msra.mxu0 %v2977
  %3089 = vmatpush.bf16.msra.mxu0 %v2922
  %3090 = vmatmul.bf16.gmra.mxu0 %v2953
  %v3091 = vpop.f32.mrf.mxu0
  %v3092 = vadd.f32 %v2856, %v3091
  %v3093 = vpop.f32.mrf.mxu0
  %3094 = vdwg.mxu0
  %3095 = vmatpush.bf16.msra.mxu0 0
  %3096 = vmatpush.bf16.msra.mxu0 0
  %3097 = vmatpush.bf16.msra.mxu0 0
  %3098 = vmatpush.bf16.msra.mxu0 0
  %3099 = vmatpush.bf16.msra.mxu0 0
  %3100 = vmatpush.bf16.msra.mxu0 0
  %3101 = vmatpush.bf16.msra.mxu0 %v2980
  %3102 = vmatpush.bf16.msra.mxu0 %v2923
  %3103 = vmatmul.bf16.gmra.mxu0 %v2953
  %v3104 = vpop.f32.mrf.mxu0
  %v3105 = vadd.f32 %v2857, %v3104
  %v3106 = vpop.f32.mrf.mxu0
  %3107 = vdwg.mxu0
  %3108 = vmatpush.bf16.msra.mxu0 0
  %3109 = vmatpush.bf16.msra.mxu0 0
  %3110 = vmatpush.bf16.msra.mxu0 0
  %3111 = vmatpush.bf16.msra.mxu0 0
  %3112 = vmatpush.bf16.msra.mxu0 0
  %3113 = vmatpush.bf16.msra.mxu0 0
  %3114 = vmatpush.bf16.msra.mxu0 %v2983
  %3115 = vmatpush.bf16.msra.mxu0 %v2924
  %3116 = vmatmul.bf16.gmra.mxu0 %v2953
  %v3117 = vpop.f32.mrf.mxu0
  %v3118 = vadd.f32 %v2858, %v3117
  %v3119 = vpop.f32.mrf.mxu0
  %3120 = vdwg.mxu0
  %3121 = vmatpush.bf16.msra.mxu0 0
  %3122 = vmatpush.bf16.msra.mxu0 0
  %3123 = vmatpush.bf16.msra.mxu0 0
  %3124 = vmatpush.bf16.msra.mxu0 0
  %3125 = vmatpush.bf16.msra.mxu0 0
  %3126 = vmatpush.bf16.msra.mxu0 0
  %3127 = vmatpush.bf16.msra.mxu0 %v2986
  %3128 = vmatpush.bf16.msra.mxu0 %v2925
  %3129 = vmatmul.bf16.gmra.mxu0 %v2953
  %v3130 = vpop.f32.mrf.mxu0
  %v3131 = vadd.f32 %v2859, %v3130
  %v3132 = vpop.f32.mrf.mxu0
  %3133 = vdwg.mxu0
  %3134 = vmatpush.bf16.msra.mxu0 0
  %3135 = vmatpush.bf16.msra.mxu0 0
  %3136 = vmatpush.bf16.msra.mxu0 0
  %3137 = vmatpush.bf16.msra.mxu0 0
  %3138 = vmatpush.bf16.msra.mxu0 0
  %3139 = vmatpush.bf16.msra.mxu0 0
  %3140 = vmatpush.bf16.msra.mxu0 %v2989
  %3141 = vmatpush.bf16.msra.mxu0 %v2926
  %3142 = vmatmul.bf16.gmra.mxu0 %v2953
  %v3143 = vpop.f32.mrf.mxu0
  %v3144 = vadd.f32 %v2860, %v3143
  %v3145 = vpop.f32.mrf.mxu0
  %3146 = vdwg.mxu0
  %v3147 = vxor.u32 %v3001, 2147483648
  %v3148 = vxor.u32 %v3014, 2147483648
  %v3149 = vmul.f32 %v3147, 1.442695
  %v3150 = vpow.pop %v3149
  %v3151 = vmul.f32 %v3148, 1.442695
  %v3152 = vpow.pop %v3151
  %v3153 = vadd.f32 %v3150, 1.0
  %v3154 = vadd.f32 %v3152, 1.0
  %v3155 = vrcp.pop %v3153
  %v3156 = vmul.f32 %v3153, %v3155
  %v3157 = vsub.f32 1.0, %v3156
  %v3158 = vmul.f32 %v3155, %v3157
  %v3159 = vadd.f32 %v3155, %v3158
  %vm3160 = vweird.f32 %v3153
  %vm3161 = vweird.f32 %v3155
  %vm3162 = vmor %vm3160, %vm3161
  %v3163 = vsel %vm3162, %v3155, %v3159
  %v3164 = vand.u32 2147483647, %v3153
  %vm3165 = vcmp.eq.f32.partialorder %v3164, 8.507059e+37
  %v3166 = vand.u32 %v3153, 2147483648
  %v3167 = vor.u32 1.1754944e-38, %v3166
  %v3168 = vsel %vm3165, %v3167, %v3163
  %v3169 = vmul.f32 1.0, %v3168
  %v3170 = vrcp.pop %v3154
  %v3171 = vmul.f32 %v3154, %v3170
  %v3172 = vsub.f32 1.0, %v3171
  %v3173 = vmul.f32 %v3170, %v3172
  %v3174 = vadd.f32 %v3170, %v3173
  %vm3175 = vweird.f32 %v3154
  %vm3176 = vweird.f32 %v3170
  %vm3177 = vmor %vm3175, %vm3176
  %v3178 = vsel %vm3177, %v3170, %v3174
  %v3179 = vand.u32 2147483647, %v3154
  %vm3180 = vcmp.eq.f32.partialorder %v3179, 8.507059e+37
  %v3181 = vand.u32 %v3154, 2147483648
  %v3182 = vor.u32 1.1754944e-38, %v3181
  %v3183 = vsel %vm3180, %v3182, %v3178
  %v3184 = vmul.f32 1.0, %v3183
  %v3185 = vtanh.pop %v3027
  %v3186 = vtanh.pop %v3040
  %v3187 = vxor.u32 %v3053, 2147483648
  %v3188 = vxor.u32 %v3066, 2147483648
  %v3189 = vmul.f32 %v3187, 1.442695
  %v3190 = vpow.pop %v3189
  %v3191 = vmul.f32 %v3188, 1.442695
  %v3192 = vpow.pop %v3191
  %v3193 = vadd.f32 %v3190, 1.0
  %v3194 = vadd.f32 %v3192, 1.0
  %v3195 = vrcp.pop %v3193
  %v3196 = vmul.f32 %v3193, %v3195
  %v3197 = vsub.f32 1.0, %v3196
  %v3198 = vmul.f32 %v3195, %v3197
  %v3199 = vadd.f32 %v3195, %v3198
  %vm3200 = vweird.f32 %v3193
  %vm3201 = vweird.f32 %v3195
  %vm3202 = vmor %vm3200, %vm3201
  %v3203 = vsel %vm3202, %v3195, %v3199
  %v3204 = vand.u32 2147483647, %v3193
  %vm3205 = vcmp.eq.f32.partialorder %v3204, 8.507059e+37
  %v3206 = vand.u32 %v3193, 2147483648
  %v3207 = vor.u32 1.1754944e-38, %v3206
  %v3208 = vsel %vm3205, %v3207, %v3203
  %v3209 = vmul.f32 1.0, %v3208
  %v3210 = vrcp.pop %v3194
  %v3211 = vmul.f32 %v3194, %v3210
  %v3212 = vsub.f32 1.0, %v3211
  %v3213 = vmul.f32 %v3210, %v3212
  %v3214 = vadd.f32 %v3210, %v3213
  %vm3215 = vweird.f32 %v3194
  %vm3216 = vweird.f32 %v3210
  %vm3217 = vmor %vm3215, %vm3216
  %v3218 = vsel %vm3217, %v3210, %v3214
  %v3219 = vand.u32 2147483647, %v3194
  %vm3220 = vcmp.eq.f32.partialorder %v3219, 8.507059e+37
  %v3221 = vand.u32 %v3194, 2147483648
  %v3222 = vor.u32 1.1754944e-38, %v3221
  %v3223 = vsel %vm3220, %v3222, %v3218
  %v3224 = vmul.f32 1.0, %v3223
  %v3225 = vmul.f32 %v3169, %v3185
  %v3226 = vmul.f32 %v3184, %v3186
  %v3227 = vtanh.pop %v3225
  %v3228 = vtanh.pop %v3226
  %v3229 = vmul.f32 %v3209, %v3227
  %v3230 = vmul.f32 %v3224, %v3228
  %v3231 = vxor.u32 %v3079, 2147483648
  %v3232 = vxor.u32 %v3092, 2147483648
  %v3233 = vmul.f32 %v3231, 1.442695
  %v3234 = vpow.pop %v3233
  %v3235 = vmul.f32 %v3232, 1.442695
  %v3236 = vpow.pop %v3235
  %v3237 = vadd.f32 %v3234, 1.0
  %v3238 = vadd.f32 %v3236, 1.0
  %v3239 = vrcp.pop %v3237
  %v3240 = vmul.f32 %v3237, %v3239
  %v3241 = vsub.f32 1.0, %v3240
  %v3242 = vmul.f32 %v3239, %v3241
  %v3243 = vadd.f32 %v3239, %v3242
  %vm3244 = vweird.f32 %v3237
  %vm3245 = vweird.f32 %v3239
  %vm3246 = vmor %vm3244, %vm3245
  %v3247 = vsel %vm3246, %v3239, %v3243
  %v3248 = vand.u32 2147483647, %v3237
  %vm3249 = vcmp.eq.f32.partialorder %v3248, 8.507059e+37
  %v3250 = vand.u32 %v3237, 2147483648
  %v3251 = vor.u32 1.1754944e-38, %v3250
  %v3252 = vsel %vm3249, %v3251, %v3247
  %v3253 = vmul.f32 1.0, %v3252
  %v3254 = vrcp.pop %v3238
  %v3255 = vmul.f32 %v3238, %v3254
  %v3256 = vsub.f32 1.0, %v3255
  %v3257 = vmul.f32 %v3254, %v3256
  %v3258 = vadd.f32 %v3254, %v3257
  %vm3259 = vweird.f32 %v3238
  %vm3260 = vweird.f32 %v3254
  %vm3261 = vmor %vm3259, %vm3260
  %v3262 = vsel %vm3261, %v3254, %v3258
  %v3263 = vand.u32 2147483647, %v3238
  %vm3264 = vcmp.eq.f32.partialorder %v3263, 8.507059e+37
  %v3265 = vand.u32 %v3238, 2147483648
  %v3266 = vor.u32 1.1754944e-38, %v3265
  %v3267 = vsel %vm3264, %v3266, %v3262
  %v3268 = vmul.f32 1.0, %v3267
  %v3269 = vtanh.pop %v3105
  %v3270 = vtanh.pop %v3118
  %v3271 = vxor.u32 %v3131, 2147483648
  %v3272 = vxor.u32 %v3144, 2147483648
  %v3273 = vmul.f32 %v3271, 1.442695
  %v3274 = vpow.pop %v3273
  %v3275 = vmul.f32 %v3272, 1.442695
  %v3276 = vpow.pop %v3275
  %v3277 = vadd.f32 %v3274, 1.0
  %v3278 = vadd.f32 %v3276, 1.0
  %v3279 = vrcp.pop %v3277
  %v3280 = vmul.f32 %v3277, %v3279
  %v3281 = vsub.f32 1.0, %v3280
  %v3282 = vmul.f32 %v3279, %v3281
  %v3283 = vadd.f32 %v3279, %v3282
  %vm3284 = vweird.f32 %v3277
  %vm3285 = vweird.f32 %v3279
  %vm3286 = vmor %vm3284, %vm3285
  %v3287 = vsel %vm3286, %v3279, %v3283
  %v3288 = vand.u32 2147483647, %v3277
  %vm3289 = vcmp.eq.f32.partialorder %v3288, 8.507059e+37
  %v3290 = vand.u32 %v3277, 2147483648
  %v3291 = vor.u32 1.1754944e-38, %v3290
  %v3292 = vsel %vm3289, %v3291, %v3287
  %v3293 = vmul.f32 1.0, %v3292
  %v3294 = vrcp.pop %v3278
  %v3295 = vmul.f32 %v3278, %v3294
  %v3296 = vsub.f32 1.0, %v3295
  %v3297 = vmul.f32 %v3294, %v3296
  %v3298 = vadd.f32 %v3294, %v3297
  %vm3299 = vweird.f32 %v3278
  %vm3300 = vweird.f32 %v3294
  %vm3301 = vmor %vm3299, %vm3300
  %v3302 = vsel %vm3301, %v3294, %v3298
  %v3303 = vand.u32 2147483647, %v3278
  %vm3304 = vcmp.eq.f32.partialorder %v3303, 8.507059e+37
  %v3305 = vand.u32 %v3278, 2147483648
  %v3306 = vor.u32 1.1754944e-38, %v3305
  %v3307 = vsel %vm3304, %v3306, %v3302
  %v3308 = vmul.f32 1.0, %v3307
  %v3309 = vmul.f32 %v3253, %v3269
  %v3310 = vmul.f32 %v3268, %v3270
  %v3311 = vtanh.pop %v3309
  %v3312 = vtanh.pop %v3310
  %v3313 = vmul.f32 %v3293, %v3311
  %v3314 = vmul.f32 %v3308, %v3312
  %v3315 = vpack.c.bf16 %v3229, %v3229
  %v3316 = vpack.c.bf16 %v3230, %v3230
  %v3317 = vpack.c.bf16 %v3313, %v3313
  %v3318 = vpack.c.bf16 %v3314, %v3314
  %v3319 = vld [vmem:[%s3] sm:$0xff]
  %v3320 = vld [vmem:[%s3 + $0x8] sm:$0xff]
  %v3321 = vld [vmem:[%s3 + $0x10] sm:$0xff]
  %v3322 = vld [vmem:[%s3 + $0x18] sm:$0xff]
  %v3323 = vld [vmem:[%s3 + $0x20] sm:$0xff]
  %v3324 = vld [vmem:[%s3 + $0x28] sm:$0xff]
  %v3325 = vld [vmem:[%s3 + $0x30] sm:$0xff]
  %v3326 = vld [vmem:[%s3 + $0x38] sm:$0xff]
  %v3327 = vld [vmem:[%s3 + $0x40] sm:$0xff]
  %v3328 = vld [vmem:[%s3 + $0x48] sm:$0xff]
  %v3329 = vld [vmem:[%s3 + $0x50] sm:$0xff]
  %v3330 = vld [vmem:[%s3 + $0x58] sm:$0xff]
  %v3331 = vld [vmem:[%s3 + $0x60] sm:$0xff]
  %v3332 = vld [vmem:[%s3 + $0x68] sm:$0xff]
  %v3333 = vld [vmem:[%s3 + $0x70] sm:$0xff]
  %v3334 = vld [vmem:[%s3 + $0x78] sm:$0xff]
  %v3335 = vld [vmem:[%s3 + $0x80] sm:$0xff]
  %v3336 = vld [vmem:[%s3 + $0x88] sm:$0xff]
  %v3337 = vld [vmem:[%s3 + $0x90] sm:$0xff]
  %v3338 = vld [vmem:[%s3 + $0x98] sm:$0xff]
  %v3339 = vld [vmem:[%s3 + $0xa0] sm:$0xff]
  %v3340 = vld [vmem:[%s3 + $0xa8] sm:$0xff]
  %v3341 = vld [vmem:[%s3 + $0xb0] sm:$0xff]
  %v3342 = vld [vmem:[%s3 + $0xb8] sm:$0xff]
  %v3343 = vld [vmem:[%s3 + $0xc0] sm:$0xff]
  %v3344 = vld [vmem:[%s3 + $0xc8] sm:$0xff]
  %v3345 = vld [vmem:[%s3 + $0xd0] sm:$0xff]
  %v3346 = vld [vmem:[%s3 + $0xd8] sm:$0xff]
  %v3347 = vld [vmem:[%s3 + $0xe0] sm:$0xff]
  %v3348 = vld [vmem:[%s3 + $0xe8] sm:$0xff]
  %v3349 = vld [vmem:[%s3 + $0xf0] sm:$0xff]
  %v3350 = vld [vmem:[%s3 + $0xf8] sm:$0xff]
  %v3351 = vld [vmem:[%s3 + $0x100] sm:$0xff]
  %v3352 = vld [vmem:[%s3 + $0x108] sm:$0xff]
  %v3353 = vld [vmem:[%s3 + $0x110] sm:$0xff]
  %v3354 = vld [vmem:[%s3 + $0x118] sm:$0xff]
  %v3355 = vld [vmem:[%s3 + $0x120] sm:$0xff]
  %v3356 = vld [vmem:[%s3 + $0x128] sm:$0xff]
  %v3357 = vld [vmem:[%s3 + $0x130] sm:$0xff]
  %v3358 = vld [vmem:[%s3 + $0x138] sm:$0xff]
  %v3359 = vld [vmem:[%s3 + $0x140] sm:$0xff]
  %v3360 = vld [vmem:[%s3 + $0x148] sm:$0xff]
  %v3361 = vld [vmem:[%s3 + $0x150] sm:$0xff]
  %v3362 = vld [vmem:[%s3 + $0x158] sm:$0xff]
  %v3363 = vld [vmem:[%s3 + $0x160] sm:$0xff]
  %v3364 = vld [vmem:[%s3 + $0x168] sm:$0xff]
  %v3365 = vld [vmem:[%s3 + $0x170] sm:$0xff]
  %v3366 = vld [vmem:[%s3 + $0x178] sm:$0xff]
  %v3367 = vld [vmem:[%s3 + $0x180] sm:$0xff]
  %v3368 = vld [vmem:[%s3 + $0x188] sm:$0xff]
  %v3369 = vld [vmem:[%s3 + $0x190] sm:$0xff]
  %v3370 = vld [vmem:[%s3 + $0x198] sm:$0xff]
  %v3371 = vld [vmem:[%s3 + $0x1a0] sm:$0xff]
  %v3372 = vld [vmem:[%s3 + $0x1a8] sm:$0xff]
  %v3373 = vld [vmem:[%s3 + $0x1b0] sm:$0xff]
  %v3374 = vld [vmem:[%s3 + $0x1b8] sm:$0xff]
  %v3375 = vld [vmem:[%s3 + $0x1c0] sm:$0xff]
  %v3376 = vld [vmem:[%s3 + $0x1c8] sm:$0xff]
  %v3377 = vld [vmem:[%s3 + $0x1d0] sm:$0xff]
  %v3378 = vld [vmem:[%s3 + $0x1d8] sm:$0xff]
  %v3379 = vld [vmem:[%s3 + $0x1e0] sm:$0xff]
  %v3380 = vld [vmem:[%s3 + $0x1e8] sm:$0xff]
  %v3381 = vld [vmem:[%s3 + $0x1f0] sm:$0xff]
  %v3382 = vld [vmem:[%s3 + $0x1f8] sm:$0xff]
  %v3383 = vperm.slane %v21, 2
  %v3384 = vperm.slane %v22, 2
  %v3449 = vunpack.c.l.b16 %v3319
  %v3450 = vunpack.c.h.b16 %v3319
  %v3451 = vunpack.c.l.b16 %v3320
  %v3452 = vunpack.c.h.b16 %v3320
  %v3453 = vunpack.c.l.b16 %v3321
  %v3454 = vunpack.c.h.b16 %v3321
  %v3455 = vunpack.c.l.b16 %v3322
  %v3456 = vunpack.c.h.b16 %v3322
  %v3457 = vunpack.c.l.b16 %v3323
  %v3458 = vunpack.c.h.b16 %v3323
  %v3459 = vunpack.c.l.b16 %v3324
  %v3460 = vunpack.c.h.b16 %v3324
  %v3461 = vunpack.c.l.b16 %v3325
  %v3462 = vunpack.c.h.b16 %v3325
  %v3463 = vunpack.c.l.b16 %v3326
  %v3464 = vunpack.c.h.b16 %v3326
  %v3465 = vunpack.c.l.b16 %v3327
  %v3466 = vunpack.c.h.b16 %v3327
  %v3467 = vunpack.c.l.b16 %v3328
  %v3468 = vunpack.c.h.b16 %v3328
  %v3469 = vunpack.c.l.b16 %v3329
  %v3470 = vunpack.c.h.b16 %v3329
  %v3471 = vunpack.c.l.b16 %v3330
  %v3472 = vunpack.c.h.b16 %v3330
  %v3473 = vunpack.c.l.b16 %v3331
  %v3474 = vunpack.c.h.b16 %v3331
  %v3475 = vunpack.c.l.b16 %v3332
  %v3476 = vunpack.c.h.b16 %v3332
  %v3477 = vunpack.c.l.b16 %v3333
  %v3478 = vunpack.c.h.b16 %v3333
  %v3479 = vunpack.c.l.b16 %v3334
  %v3480 = vunpack.c.h.b16 %v3334
  %v3481 = vunpack.c.l.b16 %v3335
  %v3482 = vunpack.c.h.b16 %v3335
  %v3483 = vunpack.c.l.b16 %v3336
  %v3484 = vunpack.c.h.b16 %v3336
  %v3485 = vunpack.c.l.b16 %v3337
  %v3486 = vunpack.c.h.b16 %v3337
  %v3487 = vunpack.c.l.b16 %v3338
  %v3488 = vunpack.c.h.b16 %v3338
  %v3489 = vunpack.c.l.b16 %v3339
  %v3490 = vunpack.c.h.b16 %v3339
  %v3491 = vunpack.c.l.b16 %v3340
  %v3492 = vunpack.c.h.b16 %v3340
  %v3493 = vunpack.c.l.b16 %v3341
  %v3494 = vunpack.c.h.b16 %v3341
  %v3495 = vunpack.c.l.b16 %v3342
  %v3496 = vunpack.c.h.b16 %v3342
  %v3497 = vunpack.c.l.b16 %v3343
  %v3498 = vunpack.c.h.b16 %v3343
  %v3499 = vunpack.c.l.b16 %v3344
  %v3500 = vunpack.c.h.b16 %v3344
  %v3501 = vunpack.c.l.b16 %v3345
  %v3502 = vunpack.c.h.b16 %v3345
  %v3503 = vunpack.c.l.b16 %v3346
  %v3504 = vunpack.c.h.b16 %v3346
  %v3505 = vunpack.c.l.b16 %v3347
  %v3506 = vunpack.c.h.b16 %v3347
  %v3507 = vunpack.c.l.b16 %v3348
  %v3508 = vunpack.c.h.b16 %v3348
  %v3509 = vunpack.c.l.b16 %v3349
  %v3510 = vunpack.c.h.b16 %v3349
  %v3511 = vunpack.c.l.b16 %v3350
  %v3512 = vunpack.c.h.b16 %v3350
  %v3513 = vunpack.c.l.b16 %v3351
  %v3514 = vunpack.c.h.b16 %v3351
  %v3515 = vunpack.c.l.b16 %v3352
  %v3516 = vunpack.c.h.b16 %v3352
  %v3517 = vunpack.c.l.b16 %v3353
  %v3518 = vunpack.c.h.b16 %v3353
  %v3519 = vunpack.c.l.b16 %v3354
  %v3520 = vunpack.c.h.b16 %v3354
  %v3521 = vunpack.c.l.b16 %v3355
  %v3522 = vunpack.c.h.b16 %v3355
  %v3523 = vunpack.c.l.b16 %v3356
  %v3524 = vunpack.c.h.b16 %v3356
  %v3525 = vunpack.c.l.b16 %v3357
  %v3526 = vunpack.c.h.b16 %v3357
  %v3527 = vunpack.c.l.b16 %v3358
  %v3528 = vunpack.c.h.b16 %v3358
  %v3529 = vunpack.c.l.b16 %v3359
  %v3530 = vunpack.c.h.b16 %v3359
  %v3531 = vunpack.c.l.b16 %v3360
  %v3532 = vunpack.c.h.b16 %v3360
  %v3533 = vunpack.c.l.b16 %v3361
  %v3534 = vunpack.c.h.b16 %v3361
  %v3535 = vunpack.c.l.b16 %v3362
  %v3536 = vunpack.c.h.b16 %v3362
  %v3537 = vunpack.c.l.b16 %v3363
  %v3538 = vunpack.c.h.b16 %v3363
  %v3539 = vunpack.c.l.b16 %v3364
  %v3540 = vunpack.c.h.b16 %v3364
  %v3541 = vunpack.c.l.b16 %v3365
  %v3542 = vunpack.c.h.b16 %v3365
  %v3543 = vunpack.c.l.b16 %v3366
  %v3544 = vunpack.c.h.b16 %v3366
  %v3545 = vunpack.c.l.b16 %v3367
  %v3546 = vunpack.c.h.b16 %v3367
  %v3547 = vunpack.c.l.b16 %v3368
  %v3548 = vunpack.c.h.b16 %v3368
  %v3549 = vunpack.c.l.b16 %v3369
  %v3550 = vunpack.c.h.b16 %v3369
  %v3551 = vunpack.c.l.b16 %v3370
  %v3552 = vunpack.c.h.b16 %v3370
  %v3553 = vunpack.c.l.b16 %v3371
  %v3554 = vunpack.c.h.b16 %v3371
  %v3555 = vunpack.c.l.b16 %v3372
  %v3556 = vunpack.c.h.b16 %v3372
  %v3557 = vunpack.c.l.b16 %v3373
  %v3558 = vunpack.c.h.b16 %v3373
  %v3559 = vunpack.c.l.b16 %v3374
  %v3560 = vunpack.c.h.b16 %v3374
  %v3561 = vunpack.c.l.b16 %v3375
  %v3562 = vunpack.c.h.b16 %v3375
  %v3563 = vunpack.c.l.b16 %v3376
  %v3564 = vunpack.c.h.b16 %v3376
  %v3565 = vunpack.c.l.b16 %v3377
  %v3566 = vunpack.c.h.b16 %v3377
  %v3567 = vunpack.c.l.b16 %v3378
  %v3568 = vunpack.c.h.b16 %v3378
  %v3569 = vunpack.c.l.b16 %v3379
  %v3570 = vunpack.c.h.b16 %v3379
  %v3571 = vunpack.c.l.b16 %v3380
  %v3572 = vunpack.c.h.b16 %v3380
  %v3573 = vunpack.c.l.b16 %v3381
  %v3574 = vunpack.c.h.b16 %v3381
  %v3575 = vunpack.c.l.b16 %v3382
  %v3576 = vunpack.c.h.b16 %v3382
  %v3577 = vpack.c.b16 %v3451, %v3449
  %v3578 = vpack.c.b16 %v3452, %v3450
  %v3579 = vpack.c.b16 %v3455, %v3453
  %v3580 = vpack.c.b16 %v3456, %v3454
  %v3581 = vpack.c.b16 %v3459, %v3457
  %v3582 = vpack.c.b16 %v3460, %v3458
  %v3583 = vpack.c.b16 %v3463, %v3461
  %v3584 = vpack.c.b16 %v3464, %v3462
  %v3585 = vpack.c.b16 %v3467, %v3465
  %v3586 = vpack.c.b16 %v3468, %v3466
  %v3587 = vpack.c.b16 %v3471, %v3469
  %v3588 = vpack.c.b16 %v3472, %v3470
  %v3589 = vpack.c.b16 %v3475, %v3473
  %v3590 = vpack.c.b16 %v3476, %v3474
  %v3591 = vpack.c.b16 %v3479, %v3477
  %v3592 = vpack.c.b16 %v3480, %v3478
  %v3593 = vpack.c.b16 %v3483, %v3481
  %v3594 = vpack.c.b16 %v3484, %v3482
  %v3595 = vpack.c.b16 %v3487, %v3485
  %v3596 = vpack.c.b16 %v3488, %v3486
  %v3597 = vpack.c.b16 %v3491, %v3489
  %v3598 = vpack.c.b16 %v3492, %v3490
  %v3599 = vpack.c.b16 %v3495, %v3493
  %v3600 = vpack.c.b16 %v3496, %v3494
  %v3601 = vpack.c.b16 %v3499, %v3497
  %v3602 = vpack.c.b16 %v3500, %v3498
  %v3603 = vpack.c.b16 %v3503, %v3501
  %v3604 = vpack.c.b16 %v3504, %v3502
  %v3605 = vpack.c.b16 %v3507, %v3505
  %v3606 = vpack.c.b16 %v3508, %v3506
  %v3607 = vpack.c.b16 %v3511, %v3509
  %v3608 = vpack.c.b16 %v3512, %v3510
  %v3609 = vpack.c.b16 %v3515, %v3513
  %v3610 = vpack.c.b16 %v3516, %v3514
  %v3611 = vpack.c.b16 %v3519, %v3517
  %v3612 = vpack.c.b16 %v3520, %v3518
  %v3613 = vpack.c.b16 %v3523, %v3521
  %v3614 = vpack.c.b16 %v3524, %v3522
  %v3615 = vpack.c.b16 %v3527, %v3525
  %v3616 = vpack.c.b16 %v3528, %v3526
  %v3617 = vpack.c.b16 %v3531, %v3529
  %v3618 = vpack.c.b16 %v3532, %v3530
  %v3619 = vpack.c.b16 %v3535, %v3533
  %v3620 = vpack.c.b16 %v3536, %v3534
  %v3621 = vpack.c.b16 %v3539, %v3537
  %v3622 = vpack.c.b16 %v3540, %v3538
  %v3623 = vpack.c.b16 %v3543, %v3541
  %v3624 = vpack.c.b16 %v3544, %v3542
  %v3625 = vpack.c.b16 %v3547, %v3545
  %v3626 = vpack.c.b16 %v3548, %v3546
  %v3627 = vpack.c.b16 %v3551, %v3549
  %v3628 = vpack.c.b16 %v3552, %v3550
  %v3629 = vpack.c.b16 %v3555, %v3553
  %v3630 = vpack.c.b16 %v3556, %v3554
  %v3631 = vpack.c.b16 %v3559, %v3557
  %v3632 = vpack.c.b16 %v3560, %v3558
  %v3633 = vpack.c.b16 %v3563, %v3561
  %v3634 = vpack.c.b16 %v3564, %v3562
  %v3635 = vpack.c.b16 %v3567, %v3565
  %v3636 = vpack.c.b16 %v3568, %v3566
  %v3637 = vpack.c.b16 %v3571, %v3569
  %v3638 = vpack.c.b16 %v3572, %v3570
  %v3639 = vpack.c.b16 %v3575, %v3573
  %v3640 = vpack.c.b16 %v3576, %v3574
  %3705 = vmatpush.bf16.msra.mxu0 %v3591
  %3706 = vmatpush.bf16.msra.mxu0 %v3589
  %3707 = vmatpush.bf16.msra.mxu0 %v3587
  %3708 = vmatpush.bf16.msra.mxu0 %v3585
  %3709 = vmatpush.bf16.msra.mxu0 %v3583
  %3710 = vmatpush.bf16.msra.mxu0 %v3581
  %3711 = vmatpush.bf16.msra.mxu0 %v3579
  %3712 = vmatpush.bf16.msra.mxu0 %v3577
  %3713 = vmatmul.bf16.gmra.mxu0 %v3315
  %v3714 = vpop.f32.mrf.mxu0
  %v3715 = vadd.f32 %v3383, %v3714
  %v3716 = vpop.f32.mrf.mxu0
  %3717 = vdwg.mxu0
  %3718 = vmatpush.bf16.msra.mxu0 %v3607
  %3719 = vmatpush.bf16.msra.mxu0 %v3605
  %3720 = vmatpush.bf16.msra.mxu0 %v3603
  %3721 = vmatpush.bf16.msra.mxu0 %v3601
  %3722 = vmatpush.bf16.msra.mxu0 %v3599
  %3723 = vmatpush.bf16.msra.mxu0 %v3597
  %3724 = vmatpush.bf16.msra.mxu0 %v3595
  %3725 = vmatpush.bf16.msra.mxu0 %v3593
  %3726 = vmatmul.bf16.gmra.mxu0 %v3316
  %v3727 = vpop.f32.mrf.mxu0
  %v3728 = vadd.f32 %v3715, %v3727
  %v3729 = vpop.f32.mrf.mxu0
  %3730 = vdwg.mxu0
  %3731 = vmatpush.bf16.msra.mxu0 %v3623
  %3732 = vmatpush.bf16.msra.mxu0 %v3621
  %3733 = vmatpush.bf16.msra.mxu0 %v3619
  %3734 = vmatpush.bf16.msra.mxu0 %v3617
  %3735 = vmatpush.bf16.msra.mxu0 %v3615
  %3736 = vmatpush.bf16.msra.mxu0 %v3613
  %3737 = vmatpush.bf16.msra.mxu0 %v3611
  %3738 = vmatpush.bf16.msra.mxu0 %v3609
  %3739 = vmatmul.bf16.gmra.mxu0 %v3317
  %v3740 = vpop.f32.mrf.mxu0
  %v3741 = vadd.f32 %v3728, %v3740
  %v3742 = vpop.f32.mrf.mxu0
  %3743 = vdwg.mxu0
  %3744 = vmatpush.bf16.msra.mxu0 %v3639
  %3745 = vmatpush.bf16.msra.mxu0 %v3637
  %3746 = vmatpush.bf16.msra.mxu0 %v3635
  %3747 = vmatpush.bf16.msra.mxu0 %v3633
  %3748 = vmatpush.bf16.msra.mxu0 %v3631
  %3749 = vmatpush.bf16.msra.mxu0 %v3629
  %3750 = vmatpush.bf16.msra.mxu0 %v3627
  %3751 = vmatpush.bf16.msra.mxu0 %v3625
  %3752 = vmatmul.bf16.gmra.mxu0 %v3318
  %v3753 = vpop.f32.mrf.mxu0
  %v3754 = vadd.f32 %v3741, %v3753
  %v3755 = vpop.f32.mrf.mxu0
  %3756 = vdwg.mxu0
  %3757 = vmatpush.bf16.msra.mxu0 %v3592
  %3758 = vmatpush.bf16.msra.mxu0 %v3590
  %3759 = vmatpush.bf16.msra.mxu0 %v3588
  %3760 = vmatpush.bf16.msra.mxu0 %v3586
  %3761 = vmatpush.bf16.msra.mxu0 %v3584
  %3762 = vmatpush.bf16.msra.mxu0 %v3582
  %3763 = vmatpush.bf16.msra.mxu0 %v3580
  %3764 = vmatpush.bf16.msra.mxu0 %v3578
  %3765 = vmatmul.bf16.gmra.mxu0 %v3315
  %v3766 = vpop.f32.mrf.mxu0
  %v3767 = vadd.f32 %v3384, %v3766
  %v3768 = vpop.f32.mrf.mxu0
  %3769 = vdwg.mxu0
  %3770 = vmatpush.bf16.msra.mxu0 %v3608
  %3771 = vmatpush.bf16.msra.mxu0 %v3606
  %3772 = vmatpush.bf16.msra.mxu0 %v3604
  %3773 = vmatpush.bf16.msra.mxu0 %v3602
  %3774 = vmatpush.bf16.msra.mxu0 %v3600
  %3775 = vmatpush.bf16.msra.mxu0 %v3598
  %3776 = vmatpush.bf16.msra.mxu0 %v3596
  %3777 = vmatpush.bf16.msra.mxu0 %v3594
  %3778 = vmatmul.bf16.gmra.mxu0 %v3316
  %v3779 = vpop.f32.mrf.mxu0
  %v3780 = vadd.f32 %v3767, %v3779
  %v3781 = vpop.f32.mrf.mxu0
  %3782 = vdwg.mxu0
  %3783 = vmatpush.bf16.msra.mxu0 %v3624
  %3784 = vmatpush.bf16.msra.mxu0 %v3622
  %3785 = vmatpush.bf16.msra.mxu0 %v3620
  %3786 = vmatpush.bf16.msra.mxu0 %v3618
  %3787 = vmatpush.bf16.msra.mxu0 %v3616
  %3788 = vmatpush.bf16.msra.mxu0 %v3614
  %3789 = vmatpush.bf16.msra.mxu0 %v3612
  %3790 = vmatpush.bf16.msra.mxu0 %v3610
  %3791 = vmatmul.bf16.gmra.mxu0 %v3317
  %v3792 = vpop.f32.mrf.mxu0
  %v3793 = vadd.f32 %v3780, %v3792
  %v3794 = vpop.f32.mrf.mxu0
  %3795 = vdwg.mxu0
  %3796 = vmatpush.bf16.msra.mxu0 %v3640
  %3797 = vmatpush.bf16.msra.mxu0 %v3638
  %3798 = vmatpush.bf16.msra.mxu0 %v3636
  %3799 = vmatpush.bf16.msra.mxu0 %v3634
  %3800 = vmatpush.bf16.msra.mxu0 %v3632
  %3801 = vmatpush.bf16.msra.mxu0 %v3630
  %3802 = vmatpush.bf16.msra.mxu0 %v3628
  %3803 = vmatpush.bf16.msra.mxu0 %v3626
  %3804 = vmatmul.bf16.gmra.mxu0 %v3318
  %v3805 = vpop.f32.mrf.mxu0
  %v3806 = vadd.f32 %v3793, %v3805
  %v3807 = vpop.f32.mrf.mxu0
  %3808 = vdwg.mxu0
  %v3809 = vmax.f32 %v3754, 0.0
  %v3810 = vmax.f32 %v3806, 0.0
  %v3811 = vperm.slane %v23, 2
  %v3812 = vperm.slane %v24, 2
  %v3813 = vmul.f32 %v3809, %v3811
  %v3814 = vmul.f32 %v3810, %v3812
  %vm3815 = vcmask 1041408
  %v3816 = vsel %vm3815, %v3813, 0.0
  %vm3817 = vcmask 254976
  %v3818 = vsel %vm3817, %v3814, 0.0
  %v3819 = vadd.f32 %v3816, %v3818
  %3820 = vadd.xlane.f32.xlu0 %v3819
  %v3821 = vpop.xlane.xlu0 %3820
  %v3822 = vperm.slane %v25, 2
  %v3823 = vadd.f32 %v3821, %v3822
  %v3824 = vxor.u32 %v3823, 2147483648
  %v3825 = vmul.f32 %v3824, 1.442695
  %v3826 = vpow.pop %v3825
  %v3827 = vadd.f32 %v3826, 1.0
  %v3828 = vrcp.pop %v3827
  %v3829 = vmul.f32 %v3827, %v3828
  %v3830 = vsub.f32 1.0, %v3829
  %v3831 = vmul.f32 %v3828, %v3830
  %v3832 = vadd.f32 %v3828, %v3831
  %vm3833 = vweird.f32 %v3827
  %vm3834 = vweird.f32 %v3828
  %vm3835 = vmor %vm3833, %vm3834
  %v3836 = vsel %vm3835, %v3828, %v3832
  %v3837 = vand.u32 2147483647, %v3827
  %vm3838 = vcmp.eq.f32.partialorder %v3837, 8.507059e+37
  %v3839 = vand.u32 %v3827, 2147483648
  %v3840 = vor.u32 1.1754944e-38, %v3839
  %v3841 = vsel %vm3838, %v3840, %v3836
  %v3842 = vmul.f32 1.0, %v3841
  %vm3843 = vcmask 1024
  %3844 = vst.msk [vmem:[%s5] sm:$0x3] %vm3843, %v3842
  // Predicated region
  $region22: #{staple_forward.1} parent=0 // pred_check
    _
  $region23: #{staple_forward.1} parent=0 // pred_check_branch
    %3846 = sbr.rel (0) target = $region25
  $region24: #{staple_forward.1} parent=0 // pred_region
    _
  $region25: #{staple_forward.1} parent=0 // pred_fallthru
    _
  // Predicated region
  $region26: #{staple_forward.1} parent=0 // pred_check
    _
  $region27: #{staple_forward.1} parent=0 // pred_check_branch
    %3848 = sbr.rel (0) target = $region29
  $region28: #{staple_forward.1} parent=0 // pred_region
    _
  $region29: #{staple_forward.1} parent=0 // pred_fallthru
    _

</llo_original>
